<compile_context>
chip_gen: v5e
topology: v5e:2x2
jax: 0.10.0
libtpu: 0.0.40
codegen_flags: <defaults>
</compile_context>

<pallas_src>
import functools

import numpy as np

import jax
import jax.numpy as jnp
from jax import lax
from jax.experimental import pallas as pl
from jax.experimental.pallas import tpu as pltpu

ALPHA = 0.2                      # LeakyReLU negative slope
EPS = 1e-5                       # BatchNorm eps
VMEM_LIMIT = 48 * 1024 * 1024    # scoped-VMEM limit (<= v7x 64 MiB physical)


def _round_up(a, b):
    return (a + b - 1) // b * b


def _leaky(x):
    return jnp.where(x >= 0, x, ALPHA * x)


# ----------------------------------------------------------------------------
# Fused direct-conv kernel: channel-major slab, tap-stacked single MXU dot
# ----------------------------------------------------------------------------
def _conv_stacked_kernel(w_ref, x_ref, b_ref, o_ref, *, k, p, wp, margin, tl, leaky):
    # w_ref : (coutp, k*k*cp) bf16   weights, taps stacked along K
    # x_ref : (1, cp, tl + 2*margin) bf16   this tile's slab window incl. halo
    # b_ref : (coutp, 1) f32
    # o_ref : (coutp, tl) bf16       lane-dense output tile
    taps = []
    for dh in range(k):
        for dw in range(k):
            s = margin + (dh - p) * wp + (dw - p)       # static lane offset
            taps.append(x_ref[0, :, s:s + tl])          # (cp, tl)
    xs = jnp.concatenate(taps, axis=0)                  # (k*k*cp, tl)
    acc = lax.dot_general(w_ref[...], xs, (((1,), (0,)), ((), ())),
                          preferred_element_type=jnp.float32)   # (coutp, tl)
    acc = acc + b_ref[...]
    if leaky:
        acc = _leaky(acc)
    o_ref[...] = acc.astype(o_ref.dtype)


def conv2d_cm(x, w, b, *, leaky=True, tile_l=512):
    """Same-padded stride-1 Conv2d (torch semantics), fused bias + LeakyReLU.

    x: (Cin, N, H, W) channel-major.  w: (Cout, Cin, k, k) torch layout.
    b: (Cout,).  Returns (Cout, N, H, W) channel-major, bf16.
    """
    cin, n, h, w_in = x.shape
    cout, cin2, k, k2 = w.shape
    assert cin == cin2 and k == k2 and k % 2 == 1
    p = k // 2
    hp, wp = h + 2 * p, w_in + 2 * p
    cp = _round_up(cin, 16)                 # bf16 sublane-tile aligned channels
    coutp = _round_up(cout, 16)
    kkcp = k * k * cp
    flat = n * hp * wp                      # padded-spatial positions (incl. pad centers)
    margin = p * wp + p                     # max |flat shift| of any tap
    # >=2 lane tiles when possible (v7x megacore), lane-dense multiples of 128.
    tl = min(tile_l, max(128, _round_up(-(-flat // 2), 128)))
    flat_pad = _round_up(flat, tl)
    ntiles = flat_pad // tl
    win_len = tl + 2 * margin

    # Zero-padded flattened slab, channel-major (cp, L): lanes fully dense.
    xpad = jnp.pad(x.astype(jnp.bfloat16),
                   ((0, cp - cin), (0, 0), (p, p), (p, p)))       # (cp, n, hp, wp)
    slab = xpad.reshape(cp, flat)
    slab = jnp.pad(slab, ((0, 0), (margin, margin + flat_pad - flat)))
    # Overlapping halo tiles -> all per-tap slices in-kernel are STATIC.
    tiles = jnp.stack([slab[:, j * tl: j * tl + win_len] for j in range(ntiles)],
                      axis=0)                                      # (ntiles, cp, win_len)

    # Weights with taps stacked along K: column index = (dh*k + dw)*cp + ci.
    w_flat = jnp.pad(w, ((0, coutp - cout), (0, cp - cin), (0, 0), (0, 0)))
    w_flat = w_flat.transpose(0, 2, 3, 1).reshape(coutp, kkcp).astype(jnp.bfloat16)
    b_col = jnp.pad(b.astype(jnp.float32), (0, coutp - cout)).reshape(coutp, 1)

    out = pl.pallas_call(
        functools.partial(_conv_stacked_kernel, k=k, p=p, wp=wp, margin=margin,
                          tl=tl, leaky=leaky),
        out_shape=jax.ShapeDtypeStruct((coutp, flat_pad), jnp.bfloat16),
        grid=(ntiles,),
        in_specs=[
            pl.BlockSpec((coutp, kkcp), lambda j: (0, 0)),
            pl.BlockSpec((1, cp, win_len), lambda j: (j, 0, 0)),
            pl.BlockSpec((coutp, 1), lambda j: (0, 0)),
        ],
        out_specs=pl.BlockSpec((coutp, tl), lambda j: (0, j)),
        compiler_params=pltpu.CompilerParams(
            dimension_semantics=("parallel",),
            vmem_limit_bytes=VMEM_LIMIT),
    )(w_flat, tiles, b_col)

    # Drop channel/rounding padding; keep only valid (non pad-center) outputs.
    out = out[:cout, :flat].reshape(cout, n, hp, wp)[:, :, p:p + h, p:p + w_in]
    return out                                                     # (Cout, N, H, W) bf16


def convT_as_conv(w):
    """ConvTranspose2d(stride=1, padding=k//2, odd k) == same-padded Conv2d with
    spatially flipped kernel and swapped channel axes.  (Only valid for that
    stride/padding combination -- which is what the module uses.)"""
    return jnp.flip(w, axis=(2, 3)).transpose(1, 0, 2, 3)


# ----------------------------------------------------------------------------
# Tiled linear kernels: fused bias + LeakyReLU; K-accumulating only when needed
# ----------------------------------------------------------------------------
def _linear_kernel_single(x_ref, w_ref, b_ref, o_ref, *, leaky):
    r = jnp.dot(x_ref[...], w_ref[...], preferred_element_type=jnp.float32)
    r = r + b_ref[...]
    if leaky:
        r = _leaky(r)
    o_ref[...] = r.astype(o_ref.dtype)


def _linear_kernel_acc(x_ref, w_ref, b_ref, o_ref, acc_ref, *, leaky):
    @pl.when(pl.program_id(2) == 0)
    def _init():
        acc_ref[...] = jnp.zeros_like(acc_ref)

    acc_ref[...] += jnp.dot(x_ref[...], w_ref[...],
                            preferred_element_type=jnp.float32)

    @pl.when(pl.program_id(2) == pl.num_programs(2) - 1)
    def _finalize():
        r = acc_ref[...] + b_ref[...]
        if leaky:
            r = _leaky(r)
        o_ref[...] = r.astype(o_ref.dtype)


def _pick_tile(dim, cap, quantum):
    """Largest divisor of `dim` that is <= cap and quantum-aligned (or the full dim)."""
    for t in range(min(cap, dim), 0, -1):
        if dim % t == 0 and (t % quantum == 0 or t == dim):
            return t
    return dim


def linear(x, w, b, *, leaky):
    """y = [leaky_relu](x @ w + b).  x: (M, K), w: (K, N), b: (N,).  f32 out."""
    m, kdim = x.shape
    k2, nf = w.shape
    assert kdim == k2
    tm = _pick_tile(m, 256, 8)
    tn = _pick_tile(nf, 128, 128)      # N tiled to 128 -> >=2 parallel steps when N>=256
    tk = _pick_tile(kdim, 512, 128)
    xb = x.astype(jnp.bfloat16)
    wb = w.astype(jnp.bfloat16)
    bb = b.reshape(1, nf).astype(jnp.float32)
    kt = kdim // tk

    if kt == 1:
        # No K loop -> no VMEM accumulator / pl.when init-finalize needed.
        return pl.pallas_call(
            functools.partial(_linear_kernel_single, leaky=leaky),
            out_shape=jax.ShapeDtypeStruct((m, nf), jnp.float32),
            grid=(m // tm, nf // tn),
            in_specs=[
                pl.BlockSpec((tm, kdim), lambda i, j: (i, 0)),
                pl.BlockSpec((kdim, tn), lambda i, j: (0, j)),
                pl.BlockSpec((1, tn), lambda i, j: (0, j)),
            ],
            out_specs=pl.BlockSpec((tm, tn), lambda i, j: (i, j)),
            compiler_params=pltpu.CompilerParams(
                dimension_semantics=("parallel", "parallel"),
                vmem_limit_bytes=VMEM_LIMIT),
        )(xb, wb, bb)

    return pl.pallas_call(
        functools.partial(_linear_kernel_acc, leaky=leaky),
        out_shape=jax.ShapeDtypeStruct((m, nf), jnp.float32),
        grid=(m // tm, nf // tn, kt),
        in_specs=[
            pl.BlockSpec((tm, tk), lambda i, j, kk: (i, kk)),
            pl.BlockSpec((tk, tn), lambda i, j, kk: (kk, j)),
            pl.BlockSpec((1, tn), lambda i, j, kk: (0, j)),
        ],
        out_specs=pl.BlockSpec((tm, tn), lambda i, j, kk: (i, j)),
        scratch_shapes=[pltpu.VMEM((tm, tn), jnp.float32)],
        compiler_params=pltpu.CompilerParams(
            dimension_semantics=("parallel", "parallel", "arbitrary"),
            vmem_limit_bytes=VMEM_LIMIT),
    )(xb, wb, bb)


# ----------------------------------------------------------------------------
# Small glue ops (plain JAX, channel-major (C, N, H, W), bf16 where possible)
# ----------------------------------------------------------------------------
def bn_cm(x, gamma, beta):
    """Training-mode BatchNorm2d (batch statistics) on channel-major activations."""
    xf = x.astype(jnp.float32)
    mean = xf.mean(axis=(1, 2, 3))
    var = xf.var(axis=(1, 2, 3))               # biased variance (torch train mode)
    scale = gamma * lax.rsqrt(var + EPS)
    shift = beta - mean * scale
    return xf * scale[:, None, None, None] + shift[:, None, None, None]


def maxpool2_cm(x):
    c, n, h, w = x.shape
    return x.reshape(c, n, h // 2, 2, w // 2, 2).max(axis=(3, 5))


def _interp_matrix(size_out, size_in):
    a = np.zeros((size_out, size_in), np.float32)
    s = np.arange(size_out) * (size_in - 1) / (size_out - 1)
    i0 = np.floor(s).astype(np.int64)
    i1 = np.minimum(i0 + 1, size_in - 1)
    t = (s - i0).astype(np.float32)
    rows = np.arange(size_out)
    a[rows, i0] += 1.0 - t
    a[rows, i1] += t
    return jnp.asarray(a)


def upsample_bilinear_x2_cm(x):
    """nn.Upsample(scale_factor=2, mode='bilinear', align_corners=True), (C,N,H,W)."""
    c, n, h, w = x.shape
    x = x.astype(jnp.bfloat16)
    ah = _interp_matrix(2 * h, h).astype(jnp.bfloat16)
    aw = _interp_matrix(2 * w, w).astype(jnp.bfloat16)
    y = jnp.einsum('oh,cnhw->cnow', ah, x)
    y = jnp.einsum('pw,cnow->cnop', aw, y)
    return y


# ----------------------------------------------------------------------------
# Parameter initialization (deterministic, torch-default-style uniform bounds)
# ----------------------------------------------------------------------------
def init_params(key, height, width, channel, ksize, z_dim):
    flat_dim = (height // 8) * (width // 8) * channel * 32

    def uinit(k, shape, fan_in):
        bound = 1.0 / jnp.sqrt(jnp.float32(fan_in))
        return jax.random.uniform(k, shape, jnp.float32, -bound, bound)

    keys = iter(jax.random.split(key, 40))
    p = {}
    # encoder convs: (Cout, Cin, k, k)
    p["conv1_w"] = uinit(next(keys), (8, channel, ksize, ksize), channel * ksize * ksize)
    p["conv1_b"] = uinit(next(keys), (8,), channel * ksize * ksize)
    p["conv2_w"] = uinit(next(keys), (16, 8, ksize, ksize), 8 * ksize * ksize)
    p["conv2_b"] = uinit(next(keys), (16,), 8 * ksize * ksize)
    p["conv3_w"] = uinit(next(keys), (32, 16, ksize, ksize), 16 * ksize * ksize)
    p["conv3_b"] = uinit(next(keys), (32,), 16 * ksize * ksize)
    # encoder linears, stored as (in, out)
    p["enl1_w"] = uinit(next(keys), (flat_dim, 256), flat_dim)
    p["enl1_b"] = uinit(next(keys), (256,), flat_dim)
    p["enl2_w"] = uinit(next(keys), (256, z_dim), 256)
    p["enl2_b"] = uinit(next(keys), (z_dim,), 256)
    # decoder linears
    p["del1_w"] = uinit(next(keys), (z_dim, 256), z_dim)
    p["del1_b"] = uinit(next(keys), (256,), z_dim)
    p["del2_w"] = uinit(next(keys), (256, flat_dim), 256)
    p["del2_b"] = uinit(next(keys), (flat_dim,), 256)
    # decoder transposed convs: torch layout (Cin, Cout, k, k)
    p["convT1_w"] = uinit(next(keys), (32, 16, ksize, ksize), 32 * ksize * ksize)
    p["convT1_b"] = uinit(next(keys), (16,), 32 * ksize * ksize)
    p["convT2_w"] = uinit(next(keys), (16, 8, ksize, ksize), 16 * ksize * ksize)
    p["convT2_b"] = uinit(next(keys), (8,), 16 * ksize * ksize)
    p["convT3_w"] = uinit(next(keys), (8, channel, ksize, ksize), 8 * ksize * ksize)
    p["convT3_b"] = uinit(next(keys), (channel,), 8 * ksize * ksize)
    # batch norms (gamma=1, beta=0)
    for name, c in [("bn_e1", 1), ("bn_e2", 8), ("bn_e3", 16),
                    ("bn_d1", 32), ("bn_d2", 16), ("bn_d3", 8)]:
        p[name + "_g"] = jnp.ones((c,), jnp.float32)
        p[name + "_b"] = jnp.zeros((c,), jnp.float32)
    return p


# ----------------------------------------------------------------------------
# Generator forward = encode + decode
# ----------------------------------------------------------------------------
def generator_forward(params, x_nchw, *, height, width, channel, ksize):
    assert channel == 1 and height == width and ksize % 2 == 1
    n = x_nchw.shape[0]
    x = x_nchw.transpose(1, 0, 2, 3)                                  # (C, N, H, W)

    # --- encode ---
    x = bn_cm(x, params["bn_e1_g"], params["bn_e1_b"])
    x = conv2d_cm(x, params["conv1_w"], params["conv1_b"], leaky=True)
    x = maxpool2_cm(x)
    x = bn_cm(x, params["bn_e2_g"], params["bn_e2_b"])
    x = conv2d_cm(x, params["conv2_w"], params["conv2_b"], leaky=True)
    x = maxpool2_cm(x)
    x = bn_cm(x, params["bn_e3_g"], params["bn_e3_b"])
    x = conv2d_cm(x, params["conv3_w"], params["conv3_b"], leaky=True)
    x = maxpool2_cm(x)
    x = x.transpose(1, 0, 2, 3).reshape(n, -1)                        # torch Flatten (NCHW)
    x = linear(x, params["enl1_w"], params["enl1_b"], leaky=True)
    z = linear(x, params["enl2_w"], params["enl2_b"], leaky=False)

    # --- decode ---
    x = linear(z, params["del1_w"], params["del1_b"], leaky=True)
    x = linear(x, params["del2_w"], params["del2_b"], leaky=False)
    h8 = height // 8
    x = x.reshape(n, 32, h8, h8).transpose(1, 0, 2, 3)                # (C, N, h8, h8)
    x = bn_cm(x, params["bn_d1_g"], params["bn_d1_b"])
    # ConvTranspose2d(stride=1, padding=k//2) == same-padded conv w/ flipped kernel
    x = conv2d_cm(x, convT_as_conv(params["convT1_w"]), params["convT1_b"], leaky=True)
    x = upsample_bilinear_x2_cm(x)
    x = bn_cm(x, params["bn_d2_g"], params["bn_d2_b"])
    x = conv2d_cm(x, convT_as_conv(params["convT2_w"]), params["convT2_b"], leaky=True)
    x = upsample_bilinear_x2_cm(x)
    x = bn_cm(x, params["bn_d3_g"], params["bn_d3_b"])
    x = conv2d_cm(x, convT_as_conv(params["convT3_w"]), params["convT3_b"], leaky=True)
    x = upsample_bilinear_x2_cm(x)
    return x.transpose(1, 0, 2, 3).astype(jnp.float32)                # back to NCHW


if __name__ == "__main__":
    # Small config consistent with the module: channel must be 1, height == width.
    height, width, channel, ksize, z_dim = 16, 16, 1, 3, 32
    batch = 2

    key = jax.random.PRNGKey(0)
    k_param, k_x = jax.random.split(key)
    params = init_params(k_param, height, width, channel, ksize, z_dim)
    x = jax.random.normal(k_x, (batch, channel, height, width), jnp.float32)

    fwd = jax.jit(functools.partial(generator_forward, height=height, width=width,
                                    channel=channel, ksize=ksize))
    out = jax.block_until_ready(fwd(params, x))

    assert out.shape == (batch, channel, height, width), out.shape
    assert bool(jnp.all(jnp.isfinite(out)))
    print("KERNEL_OK")
</pallas_src>

<mosaic_0001>
module attributes {stable_mosaic.version = 11 : i64} {
  func.func @_conv_stacked_kernel(%arg0: i32, %arg1: memref<16x144xbf16, #tpu.memory_space<vmem>>, %arg2: memref<1x16x422xbf16, #tpu.memory_space<vmem>>, %arg3: memref<16x1xf32, #tpu.memory_space<vmem>>, %arg4: memref<16x384xbf16, #tpu.memory_space<vmem>>) attributes {dimension_semantics = [#tpu.dimension_semantics<parallel>], iteration_bounds = array<i64: 2>, scalar_prefetch = 0 : i64, scratch_operands = 0 : i64, tpu.core_type = #tpu.core_type<tc>, window_params = [{pipeline_mode = #tpu.pipeline_mode<synchronous>, transform_indices = @transform_0, window_bounds = array<i64: 16, 144>}, {transform_indices = @transform_1, window_bounds = array<i64: 1, 16, 422>}, {pipeline_mode = #tpu.pipeline_mode<synchronous>, transform_indices = @transform_2, window_bounds = array<i64: 16, 1>}, {transform_indices = @transform_3, window_bounds = array<i64: 16, 384>}]} {
    %c0 = arith.constant 0 : index
    %c0_0 = arith.constant 0 : index
    %c0_1 = arith.constant 0 : index
    %0 = vector.load %arg2[%c0, %c0_0, %c0_1] : memref<1x16x422xbf16, #tpu.memory_space<vmem>>, vector<1x16x384xbf16>
    %1 = vector.shape_cast %0 : vector<1x16x384xbf16> to vector<16x384xbf16>
    %c0_2 = arith.constant 0 : index
    %c0_3 = arith.constant 0 : index
    %c1 = arith.constant 1 : index
    %2 = vector.load %arg2[%c0_2, %c0_3, %c1] : memref<1x16x422xbf16, #tpu.memory_space<vmem>>, vector<1x16x384xbf16>
    %3 = vector.shape_cast %2 : vector<1x16x384xbf16> to vector<16x384xbf16>
    %c0_4 = arith.constant 0 : index
    %c0_5 = arith.constant 0 : index
    %c2 = arith.constant 2 : index
    %4 = vector.load %arg2[%c0_4, %c0_5, %c2] : memref<1x16x422xbf16, #tpu.memory_space<vmem>>, vector<1x16x384xbf16>
    %5 = vector.shape_cast %4 : vector<1x16x384xbf16> to vector<16x384xbf16>
    %c0_6 = arith.constant 0 : index
    %c0_7 = arith.constant 0 : index
    %c18 = arith.constant 18 : index
    %6 = vector.load %arg2[%c0_6, %c0_7, %c18] : memref<1x16x422xbf16, #tpu.memory_space<vmem>>, vector<1x16x384xbf16>
    %7 = vector.shape_cast %6 : vector<1x16x384xbf16> to vector<16x384xbf16>
    %c0_8 = arith.constant 0 : index
    %c0_9 = arith.constant 0 : index
    %c19 = arith.constant 19 : index
    %8 = vector.load %arg2[%c0_8, %c0_9, %c19] : memref<1x16x422xbf16, #tpu.memory_space<vmem>>, vector<1x16x384xbf16>
    %9 = vector.shape_cast %8 : vector<1x16x384xbf16> to vector<16x384xbf16>
    %c0_10 = arith.constant 0 : index
    %c0_11 = arith.constant 0 : index
    %c20 = arith.constant 20 : index
    %10 = vector.load %arg2[%c0_10, %c0_11, %c20] : memref<1x16x422xbf16, #tpu.memory_space<vmem>>, vector<1x16x384xbf16>
    %11 = vector.shape_cast %10 : vector<1x16x384xbf16> to vector<16x384xbf16>
    %c0_12 = arith.constant 0 : index
    %c0_13 = arith.constant 0 : index
    %c36 = arith.constant 36 : index
    %12 = vector.load %arg2[%c0_12, %c0_13, %c36] : memref<1x16x422xbf16, #tpu.memory_space<vmem>>, vector<1x16x384xbf16>
    %13 = vector.shape_cast %12 : vector<1x16x384xbf16> to vector<16x384xbf16>
    %c0_14 = arith.constant 0 : index
    %c0_15 = arith.constant 0 : index
    %c37 = arith.constant 37 : index
    %14 = vector.load %arg2[%c0_14, %c0_15, %c37] : memref<1x16x422xbf16, #tpu.memory_space<vmem>>, vector<1x16x384xbf16>
    %15 = vector.shape_cast %14 : vector<1x16x384xbf16> to vector<16x384xbf16>
    %c0_16 = arith.constant 0 : index
    %c0_17 = arith.constant 0 : index
    %c38 = arith.constant 38 : index
    %16 = vector.load %arg2[%c0_16, %c0_17, %c38] : memref<1x16x422xbf16, #tpu.memory_space<vmem>>, vector<1x16x384xbf16>
    %17 = vector.shape_cast %16 : vector<1x16x384xbf16> to vector<16x384xbf16>
    %18 = tpu.concatenate %1, %3, %5, %7, %9, %11, %13, %15, %17 in 0 : vector<16x384xbf16>, vector<16x384xbf16>, vector<16x384xbf16>, vector<16x384xbf16>, vector<16x384xbf16>, vector<16x384xbf16>, vector<16x384xbf16>, vector<16x384xbf16>, vector<16x384xbf16> -> vector<144x384xbf16>
    %c0_18 = arith.constant 0 : index
    %c0_19 = arith.constant 0 : index
    %19 = vector.load %arg1[%c0_18, %c0_19] : memref<16x144xbf16, #tpu.memory_space<vmem>>, vector<16x144xbf16>
    %cst = arith.constant dense<0.000000e+00> : vector<16x384xf32>
    %20 = tpu.matmul %19, %18, %cst {dimension_numbers = #tpu.dot_dimension_numbers<[1], [0], [0], [1], [0, 0, 1, 1], [], []>} : vector<16x144xbf16>, vector<144x384xbf16>, vector<16x384xf32> -> vector<16x384xf32>
    %c0_20 = arith.constant 0 : index
    %c0_21 = arith.constant 0 : index
    %21 = vector.load %arg3[%c0_20, %c0_21] : memref<16x1xf32, #tpu.memory_space<vmem>>, vector<16x1xf32>
    %22 = vector.broadcast %21 : vector<16x1xf32> to vector<16x384xf32>
    %23 = arith.addf %20, %22 : vector<16x384xf32>
    %cst_22 = arith.constant 0.000000e+00 : f32
    %24 = vector.broadcast %cst_22 : f32 to vector<16x384xf32>
    %25 = arith.cmpf oge, %23, %24 : vector<16x384xf32>
    %cst_23 = arith.constant 2.000000e-01 : f32
    %26 = vector.broadcast %cst_23 : f32 to vector<16x384xf32>
    %27 = arith.mulf %26, %23 : vector<16x384xf32>
    %28 = arith.select %25, %23, %27 : vector<16x384xi1>, vector<16x384xf32>
    %29 = arith.truncf %28 : vector<16x384xf32> to vector<16x384xbf16>
    %c0_24 = arith.constant 0 : index
    %c0_25 = arith.constant 0 : index
    %30 = vector.load %arg4[%c0_24, %c0_25] : memref<16x384xbf16, #tpu.memory_space<vmem>>, vector<16x384xbf16>
    tpu.vector_store %arg4[%c0_24, %c0_25], %29 {strides = array<i32>} : memref<16x384xbf16, #tpu.memory_space<vmem>>, vector<16x384xbf16>,
    return
  }
  func.func @transform_0(%arg0: i32) -> (i32, i32) {
    %c0_i32 = arith.constant 0 : i32
    %c0_i32_0 = arith.constant 0 : i32
    %c0_i32_1 = arith.constant 0 : i32
    return %c0_i32, %c0_i32_0 : i32, i32
  }
  func.func @transform_1(%arg0: i32) -> (i32, i32, i32) {
    %c0_i32 = arith.constant 0 : i32
    %c0_i32_0 = arith.constant 0 : i32
    %c0_i32_1 = arith.constant 0 : i32
    return %arg0, %c0_i32, %c0_i32_0 : i32, i32, i32
  }
  func.func @transform_2(%arg0: i32) -> (i32, i32) {
    %c0_i32 = arith.constant 0 : i32
    %c0_i32_0 = arith.constant 0 : i32
    %c0_i32_1 = arith.constant 0 : i32
    return %c0_i32, %c0_i32_0 : i32, i32
  }
  func.func @transform_3(%arg0: i32) -> (i32, i32) {
    %c0_i32 = arith.constant 0 : i32
    %c0_i32_0 = arith.constant 0 : i32
    return %c0_i32, %arg0 : i32, i32
  }
}

module attributes {stable_mosaic.version = 11 : i64} {
  func.func @_conv_stacked_kernel(%arg0: i32, %arg1: memref<16x144xbf16, #tpu.memory_space<vmem>>, %arg2: memref<1x16x150xbf16, #tpu.memory_space<vmem>>, %arg3: memref<16x1xf32, #tpu.memory_space<vmem>>, %arg4: memref<16x128xbf16, #tpu.memory_space<vmem>>) attributes {dimension_semantics = [#tpu.dimension_semantics<parallel>], iteration_bounds = array<i64: 2>, scalar_prefetch = 0 : i64, scratch_operands = 0 : i64, tpu.core_type = #tpu.core_type<tc>, window_params = [{pipeline_mode = #tpu.pipeline_mode<synchronous>, transform_indices = @transform_0, window_bounds = array<i64: 16, 144>}, {transform_indices = @transform_1, window_bounds = array<i64: 1, 16, 150>}, {pipeline_mode = #tpu.pipeline_mode<synchronous>, transform_indices = @transform_2, window_bounds = array<i64: 16, 1>}, {transform_indices = @transform_3, window_bounds = array<i64: 16, 128>}]} {
    %c0 = arith.constant 0 : index
    %c0_0 = arith.constant 0 : index
    %c0_1 = arith.constant 0 : index
    %0 = vector.load %arg2[%c0, %c0_0, %c0_1] : memref<1x16x150xbf16, #tpu.memory_space<vmem>>, vector<1x16x128xbf16>
    %1 = vector.shape_cast %0 : vector<1x16x128xbf16> to vector<16x128xbf16>
    %c0_2 = arith.constant 0 : index
    %c0_3 = arith.constant 0 : index
    %c1 = arith.constant 1 : index
    %2 = vector.load %arg2[%c0_2, %c0_3, %c1] : memref<1x16x150xbf16, #tpu.memory_space<vmem>>, vector<1x16x128xbf16>
    %3 = vector.shape_cast %2 : vector<1x16x128xbf16> to vector<16x128xbf16>
    %c0_4 = arith.constant 0 : index
    %c0_5 = arith.constant 0 : index
    %c2 = arith.constant 2 : index
    %4 = vector.load %arg2[%c0_4, %c0_5, %c2] : memref<1x16x150xbf16, #tpu.memory_space<vmem>>, vector<1x16x128xbf16>
    %5 = vector.shape_cast %4 : vector<1x16x128xbf16> to vector<16x128xbf16>
    %c0_6 = arith.constant 0 : index
    %c0_7 = arith.constant 0 : index
    %c10 = arith.constant 10 : index
    %6 = vector.load %arg2[%c0_6, %c0_7, %c10] : memref<1x16x150xbf16, #tpu.memory_space<vmem>>, vector<1x16x128xbf16>
    %7 = vector.shape_cast %6 : vector<1x16x128xbf16> to vector<16x128xbf16>
    %c0_8 = arith.constant 0 : index
    %c0_9 = arith.constant 0 : index
    %c11 = arith.constant 11 : index
    %8 = vector.load %arg2[%c0_8, %c0_9, %c11] : memref<1x16x150xbf16, #tpu.memory_space<vmem>>, vector<1x16x128xbf16>
    %9 = vector.shape_cast %8 : vector<1x16x128xbf16> to vector<16x128xbf16>
    %c0_10 = arith.constant 0 : index
    %c0_11 = arith.constant 0 : index
    %c12 = arith.constant 12 : index
    %10 = vector.load %arg2[%c0_10, %c0_11, %c12] : memref<1x16x150xbf16, #tpu.memory_space<vmem>>, vector<1x16x128xbf16>
    %11 = vector.shape_cast %10 : vector<1x16x128xbf16> to vector<16x128xbf16>
    %c0_12 = arith.constant 0 : index
    %c0_13 = arith.constant 0 : index
    %c20 = arith.constant 20 : index
    %12 = vector.load %arg2[%c0_12, %c0_13, %c20] : memref<1x16x150xbf16, #tpu.memory_space<vmem>>, vector<1x16x128xbf16>
    %13 = vector.shape_cast %12 : vector<1x16x128xbf16> to vector<16x128xbf16>
    %c0_14 = arith.constant 0 : index
    %c0_15 = arith.constant 0 : index
    %c21 = arith.constant 21 : index
    %14 = vector.load %arg2[%c0_14, %c0_15, %c21] : memref<1x16x150xbf16, #tpu.memory_space<vmem>>, vector<1x16x128xbf16>
    %15 = vector.shape_cast %14 : vector<1x16x128xbf16> to vector<16x128xbf16>
    %c0_16 = arith.constant 0 : index
    %c0_17 = arith.constant 0 : index
    %c22 = arith.constant 22 : index
    %16 = vector.load %arg2[%c0_16, %c0_17, %c22] : memref<1x16x150xbf16, #tpu.memory_space<vmem>>, vector<1x16x128xbf16>
    %17 = vector.shape_cast %16 : vector<1x16x128xbf16> to vector<16x128xbf16>
    %18 = tpu.concatenate %1, %3, %5, %7, %9, %11, %13, %15, %17 in 0 : vector<16x128xbf16>, vector<16x128xbf16>, vector<16x128xbf16>, vector<16x128xbf16>, vector<16x128xbf16>, vector<16x128xbf16>, vector<16x128xbf16>, vector<16x128xbf16>, vector<16x128xbf16> -> vector<144x128xbf16>
    %c0_18 = arith.constant 0 : index
    %c0_19 = arith.constant 0 : index
    %19 = vector.load %arg1[%c0_18, %c0_19] : memref<16x144xbf16, #tpu.memory_space<vmem>>, vector<16x144xbf16>
    %cst = arith.constant dense<0.000000e+00> : vector<16x128xf32>
    %20 = tpu.matmul %19, %18, %cst {dimension_numbers = #tpu.dot_dimension_numbers<[1], [0], [0], [1], [0, 0, 1, 1], [], []>} : vector<16x144xbf16>, vector<144x128xbf16>, vector<16x128xf32> -> vector<16x128xf32>
    %c0_20 = arith.constant 0 : index
    %c0_21 = arith.constant 0 : index
    %21 = vector.load %arg3[%c0_20, %c0_21] : memref<16x1xf32, #tpu.memory_space<vmem>>, vector<16x1xf32>
    %22 = vector.broadcast %21 : vector<16x1xf32> to vector<16x128xf32>
    %23 = arith.addf %20, %22 : vector<16x128xf32>
    %cst_22 = arith.constant 0.000000e+00 : f32
    %24 = vector.broadcast %cst_22 : f32 to vector<16x128xf32>
    %25 = arith.cmpf oge, %23, %24 : vector<16x128xf32>
    %cst_23 = arith.constant 2.000000e-01 : f32
    %26 = vector.broadcast %cst_23 : f32 to vector<16x128xf32>
    %27 = arith.mulf %26, %23 : vector<16x128xf32>
    %28 = arith.select %25, %23, %27 : vector<16x128xi1>, vector<16x128xf32>
    %29 = arith.truncf %28 : vector<16x128xf32> to vector<16x128xbf16>
    %c0_24 = arith.constant 0 : index
    %c0_25 = arith.constant 0 : index
    %30 = vector.load %arg4[%c0_24, %c0_25] : memref<16x128xbf16, #tpu.memory_space<vmem>>, vector<16x128xbf16>
    tpu.vector_store %arg4[%c0_24, %c0_25], %29 {strides = array<i32>} : memref<16x128xbf16, #tpu.memory_space<vmem>>, vector<16x128xbf16>,
    return
  }
  func.func @transform_0(%arg0: i32) -> (i32, i32) {
    %c0_i32 = arith.constant 0 : i32
    %c0_i32_0 = arith.constant 0 : i32
    %c0_i32_1 = arith.constant 0 : i32
    return %c0_i32, %c0_i32_0 : i32, i32
  }
  func.func @transform_1(%arg0: i32) -> (i32, i32, i32) {
    %c0_i32 = arith.constant 0 : i32
    %c0_i32_0 = arith.constant 0 : i32
    %c0_i32_1 = arith.constant 0 : i32
    return %arg0, %c0_i32, %c0_i32_0 : i32, i32, i32
  }
  func.func @transform_2(%arg0: i32) -> (i32, i32) {
    %c0_i32 = arith.constant 0 : i32
    %c0_i32_0 = arith.constant 0 : i32
    %c0_i32_1 = arith.constant 0 : i32
    return %c0_i32, %c0_i32_0 : i32, i32
  }
  func.func @transform_3(%arg0: i32) -> (i32, i32) {
    %c0_i32 = arith.constant 0 : i32
    %c0_i32_0 = arith.constant 0 : i32
    return %c0_i32, %arg0 : i32, i32
  }
}

module attributes {stable_mosaic.version = 11 : i64} {
  func.func @_conv_stacked_kernel(%arg0: i32, %arg1: memref<32x144xbf16, #tpu.memory_space<vmem>>, %arg2: memref<1x16x142xbf16, #tpu.memory_space<vmem>>, %arg3: memref<32x1xf32, #tpu.memory_space<vmem>>, %arg4: memref<32x128xbf16, #tpu.memory_space<vmem>>) attributes {dimension_semantics = [#tpu.dimension_semantics<parallel>], iteration_bounds = array<i64: 1>, scalar_prefetch = 0 : i64, scratch_operands = 0 : i64, tpu.core_type = #tpu.core_type<tc>, window_params = [{pipeline_mode = #tpu.pipeline_mode<synchronous>, transform_indices = @transform_0, window_bounds = array<i64: 32, 144>}, {transform_indices = @transform_1, window_bounds = array<i64: 1, 16, 142>}, {pipeline_mode = #tpu.pipeline_mode<synchronous>, transform_indices = @transform_2, window_bounds = array<i64: 32, 1>}, {transform_indices = @transform_3, window_bounds = array<i64: 32, 128>}]} {
    %c0 = arith.constant 0 : index
    %c0_0 = arith.constant 0 : index
    %c0_1 = arith.constant 0 : index
    %0 = vector.load %arg2[%c0, %c0_0, %c0_1] : memref<1x16x142xbf16, #tpu.memory_space<vmem>>, vector<1x16x128xbf16>
    %1 = vector.shape_cast %0 : vector<1x16x128xbf16> to vector<16x128xbf16>
    %c0_2 = arith.constant 0 : index
    %c0_3 = arith.constant 0 : index
    %c1 = arith.constant 1 : index
    %2 = vector.load %arg2[%c0_2, %c0_3, %c1] : memref<1x16x142xbf16, #tpu.memory_space<vmem>>, vector<1x16x128xbf16>
    %3 = vector.shape_cast %2 : vector<1x16x128xbf16> to vector<16x128xbf16>
    %c0_4 = arith.constant 0 : index
    %c0_5 = arith.constant 0 : index
    %c2 = arith.constant 2 : index
    %4 = vector.load %arg2[%c0_4, %c0_5, %c2] : memref<1x16x142xbf16, #tpu.memory_space<vmem>>, vector<1x16x128xbf16>
    %5 = vector.shape_cast %4 : vector<1x16x128xbf16> to vector<16x128xbf16>
    %c0_6 = arith.constant 0 : index
    %c0_7 = arith.constant 0 : index
    %c6 = arith.constant 6 : index
    %6 = vector.load %arg2[%c0_6, %c0_7, %c6] : memref<1x16x142xbf16, #tpu.memory_space<vmem>>, vector<1x16x128xbf16>
    %7 = vector.shape_cast %6 : vector<1x16x128xbf16> to vector<16x128xbf16>
    %c0_8 = arith.constant 0 : index
    %c0_9 = arith.constant 0 : index
    %c7 = arith.constant 7 : index
    %8 = vector.load %arg2[%c0_8, %c0_9, %c7] : memref<1x16x142xbf16, #tpu.memory_space<vmem>>, vector<1x16x128xbf16>
    %9 = vector.shape_cast %8 : vector<1x16x128xbf16> to vector<16x128xbf16>
    %c0_10 = arith.constant 0 : index
    %c0_11 = arith.constant 0 : index
    %c8 = arith.constant 8 : index
    %10 = vector.load %arg2[%c0_10, %c0_11, %c8] : memref<1x16x142xbf16, #tpu.memory_space<vmem>>, vector<1x16x128xbf16>
    %11 = vector.shape_cast %10 : vector<1x16x128xbf16> to vector<16x128xbf16>
    %c0_12 = arith.constant 0 : index
    %c0_13 = arith.constant 0 : index
    %c12 = arith.constant 12 : index
    %12 = vector.load %arg2[%c0_12, %c0_13, %c12] : memref<1x16x142xbf16, #tpu.memory_space<vmem>>, vector<1x16x128xbf16>
    %13 = vector.shape_cast %12 : vector<1x16x128xbf16> to vector<16x128xbf16>
    %c0_14 = arith.constant 0 : index
    %c0_15 = arith.constant 0 : index
    %c13 = arith.constant 13 : index
    %14 = vector.load %arg2[%c0_14, %c0_15, %c13] : memref<1x16x142xbf16, #tpu.memory_space<vmem>>, vector<1x16x128xbf16>
    %15 = vector.shape_cast %14 : vector<1x16x128xbf16> to vector<16x128xbf16>
    %c0_16 = arith.constant 0 : index
    %c0_17 = arith.constant 0 : index
    %c14 = arith.constant 14 : index
    %16 = vector.load %arg2[%c0_16, %c0_17, %c14] : memref<1x16x142xbf16, #tpu.memory_space<vmem>>, vector<1x16x128xbf16>
    %17 = vector.shape_cast %16 : vector<1x16x128xbf16> to vector<16x128xbf16>
    %18 = tpu.concatenate %1, %3, %5, %7, %9, %11, %13, %15, %17 in 0 : vector<16x128xbf16>, vector<16x128xbf16>, vector<16x128xbf16>, vector<16x128xbf16>, vector<16x128xbf16>, vector<16x128xbf16>, vector<16x128xbf16>, vector<16x128xbf16>, vector<16x128xbf16> -> vector<144x128xbf16>
    %c0_18 = arith.constant 0 : index
    %c0_19 = arith.constant 0 : index
    %19 = vector.load %arg1[%c0_18, %c0_19] : memref<32x144xbf16, #tpu.memory_space<vmem>>, vector<32x144xbf16>
    %cst = arith.constant dense<0.000000e+00> : vector<32x128xf32>
    %20 = tpu.matmul %19, %18, %cst {dimension_numbers = #tpu.dot_dimension_numbers<[1], [0], [0], [1], [0, 0, 1, 1], [], []>} : vector<32x144xbf16>, vector<144x128xbf16>, vector<32x128xf32> -> vector<32x128xf32>
    %c0_20 = arith.constant 0 : index
    %c0_21 = arith.constant 0 : index
    %21 = vector.load %arg3[%c0_20, %c0_21] : memref<32x1xf32, #tpu.memory_space<vmem>>, vector<32x1xf32>
    %22 = vector.broadcast %21 : vector<32x1xf32> to vector<32x128xf32>
    %23 = arith.addf %20, %22 : vector<32x128xf32>
    %cst_22 = arith.constant 0.000000e+00 : f32
    %24 = vector.broadcast %cst_22 : f32 to vector<32x128xf32>
    %25 = arith.cmpf oge, %23, %24 : vector<32x128xf32>
    %cst_23 = arith.constant 2.000000e-01 : f32
    %26 = vector.broadcast %cst_23 : f32 to vector<32x128xf32>
    %27 = arith.mulf %26, %23 : vector<32x128xf32>
    %28 = arith.select %25, %23, %27 : vector<32x128xi1>, vector<32x128xf32>
    %29 = arith.truncf %28 : vector<32x128xf32> to vector<32x128xbf16>
    %c0_24 = arith.constant 0 : index
    %c0_25 = arith.constant 0 : index
    %30 = vector.load %arg4[%c0_24, %c0_25] : memref<32x128xbf16, #tpu.memory_space<vmem>>, vector<32x128xbf16>
    tpu.vector_store %arg4[%c0_24, %c0_25], %29 {strides = array<i32>} : memref<32x128xbf16, #tpu.memory_space<vmem>>, vector<32x128xbf16>,
    return
  }
  func.func @transform_0(%arg0: i32) -> (i32, i32) {
    %c0_i32 = arith.constant 0 : i32
    %c0_i32_0 = arith.constant 0 : i32
    %c0_i32_1 = arith.constant 0 : i32
    return %c0_i32, %c0_i32_0 : i32, i32
  }
  func.func @transform_1(%arg0: i32) -> (i32, i32, i32) {
    %c0_i32 = arith.constant 0 : i32
    %c0_i32_0 = arith.constant 0 : i32
    %c0_i32_1 = arith.constant 0 : i32
    return %arg0, %c0_i32, %c0_i32_0 : i32, i32, i32
  }
  func.func @transform_2(%arg0: i32) -> (i32, i32) {
    %c0_i32 = arith.constant 0 : i32
    %c0_i32_0 = arith.constant 0 : i32
    %c0_i32_1 = arith.constant 0 : i32
    return %c0_i32, %c0_i32_0 : i32, i32
  }
  func.func @transform_3(%arg0: i32) -> (i32, i32) {
    %c0_i32 = arith.constant 0 : i32
    %c0_i32_0 = arith.constant 0 : i32
    return %c0_i32, %arg0 : i32, i32
  }
}

module attributes {stable_mosaic.version = 11 : i64} {
  func.func @_linear_kernel_single(%arg0: i32, %arg1: i32, %arg2: memref<2x128xbf16, #tpu.memory_space<vmem>>, %arg3: memref<128x128xbf16, #tpu.memory_space<vmem>>, %arg4: memref<1x128xf32, #tpu.memory_space<vmem>>, %arg5: memref<2x128xf32, #tpu.memory_space<vmem>>) attributes {dimension_semantics = [#tpu.dimension_semantics<parallel>, #tpu.dimension_semantics<parallel>], iteration_bounds = array<i64: 1, 2>, scalar_prefetch = 0 : i64, scratch_operands = 0 : i64, tpu.core_type = #tpu.core_type<tc>, window_params = [{transform_indices = @transform_0, window_bounds = array<i64: 2, 128>}, {transform_indices = @transform_1, window_bounds = array<i64: 128, 128>}, {transform_indices = @transform_2, window_bounds = array<i64: 1, 128>}, {transform_indices = @transform_3, window_bounds = array<i64: 2, 128>}]} {
    %c0 = arith.constant 0 : index
    %c0_0 = arith.constant 0 : index
    %0 = vector.load %arg2[%c0, %c0_0] : memref<2x128xbf16, #tpu.memory_space<vmem>>, vector<2x128xbf16>
    %c0_1 = arith.constant 0 : index
    %c0_2 = arith.constant 0 : index
    %1 = vector.load %arg3[%c0_1, %c0_2] : memref<128x128xbf16, #tpu.memory_space<vmem>>, vector<128x128xbf16>
    %cst = arith.constant dense<0.000000e+00> : vector<2x128xf32>
    %2 = tpu.matmul %0, %1, %cst {dimension_numbers = #tpu.dot_dimension_numbers<[1], [0], [0], [1], [0, 0, 1, 1], [], []>} : vector<2x128xbf16>, vector<128x128xbf16>, vector<2x128xf32> -> vector<2x128xf32>
    %c0_3 = arith.constant 0 : index
    %c0_4 = arith.constant 0 : index
    %3 = vector.load %arg4[%c0_3, %c0_4] : memref<1x128xf32, #tpu.memory_space<vmem>>, vector<1x128xf32>
    %4 = vector.broadcast %3 : vector<1x128xf32> to vector<2x128xf32>
    %5 = arith.addf %2, %4 : vector<2x128xf32>
    %cst_5 = arith.constant 0.000000e+00 : f32
    %6 = vector.broadcast %cst_5 : f32 to vector<2x128xf32>
    %7 = arith.cmpf oge, %5, %6 : vector<2x128xf32>
    %cst_6 = arith.constant 2.000000e-01 : f32
    %8 = vector.broadcast %cst_6 : f32 to vector<2x128xf32>
    %9 = arith.mulf %8, %5 : vector<2x128xf32>
    %10 = arith.select %7, %5, %9 : vector<2x128xi1>, vector<2x128xf32>
    %c0_7 = arith.constant 0 : index
    %c0_8 = arith.constant 0 : index
    %11 = vector.load %arg5[%c0_7, %c0_8] : memref<2x128xf32, #tpu.memory_space<vmem>>, vector<2x128xf32>
    tpu.vector_store %arg5[%c0_7, %c0_8], %10 {strides = array<i32>} : memref<2x128xf32, #tpu.memory_space<vmem>>, vector<2x128xf32>,
    return
  }
  func.func @transform_0(%arg0: i32, %arg1: i32) -> (i32, i32) {
    %c0_i32 = arith.constant 0 : i32
    %c0_i32_0 = arith.constant 0 : i32
    return %arg0, %c0_i32 : i32, i32
  }
  func.func @transform_1(%arg0: i32, %arg1: i32) -> (i32, i32) {
    %c0_i32 = arith.constant 0 : i32
    %c0_i32_0 = arith.constant 0 : i32
    return %c0_i32, %arg1 : i32, i32
  }
  func.func @transform_2(%arg0: i32, %arg1: i32) -> (i32, i32) {
    %c0_i32 = arith.constant 0 : i32
    %c0_i32_0 = arith.constant 0 : i32
    return %c0_i32, %arg1 : i32, i32
  }
  func.func @transform_3(%arg0: i32, %arg1: i32) -> (i32, i32) {
    %c0_i32 = arith.constant 0 : i32
    return %arg0, %arg1 : i32, i32
  }
}

module attributes {stable_mosaic.version = 11 : i64} {
  func.func @_linear_kernel_single(%arg0: i32, %arg1: i32, %arg2: memref<2x256xbf16, #tpu.memory_space<vmem>>, %arg3: memref<256x32xbf16, #tpu.memory_space<vmem>>, %arg4: memref<1x32xf32, #tpu.memory_space<vmem>>, %arg5: memref<2x32xf32, #tpu.memory_space<vmem>>) attributes {dimension_semantics = [#tpu.dimension_semantics<parallel>, #tpu.dimension_semantics<parallel>], iteration_bounds = array<i64: 1, 1>, scalar_prefetch = 0 : i64, scratch_operands = 0 : i64, tpu.core_type = #tpu.core_type<tc>, window_params = [{transform_indices = @transform_0, window_bounds = array<i64: 2, 256>}, {transform_indices = @transform_1, window_bounds = array<i64: 256, 32>}, {transform_indices = @transform_2, window_bounds = array<i64: 1, 32>}, {transform_indices = @transform_3, window_bounds = array<i64: 2, 32>}]} {
    %c0 = arith.constant 0 : index
    %c0_0 = arith.constant 0 : index
    %0 = vector.load %arg2[%c0, %c0_0] : memref<2x256xbf16, #tpu.memory_space<vmem>>, vector<2x256xbf16>
    %c0_1 = arith.constant 0 : index
    %c0_2 = arith.constant 0 : index
    %1 = vector.load %arg3[%c0_1, %c0_2] : memref<256x32xbf16, #tpu.memory_space<vmem>>, vector<256x32xbf16>
    %cst = arith.constant dense<0.000000e+00> : vector<2x32xf32>
    %2 = tpu.matmul %0, %1, %cst {dimension_numbers = #tpu.dot_dimension_numbers<[1], [0], [0], [1], [0, 0, 1, 1], [], []>} : vector<2x256xbf16>, vector<256x32xbf16>, vector<2x32xf32> -> vector<2x32xf32>
    %c0_3 = arith.constant 0 : index
    %c0_4 = arith.constant 0 : index
    %3 = vector.load %arg4[%c0_3, %c0_4] : memref<1x32xf32, #tpu.memory_space<vmem>>, vector<1x32xf32>
    %4 = vector.broadcast %3 : vector<1x32xf32> to vector<2x32xf32>
    %5 = arith.addf %2, %4 : vector<2x32xf32>
    %c0_5 = arith.constant 0 : index
    %c0_6 = arith.constant 0 : index
    %6 = vector.load %arg5[%c0_5, %c0_6] : memref<2x32xf32, #tpu.memory_space<vmem>>, vector<2x32xf32>
    tpu.vector_store %arg5[%c0_5, %c0_6], %5 {strides = array<i32>} : memref<2x32xf32, #tpu.memory_space<vmem>>, vector<2x32xf32>,
    return
  }
  func.func @transform_0(%arg0: i32, %arg1: i32) -> (i32, i32) {
    %c0_i32 = arith.constant 0 : i32
    %c0_i32_0 = arith.constant 0 : i32
    return %arg0, %c0_i32 : i32, i32
  }
  func.func @transform_1(%arg0: i32, %arg1: i32) -> (i32, i32) {
    %c0_i32 = arith.constant 0 : i32
    %c0_i32_0 = arith.constant 0 : i32
    return %c0_i32, %arg1 : i32, i32
  }
  func.func @transform_2(%arg0: i32, %arg1: i32) -> (i32, i32) {
    %c0_i32 = arith.constant 0 : i32
    %c0_i32_0 = arith.constant 0 : i32
    return %c0_i32, %arg1 : i32, i32
  }
  func.func @transform_3(%arg0: i32, %arg1: i32) -> (i32, i32) {
    %c0_i32 = arith.constant 0 : i32
    return %arg0, %arg1 : i32, i32
  }
}

module attributes {stable_mosaic.version = 11 : i64} {
  func.func @_linear_kernel_single(%arg0: i32, %arg1: i32, %arg2: memref<2x256xbf16, #tpu.memory_space<vmem>>, %arg3: memref<256x128xbf16, #tpu.memory_space<vmem>>, %arg4: memref<1x128xf32, #tpu.memory_space<vmem>>, %arg5: memref<2x128xf32, #tpu.memory_space<vmem>>) attributes {dimension_semantics = [#tpu.dimension_semantics<parallel>, #tpu.dimension_semantics<parallel>], iteration_bounds = array<i64: 1, 1>, scalar_prefetch = 0 : i64, scratch_operands = 0 : i64, tpu.core_type = #tpu.core_type<tc>, window_params = [{transform_indices = @transform_0, window_bounds = array<i64: 2, 256>}, {transform_indices = @transform_1, window_bounds = array<i64: 256, 128>}, {transform_indices = @transform_2, window_bounds = array<i64: 1, 128>}, {transform_indices = @transform_3, window_bounds = array<i64: 2, 128>}]} {
    %c0 = arith.constant 0 : index
    %c0_0 = arith.constant 0 : index
    %0 = vector.load %arg2[%c0, %c0_0] : memref<2x256xbf16, #tpu.memory_space<vmem>>, vector<2x256xbf16>
    %c0_1 = arith.constant 0 : index
    %c0_2 = arith.constant 0 : index
    %1 = vector.load %arg3[%c0_1, %c0_2] : memref<256x128xbf16, #tpu.memory_space<vmem>>, vector<256x128xbf16>
    %cst = arith.constant dense<0.000000e+00> : vector<2x128xf32>
    %2 = tpu.matmul %0, %1, %cst {dimension_numbers = #tpu.dot_dimension_numbers<[1], [0], [0], [1], [0, 0, 1, 1], [], []>} : vector<2x256xbf16>, vector<256x128xbf16>, vector<2x128xf32> -> vector<2x128xf32>
    %c0_3 = arith.constant 0 : index
    %c0_4 = arith.constant 0 : index
    %3 = vector.load %arg4[%c0_3, %c0_4] : memref<1x128xf32, #tpu.memory_space<vmem>>, vector<1x128xf32>
    %4 = vector.broadcast %3 : vector<1x128xf32> to vector<2x128xf32>
    %5 = arith.addf %2, %4 : vector<2x128xf32>
    %c0_5 = arith.constant 0 : index
    %c0_6 = arith.constant 0 : index
    %6 = vector.load %arg5[%c0_5, %c0_6] : memref<2x128xf32, #tpu.memory_space<vmem>>, vector<2x128xf32>
    tpu.vector_store %arg5[%c0_5, %c0_6], %5 {strides = array<i32>} : memref<2x128xf32, #tpu.memory_space<vmem>>, vector<2x128xf32>,
    return
  }
  func.func @transform_0(%arg0: i32, %arg1: i32) -> (i32, i32) {
    %c0_i32 = arith.constant 0 : i32
    %c0_i32_0 = arith.constant 0 : i32
    return %arg0, %c0_i32 : i32, i32
  }
  func.func @transform_1(%arg0: i32, %arg1: i32) -> (i32, i32) {
    %c0_i32 = arith.constant 0 : i32
    %c0_i32_0 = arith.constant 0 : i32
    return %c0_i32, %arg1 : i32, i32
  }
  func.func @transform_2(%arg0: i32, %arg1: i32) -> (i32, i32) {
    %c0_i32 = arith.constant 0 : i32
    %c0_i32_0 = arith.constant 0 : i32
    return %c0_i32, %arg1 : i32, i32
  }
  func.func @transform_3(%arg0: i32, %arg1: i32) -> (i32, i32) {
    %c0_i32 = arith.constant 0 : i32
    return %arg0, %arg1 : i32, i32
  }
}

module attributes {stable_mosaic.version = 11 : i64} {
  func.func @_linear_kernel_single(%arg0: i32, %arg1: i32, %arg2: memref<2x32xbf16, #tpu.memory_space<vmem>>, %arg3: memref<32x128xbf16, #tpu.memory_space<vmem>>, %arg4: memref<1x128xf32, #tpu.memory_space<vmem>>, %arg5: memref<2x128xf32, #tpu.memory_space<vmem>>) attributes {dimension_semantics = [#tpu.dimension_semantics<parallel>, #tpu.dimension_semantics<parallel>], iteration_bounds = array<i64: 1, 2>, scalar_prefetch = 0 : i64, scratch_operands = 0 : i64, tpu.core_type = #tpu.core_type<tc>, window_params = [{transform_indices = @transform_0, window_bounds = array<i64: 2, 32>}, {transform_indices = @transform_1, window_bounds = array<i64: 32, 128>}, {transform_indices = @transform_2, window_bounds = array<i64: 1, 128>}, {transform_indices = @transform_3, window_bounds = array<i64: 2, 128>}]} {
    %c0 = arith.constant 0 : index
    %c0_0 = arith.constant 0 : index
    %0 = vector.load %arg2[%c0, %c0_0] : memref<2x32xbf16, #tpu.memory_space<vmem>>, vector<2x32xbf16>
    %c0_1 = arith.constant 0 : index
    %c0_2 = arith.constant 0 : index
    %1 = vector.load %arg3[%c0_1, %c0_2] : memref<32x128xbf16, #tpu.memory_space<vmem>>, vector<32x128xbf16>
    %cst = arith.constant dense<0.000000e+00> : vector<2x128xf32>
    %2 = tpu.matmul %0, %1, %cst {dimension_numbers = #tpu.dot_dimension_numbers<[1], [0], [0], [1], [0, 0, 1, 1], [], []>} : vector<2x32xbf16>, vector<32x128xbf16>, vector<2x128xf32> -> vector<2x128xf32>
    %c0_3 = arith.constant 0 : index
    %c0_4 = arith.constant 0 : index
    %3 = vector.load %arg4[%c0_3, %c0_4] : memref<1x128xf32, #tpu.memory_space<vmem>>, vector<1x128xf32>
    %4 = vector.broadcast %3 : vector<1x128xf32> to vector<2x128xf32>
    %5 = arith.addf %2, %4 : vector<2x128xf32>
    %cst_5 = arith.constant 0.000000e+00 : f32
    %6 = vector.broadcast %cst_5 : f32 to vector<2x128xf32>
    %7 = arith.cmpf oge, %5, %6 : vector<2x128xf32>
    %cst_6 = arith.constant 2.000000e-01 : f32
    %8 = vector.broadcast %cst_6 : f32 to vector<2x128xf32>
    %9 = arith.mulf %8, %5 : vector<2x128xf32>
    %10 = arith.select %7, %5, %9 : vector<2x128xi1>, vector<2x128xf32>
    %c0_7 = arith.constant 0 : index
    %c0_8 = arith.constant 0 : index
    %11 = vector.load %arg5[%c0_7, %c0_8] : memref<2x128xf32, #tpu.memory_space<vmem>>, vector<2x128xf32>
    tpu.vector_store %arg5[%c0_7, %c0_8], %10 {strides = array<i32>} : memref<2x128xf32, #tpu.memory_space<vmem>>, vector<2x128xf32>,
    return
  }
  func.func @transform_0(%arg0: i32, %arg1: i32) -> (i32, i32) {
    %c0_i32 = arith.constant 0 : i32
    %c0_i32_0 = arith.constant 0 : i32
    return %arg0, %c0_i32 : i32, i32
  }
  func.func @transform_1(%arg0: i32, %arg1: i32) -> (i32, i32) {
    %c0_i32 = arith.constant 0 : i32
    %c0_i32_0 = arith.constant 0 : i32
    return %c0_i32, %arg1 : i32, i32
  }
  func.func @transform_2(%arg0: i32, %arg1: i32) -> (i32, i32) {
    %c0_i32 = arith.constant 0 : i32
    %c0_i32_0 = arith.constant 0 : i32
    return %c0_i32, %arg1 : i32, i32
  }
  func.func @transform_3(%arg0: i32, %arg1: i32) -> (i32, i32) {
    %c0_i32 = arith.constant 0 : i32
    return %arg0, %arg1 : i32, i32
  }
}

module attributes {stable_mosaic.version = 11 : i64} {
  func.func @_conv_stacked_kernel(%arg0: i32, %arg1: memref<16x288xbf16, #tpu.memory_space<vmem>>, %arg2: memref<1x32x138xbf16, #tpu.memory_space<vmem>>, %arg3: memref<16x1xf32, #tpu.memory_space<vmem>>, %arg4: memref<16x128xbf16, #tpu.memory_space<vmem>>) attributes {dimension_semantics = [#tpu.dimension_semantics<parallel>], iteration_bounds = array<i64: 1>, scalar_prefetch = 0 : i64, scratch_operands = 0 : i64, tpu.core_type = #tpu.core_type<tc>, window_params = [{pipeline_mode = #tpu.pipeline_mode<synchronous>, transform_indices = @transform_0, window_bounds = array<i64: 16, 288>}, {transform_indices = @transform_1, window_bounds = array<i64: 1, 32, 138>}, {pipeline_mode = #tpu.pipeline_mode<synchronous>, transform_indices = @transform_2, window_bounds = array<i64: 16, 1>}, {transform_indices = @transform_3, window_bounds = array<i64: 16, 128>}]} {
    %c0 = arith.constant 0 : index
    %c0_0 = arith.constant 0 : index
    %c0_1 = arith.constant 0 : index
    %0 = vector.load %arg2[%c0, %c0_0, %c0_1] : memref<1x32x138xbf16, #tpu.memory_space<vmem>>, vector<1x32x128xbf16>
    %1 = vector.shape_cast %0 : vector<1x32x128xbf16> to vector<32x128xbf16>
    %c0_2 = arith.constant 0 : index
    %c0_3 = arith.constant 0 : index
    %c1 = arith.constant 1 : index
    %2 = vector.load %arg2[%c0_2, %c0_3, %c1] : memref<1x32x138xbf16, #tpu.memory_space<vmem>>, vector<1x32x128xbf16>
    %3 = vector.shape_cast %2 : vector<1x32x128xbf16> to vector<32x128xbf16>
    %c0_4 = arith.constant 0 : index
    %c0_5 = arith.constant 0 : index
    %c2 = arith.constant 2 : index
    %4 = vector.load %arg2[%c0_4, %c0_5, %c2] : memref<1x32x138xbf16, #tpu.memory_space<vmem>>, vector<1x32x128xbf16>
    %5 = vector.shape_cast %4 : vector<1x32x128xbf16> to vector<32x128xbf16>
    %c0_6 = arith.constant 0 : index
    %c0_7 = arith.constant 0 : index
    %c4 = arith.constant 4 : index
    %6 = vector.load %arg2[%c0_6, %c0_7, %c4] : memref<1x32x138xbf16, #tpu.memory_space<vmem>>, vector<1x32x128xbf16>
    %7 = vector.shape_cast %6 : vector<1x32x128xbf16> to vector<32x128xbf16>
    %c0_8 = arith.constant 0 : index
    %c0_9 = arith.constant 0 : index
    %c5 = arith.constant 5 : index
    %8 = vector.load %arg2[%c0_8, %c0_9, %c5] : memref<1x32x138xbf16, #tpu.memory_space<vmem>>, vector<1x32x128xbf16>
    %9 = vector.shape_cast %8 : vector<1x32x128xbf16> to vector<32x128xbf16>
    %c0_10 = arith.constant 0 : index
    %c0_11 = arith.constant 0 : index
    %c6 = arith.constant 6 : index
    %10 = vector.load %arg2[%c0_10, %c0_11, %c6] : memref<1x32x138xbf16, #tpu.memory_space<vmem>>, vector<1x32x128xbf16>
    %11 = vector.shape_cast %10 : vector<1x32x128xbf16> to vector<32x128xbf16>
    %c0_12 = arith.constant 0 : index
    %c0_13 = arith.constant 0 : index
    %c8 = arith.constant 8 : index
    %12 = vector.load %arg2[%c0_12, %c0_13, %c8] : memref<1x32x138xbf16, #tpu.memory_space<vmem>>, vector<1x32x128xbf16>
    %13 = vector.shape_cast %12 : vector<1x32x128xbf16> to vector<32x128xbf16>
    %c0_14 = arith.constant 0 : index
    %c0_15 = arith.constant 0 : index
    %c9 = arith.constant 9 : index
    %14 = vector.load %arg2[%c0_14, %c0_15, %c9] : memref<1x32x138xbf16, #tpu.memory_space<vmem>>, vector<1x32x128xbf16>
    %15 = vector.shape_cast %14 : vector<1x32x128xbf16> to vector<32x128xbf16>
    %c0_16 = arith.constant 0 : index
    %c0_17 = arith.constant 0 : index
    %c10 = arith.constant 10 : index
    %16 = vector.load %arg2[%c0_16, %c0_17, %c10] : memref<1x32x138xbf16, #tpu.memory_space<vmem>>, vector<1x32x128xbf16>
    %17 = vector.shape_cast %16 : vector<1x32x128xbf16> to vector<32x128xbf16>
    %18 = tpu.concatenate %1, %3, %5, %7, %9, %11, %13, %15, %17 in 0 : vector<32x128xbf16>, vector<32x128xbf16>, vector<32x128xbf16>, vector<32x128xbf16>, vector<32x128xbf16>, vector<32x128xbf16>, vector<32x128xbf16>, vector<32x128xbf16>, vector<32x128xbf16> -> vector<288x128xbf16>
    %c0_18 = arith.constant 0 : index
    %c0_19 = arith.constant 0 : index
    %19 = vector.load %arg1[%c0_18, %c0_19] : memref<16x288xbf16, #tpu.memory_space<vmem>>, vector<16x288xbf16>
    %cst = arith.constant dense<0.000000e+00> : vector<16x128xf32>
    %20 = tpu.matmul %19, %18, %cst {dimension_numbers = #tpu.dot_dimension_numbers<[1], [0], [0], [1], [0, 0, 1, 1], [], []>} : vector<16x288xbf16>, vector<288x128xbf16>, vector<16x128xf32> -> vector<16x128xf32>
    %c0_20 = arith.constant 0 : index
    %c0_21 = arith.constant 0 : index
    %21 = vector.load %arg3[%c0_20, %c0_21] : memref<16x1xf32, #tpu.memory_space<vmem>>, vector<16x1xf32>
    %22 = vector.broadcast %21 : vector<16x1xf32> to vector<16x128xf32>
    %23 = arith.addf %20, %22 : vector<16x128xf32>
    %cst_22 = arith.constant 0.000000e+00 : f32
    %24 = vector.broadcast %cst_22 : f32 to vector<16x128xf32>
    %25 = arith.cmpf oge, %23, %24 : vector<16x128xf32>
    %cst_23 = arith.constant 2.000000e-01 : f32
    %26 = vector.broadcast %cst_23 : f32 to vector<16x128xf32>
    %27 = arith.mulf %26, %23 : vector<16x128xf32>
    %28 = arith.select %25, %23, %27 : vector<16x128xi1>, vector<16x128xf32>
    %29 = arith.truncf %28 : vector<16x128xf32> to vector<16x128xbf16>
    %c0_24 = arith.constant 0 : index
    %c0_25 = arith.constant 0 : index
    %30 = vector.load %arg4[%c0_24, %c0_25] : memref<16x128xbf16, #tpu.memory_space<vmem>>, vector<16x128xbf16>
    tpu.vector_store %arg4[%c0_24, %c0_25], %29 {strides = array<i32>} : memref<16x128xbf16, #tpu.memory_space<vmem>>, vector<16x128xbf16>,
    return
  }
  func.func @transform_0(%arg0: i32) -> (i32, i32) {
    %c0_i32 = arith.constant 0 : i32
    %c0_i32_0 = arith.constant 0 : i32
    %c0_i32_1 = arith.constant 0 : i32
    return %c0_i32, %c0_i32_0 : i32, i32
  }
  func.func @transform_1(%arg0: i32) -> (i32, i32, i32) {
    %c0_i32 = arith.constant 0 : i32
    %c0_i32_0 = arith.constant 0 : i32
    %c0_i32_1 = arith.constant 0 : i32
    return %arg0, %c0_i32, %c0_i32_0 : i32, i32, i32
  }
  func.func @transform_2(%arg0: i32) -> (i32, i32) {
    %c0_i32 = arith.constant 0 : i32
    %c0_i32_0 = arith.constant 0 : i32
    %c0_i32_1 = arith.constant 0 : i32
    return %c0_i32, %c0_i32_0 : i32, i32
  }
  func.func @transform_3(%arg0: i32) -> (i32, i32) {
    %c0_i32 = arith.constant 0 : i32
    %c0_i32_0 = arith.constant 0 : i32
    return %c0_i32, %arg0 : i32, i32
  }
}

module attributes {stable_mosaic.version = 11 : i64} {
  func.func @_conv_stacked_kernel(%arg0: i32, %arg1: memref<16x144xbf16, #tpu.memory_space<vmem>>, %arg2: memref<1x16x142xbf16, #tpu.memory_space<vmem>>, %arg3: memref<16x1xf32, #tpu.memory_space<vmem>>, %arg4: memref<16x128xbf16, #tpu.memory_space<vmem>>) attributes {dimension_semantics = [#tpu.dimension_semantics<parallel>], iteration_bounds = array<i64: 1>, scalar_prefetch = 0 : i64, scratch_operands = 0 : i64, tpu.core_type = #tpu.core_type<tc>, window_params = [{pipeline_mode = #tpu.pipeline_mode<synchronous>, transform_indices = @transform_0, window_bounds = array<i64: 16, 144>}, {transform_indices = @transform_1, window_bounds = array<i64: 1, 16, 142>}, {pipeline_mode = #tpu.pipeline_mode<synchronous>, transform_indices = @transform_2, window_bounds = array<i64: 16, 1>}, {transform_indices = @transform_3, window_bounds = array<i64: 16, 128>}]} {
    %c0 = arith.constant 0 : index
    %c0_0 = arith.constant 0 : index
    %c0_1 = arith.constant 0 : index
    %0 = vector.load %arg2[%c0, %c0_0, %c0_1] : memref<1x16x142xbf16, #tpu.memory_space<vmem>>, vector<1x16x128xbf16>
    %1 = vector.shape_cast %0 : vector<1x16x128xbf16> to vector<16x128xbf16>
    %c0_2 = arith.constant 0 : index
    %c0_3 = arith.constant 0 : index
    %c1 = arith.constant 1 : index
    %2 = vector.load %arg2[%c0_2, %c0_3, %c1] : memref<1x16x142xbf16, #tpu.memory_space<vmem>>, vector<1x16x128xbf16>
    %3 = vector.shape_cast %2 : vector<1x16x128xbf16> to vector<16x128xbf16>
    %c0_4 = arith.constant 0 : index
    %c0_5 = arith.constant 0 : index
    %c2 = arith.constant 2 : index
    %4 = vector.load %arg2[%c0_4, %c0_5, %c2] : memref<1x16x142xbf16, #tpu.memory_space<vmem>>, vector<1x16x128xbf16>
    %5 = vector.shape_cast %4 : vector<1x16x128xbf16> to vector<16x128xbf16>
    %c0_6 = arith.constant 0 : index
    %c0_7 = arith.constant 0 : index
    %c6 = arith.constant 6 : index
    %6 = vector.load %arg2[%c0_6, %c0_7, %c6] : memref<1x16x142xbf16, #tpu.memory_space<vmem>>, vector<1x16x128xbf16>
    %7 = vector.shape_cast %6 : vector<1x16x128xbf16> to vector<16x128xbf16>
    %c0_8 = arith.constant 0 : index
    %c0_9 = arith.constant 0 : index
    %c7 = arith.constant 7 : index
    %8 = vector.load %arg2[%c0_8, %c0_9, %c7] : memref<1x16x142xbf16, #tpu.memory_space<vmem>>, vector<1x16x128xbf16>
    %9 = vector.shape_cast %8 : vector<1x16x128xbf16> to vector<16x128xbf16>
    %c0_10 = arith.constant 0 : index
    %c0_11 = arith.constant 0 : index
    %c8 = arith.constant 8 : index
    %10 = vector.load %arg2[%c0_10, %c0_11, %c8] : memref<1x16x142xbf16, #tpu.memory_space<vmem>>, vector<1x16x128xbf16>
    %11 = vector.shape_cast %10 : vector<1x16x128xbf16> to vector<16x128xbf16>
    %c0_12 = arith.constant 0 : index
    %c0_13 = arith.constant 0 : index
    %c12 = arith.constant 12 : index
    %12 = vector.load %arg2[%c0_12, %c0_13, %c12] : memref<1x16x142xbf16, #tpu.memory_space<vmem>>, vector<1x16x128xbf16>
    %13 = vector.shape_cast %12 : vector<1x16x128xbf16> to vector<16x128xbf16>
    %c0_14 = arith.constant 0 : index
    %c0_15 = arith.constant 0 : index
    %c13 = arith.constant 13 : index
    %14 = vector.load %arg2[%c0_14, %c0_15, %c13] : memref<1x16x142xbf16, #tpu.memory_space<vmem>>, vector<1x16x128xbf16>
    %15 = vector.shape_cast %14 : vector<1x16x128xbf16> to vector<16x128xbf16>
    %c0_16 = arith.constant 0 : index
    %c0_17 = arith.constant 0 : index
    %c14 = arith.constant 14 : index
    %16 = vector.load %arg2[%c0_16, %c0_17, %c14] : memref<1x16x142xbf16, #tpu.memory_space<vmem>>, vector<1x16x128xbf16>
    %17 = vector.shape_cast %16 : vector<1x16x128xbf16> to vector<16x128xbf16>
    %18 = tpu.concatenate %1, %3, %5, %7, %9, %11, %13, %15, %17 in 0 : vector<16x128xbf16>, vector<16x128xbf16>, vector<16x128xbf16>, vector<16x128xbf16>, vector<16x128xbf16>, vector<16x128xbf16>, vector<16x128xbf16>, vector<16x128xbf16>, vector<16x128xbf16> -> vector<144x128xbf16>
    %c0_18 = arith.constant 0 : index
    %c0_19 = arith.constant 0 : index
    %19 = vector.load %arg1[%c0_18, %c0_19] : memref<16x144xbf16, #tpu.memory_space<vmem>>, vector<16x144xbf16>
    %cst = arith.constant dense<0.000000e+00> : vector<16x128xf32>
    %20 = tpu.matmul %19, %18, %cst {dimension_numbers = #tpu.dot_dimension_numbers<[1], [0], [0], [1], [0, 0, 1, 1], [], []>} : vector<16x144xbf16>, vector<144x128xbf16>, vector<16x128xf32> -> vector<16x128xf32>
    %c0_20 = arith.constant 0 : index
    %c0_21 = arith.constant 0 : index
    %21 = vector.load %arg3[%c0_20, %c0_21] : memref<16x1xf32, #tpu.memory_space<vmem>>, vector<16x1xf32>
    %22 = vector.broadcast %21 : vector<16x1xf32> to vector<16x128xf32>
    %23 = arith.addf %20, %22 : vector<16x128xf32>
    %cst_22 = arith.constant 0.000000e+00 : f32
    %24 = vector.broadcast %cst_22 : f32 to vector<16x128xf32>
    %25 = arith.cmpf oge, %23, %24 : vector<16x128xf32>
    %cst_23 = arith.constant 2.000000e-01 : f32
    %26 = vector.broadcast %cst_23 : f32 to vector<16x128xf32>
    %27 = arith.mulf %26, %23 : vector<16x128xf32>
    %28 = arith.select %25, %23, %27 : vector<16x128xi1>, vector<16x128xf32>
    %29 = arith.truncf %28 : vector<16x128xf32> to vector<16x128xbf16>
    %c0_24 = arith.constant 0 : index
    %c0_25 = arith.constant 0 : index
    %30 = vector.load %arg4[%c0_24, %c0_25] : memref<16x128xbf16, #tpu.memory_space<vmem>>, vector<16x128xbf16>
    tpu.vector_store %arg4[%c0_24, %c0_25], %29 {strides = array<i32>} : memref<16x128xbf16, #tpu.memory_space<vmem>>, vector<16x128xbf16>,
    return
  }
  func.func @transform_0(%arg0: i32) -> (i32, i32) {
    %c0_i32 = arith.constant 0 : i32
    %c0_i32_0 = arith.constant 0 : i32
    %c0_i32_1 = arith.constant 0 : i32
    return %c0_i32, %c0_i32_0 : i32, i32
  }
  func.func @transform_1(%arg0: i32) -> (i32, i32, i32) {
    %c0_i32 = arith.constant 0 : i32
    %c0_i32_0 = arith.constant 0 : i32
    %c0_i32_1 = arith.constant 0 : i32
    return %arg0, %c0_i32, %c0_i32_0 : i32, i32, i32
  }
  func.func @transform_2(%arg0: i32) -> (i32, i32) {
    %c0_i32 = arith.constant 0 : i32
    %c0_i32_0 = arith.constant 0 : i32
    %c0_i32_1 = arith.constant 0 : i32
    return %c0_i32, %c0_i32_0 : i32, i32
  }
  func.func @transform_3(%arg0: i32) -> (i32, i32) {
    %c0_i32 = arith.constant 0 : i32
    %c0_i32_0 = arith.constant 0 : i32
    return %c0_i32, %arg0 : i32, i32
  }
}

</mosaic_0001>

<llo_original>
// kernel: generator_forward.10
$region0: #{generator_forward.10}
  #allocation0 [shape = 'u32[]', space=smem, size = 0x4, offset = 0x4, fixed_abs, tag = 'smem constant byte address 0x4 - core index']
  #allocation1 [shape = 'u32[72,128]{1,0:T(1,128)}', space=vmem, size = 0x9000, scoped, tag = 'internal scratch']
  %s0 = inlined_call_operand.vmem [shape: bf16[16,144], index: 0, kind: input, shape index: {}]
  %s1 = inlined_call_operand.vmem [shape: bf16[2,16,422], index: 1, kind: input, shape index: {}]
  %s2 = inlined_call_operand.vmem [shape: f32[16,1], index: 2, kind: input, shape index: {}]
  %s3 = inlined_call_operand.vmem [shape: bf16[16,768], index: 3, kind: output, shape index: {}]
  %s4 = sld [smem:[#allocation0]]
  $region67: #{generator_forward.10} parent=0
    _
  %s6 = ssub.s32 1, %s4
  %s7 = scalar_select 0, %s6, %s4
  $region1: #{generator_forward.10} parent=0
    #allocation2 [shape = 'u8[24576]{0}', space=vmem, size = 0x6000, scoped, tag = 'output window, operand 0']
    loop: start=0, step=1, limit=4
    $region2: #{generator_forward.10} parent=1 // loop_pre_header
      _
    $region3: #{generator_forward.10} parent=1 // loop_header
      %s9 = sphi 0, %s13
      %p10 = scmp.ge.s32.totalorder %s9, 4
      %s17 = sphi 0, %s17
      %s19 = sphi 0, %s17
      %s20 = sphi 0, %s19
      %s34 = sphi 0, %s20
      %s40 = sphi 0, %s42
      %s43 = sphi 0, %s40
      %s44 = sphi 0, %s43
      %s60 = sphi 0, %s44
      %s64 = sphi 0, %s64
      %s66 = sphi 0, %s64
      %s67 = sphi 0, %s66
      %s81 = sphi 0, %s67
      %s87 = sphi 0, %s89
      %s90 = sphi 0, %s87
      %s91 = sphi 0, %s90
      %s107 = sphi 0, %s91
    $region4: #{generator_forward.10} parent=1 // loop_header_branch
      %12 = sbr.rel (%p10) target = $region8
    $region5: #{generator_forward.10} parent=1 // loop_body
      %s14 = ssub.s32 %s9, 1
      %s15 = ssub.s32 %s9, 2
      %s16 = sadd.s32 %s9, 1
      %s18 = sadd.s32 %s17, 1
      %p21 = scmp.eq.s32.totalorder %s9, 1
      %p22 = scmp.ne.s32.totalorder %s17, %s19
      %p23 = scmp.eq.s32.totalorder %s9, 0
      %p24 = por %p22, %p23
      %p25 = scmp.ne.s32.totalorder %s17, %s19
      %p26 = scmp.eq.s32.totalorder %s14, 1
      %p27 = por %p25, %p26
      %p28 = scmp.ne.s32.totalorder %s19, %s20
      %p29 = scmp.eq.s32.totalorder %s14, 0
      %p30 = por %p28, %p29
      %p31 = scmp.ne.s32.totalorder %s19, %s20
      %p32 = scmp.eq.s32.totalorder %s15, 1
      %p33 = por %p31, %p32
      %p35 = scmp.ne.s32.totalorder %s20, %s34
      %p36 = scmp.eq.s32.totalorder %s15, 0
      %p37 = por %p35, %p36
      %s38 = ssub.s32 %s9, %s16
      %p39 = scmp.eq.s32.totalorder %s38, 0
      %s41 = sadd.s32 %s40, 1
      %s42 = scalar_select %p39, %s40, %s41
      %p45 = pneg %p39
      %p46 = scmp.eq.s32.totalorder %s9, 1
      %p47 = por %p45, %p46
      %p48 = scmp.ne.s32.totalorder %s40, %s43
      %p49 = scmp.eq.s32.totalorder %s9, 0
      %p50 = por %p48, %p49
      %p51 = scmp.ne.s32.totalorder %s40, %s43
      %p52 = scmp.eq.s32.totalorder %s14, 1
      %p53 = por %p51, %p52
      %p54 = scmp.ne.s32.totalorder %s43, %s44
      %p55 = scmp.eq.s32.totalorder %s14, 0
      %p56 = por %p54, %p55
      %p57 = scmp.ne.s32.totalorder %s43, %s44
      %p58 = scmp.eq.s32.totalorder %s15, 1
      %p59 = por %p57, %p58
      %p61 = scmp.ne.s32.totalorder %s44, %s60
      %p62 = scmp.eq.s32.totalorder %s15, 0
      %p63 = por %p61, %p62
      %s65 = sadd.s32 %s64, 1
      %p68 = scmp.eq.s32.totalorder %s9, 1
      %p69 = scmp.ne.s32.totalorder %s64, %s66
      %p70 = scmp.eq.s32.totalorder %s9, 0
      %p71 = por %p69, %p70
      %p72 = scmp.ne.s32.totalorder %s64, %s66
      %p73 = scmp.eq.s32.totalorder %s14, 1
      %p74 = por %p72, %p73
      %p75 = scmp.ne.s32.totalorder %s66, %s67
      %p76 = scmp.eq.s32.totalorder %s14, 0
      %p77 = por %p75, %p76
      %p78 = scmp.ne.s32.totalorder %s66, %s67
      %p79 = scmp.eq.s32.totalorder %s15, 1
      %p80 = por %p78, %p79
      %p82 = scmp.ne.s32.totalorder %s67, %s81
      %p83 = scmp.eq.s32.totalorder %s15, 0
      %p84 = por %p82, %p83
      %s85 = ssub.s32 %s9, %s16
      %p86 = scmp.eq.s32.totalorder %s85, 0
      %s88 = sadd.s32 %s87, 1
      %s89 = scalar_select %p86, %s87, %s88
      %p92 = pneg %p86
      %p93 = scmp.eq.s32.totalorder %s9, 1
      %p94 = por %p92, %p93
      %p95 = scmp.ne.s32.totalorder %s87, %s90
      %p96 = scmp.eq.s32.totalorder %s9, 0
      %p97 = por %p95, %p96
      %p98 = scmp.ne.s32.totalorder %s87, %s90
      %p99 = scmp.eq.s32.totalorder %s14, 1
      %p100 = por %p98, %p99
      %p101 = scmp.ne.s32.totalorder %s90, %s91
      %p102 = scmp.eq.s32.totalorder %s14, 0
      %p103 = por %p101, %p102
      %p104 = scmp.ne.s32.totalorder %s90, %s91
      %p105 = scmp.eq.s32.totalorder %s15, 1
      %p106 = por %p104, %p105
      %p108 = scmp.ne.s32.totalorder %s91, %s107
      %p109 = scmp.eq.s32.totalorder %s15, 0
      %p110 = por %p108, %p109
      %p111 = scmp.le.s32.totalorder 1, %s9
      %p112 = scmp.lt.s32.totalorder %s9, 3
      %p113 = pnand %p111, %p112
      %p114 = pneg %p113
      // Predicated region
      $region9: #{generator_forward.10} parent=5 // pred_check
        _
      $region10: #{generator_forward.10} parent=5 // pred_check_branch
        %116 = sbr.rel (%p113) target = $region12
      $region11: #{generator_forward.10} parent=5 // pred_region
        %s117 = ssub.s32 %s9, 1
        // Predicated region
        $region13: #{generator_forward.10} parent=11 // pred_check
          %p118 = pneg %p30
        $region14: #{generator_forward.10} parent=11 // pred_check_branch
          %120 = sbr.rel (%p118) target = $region16
        $region15: #{generator_forward.10} parent=11 // pred_region
          _
        $region16: #{generator_forward.10} parent=11 // pred_fallthru
          _
        // Predicated region
        $region17: #{generator_forward.10} parent=11 // pred_check
          %p121 = pneg %p77
        $region18: #{generator_forward.10} parent=11 // pred_check_branch
          %123 = sbr.rel (%p121) target = $region20
        $region19: #{generator_forward.10} parent=11 // pred_region
          _
        $region20: #{generator_forward.10} parent=11 // pred_fallthru
          _
      $region12: #{generator_forward.10} parent=5 // pred_fallthru
        _
      %p124 = scmp.lt.s32.totalorder %s9, 2
      // Predicated region
      $region21: #{generator_forward.10} parent=5 // pred_check
        %p125 = pneg %p124
      $region22: #{generator_forward.10} parent=5 // pred_check_branch
        %127 = sbr.rel (%p125) target = $region24
      $region23: #{generator_forward.10} parent=5 // pred_region
        // Predicated region
        $region25: #{generator_forward.10} parent=23 // pred_check
          %p128 = pneg %p50
        $region26: #{generator_forward.10} parent=23 // pred_check_branch
          %130 = sbr.rel (%p128) target = $region28
        $region27: #{generator_forward.10} parent=23 // pred_region
          %p131 = scmp.lt.s32.totalorder %s9, 1
          %s132 = scalar_select %p131, %s9, 1
          %s133 = smul.addr %s132, 8
          %s134 = smul.addr %s133, 4
          %s135 = scalar_lea.vmem %s1, %s134
        $region28: #{generator_forward.10} parent=23 // pred_fallthru
          _
      $region24: #{generator_forward.10} parent=5 // pred_fallthru
        _
      %p136 = scmp.le.s32.totalorder 1, %s9
      %p137 = scmp.lt.s32.totalorder %s9, 3
      %p138 = pnand %p136, %p137
      %p139 = pneg %p138
      // Predicated region
      $region29: #{generator_forward.10} parent=5 // pred_check
        _
      $region30: #{generator_forward.10} parent=5 // pred_check_branch
        %141 = sbr.rel (%p138) target = $region32
      $region31: #{generator_forward.10} parent=5 // pred_region
        %s142 = ssub.s32 %s9, 1
        %p143 = pneg %p30
        %p144 = pneg %p27
        %p145 = scmp.lt.s32.totalorder %s14, 1
        %s146 = scalar_select %p145, %s14, 1
        %s147 = smul.addr %s146, 8
        %s148 = smul.addr %s147, 4
        %s149 = scalar_lea.vmem %s1, %s148
        %p150 = pneg %p56
        %p151 = pneg %p53
        %p152 = pneg %p77
        %p153 = pneg %p74
        %p154 = pneg %p103
        %p155 = pneg %p100
        %s156 = sand.u32 %s90, 1
        %s157 = sand.u32 %s90, 1
        %s158 = smul.addr %s157, 24
        %s159 = scalar_lea.vmem [#allocation2], %s158
        %p160 = scmp.lt.s32.totalorder %s14, 1
        %s161 = scalar_select %p160, %s14, 1
        %s162 = smul.addr %s161, 8
        %s163 = smul.addr %s162, 4
        %s164 = scalar_lea.vmem %s1, %s163
        %s165 = smul.u32 3, %s14
        %v167 = vld [vmem:[%s164] sm:$0xff]
        %v168 = vld [vmem:[%s164 + $0x8] sm:$0xf]
        %v169 = vld [vmem:[%s164 + $0x10] sm:$0xff]
        %v170 = vld [vmem:[%s164 + $0x18] sm:$0xf]
        %v171 = vld [vmem:[%s164 + $0x8] sm:$0xff]
        %v172 = vld [vmem:[%s164 + $0x18] sm:$0xff]
        %v177 = vunpack.c.l.b16 %v167
        %v178 = vunpack.c.h.b16 %v167
        %v179 = vunpack.c.l.b16 %v168
        %v180 = vunpack.c.l.b16 %v169
        %v181 = vunpack.c.h.b16 %v169
        %v182 = vunpack.c.l.b16 %v170
        %v183 = vpack.c.b16 %v180, %v177
        %v184 = vpack.c.b16 %v181, %v178
        %v185 = vpack.c.b16 %v182, %v179
        %v191 = vunpack.c.l.b16 %v171
        %v192 = vunpack.c.h.b16 %v171
        %v193 = vunpack.c.l.b16 %v172
        %v194 = vunpack.c.h.b16 %v172
        %v195 = vpack.c.b16 %v193, %v191
        %v196 = vpack.c.b16 %v194, %v192
        %197 = vrot.lane.b32.xlu0 %v183, 127
        %v198 = vpop.permute.xlu0 %197
        %199 = vrot.lane.b32.xlu0 %v184, 127
        %v200 = vpop.permute.xlu0 %199
        %201 = vrot.lane.b32.xlu0 %v195, 127
        %v202 = vpop.permute.xlu0 %201
        %203 = vrot.lane.b32.xlu0 %v196, 127
        %v204 = vpop.permute.xlu0 %203
        %vm205 = vcmask 1039360
        %v206 = vsel %vm205, %v198, %v200
        %v207 = vsel %vm205, %v200, %v202
        %v208 = vsel %vm205, %v202, %v204
        %212 = vrot.lane.b32.xlu0 %v183, 126
        %v213 = vpop.permute.xlu0 %212
        %214 = vrot.lane.b32.xlu0 %v184, 126
        %v215 = vpop.permute.xlu0 %214
        %216 = vrot.lane.b32.xlu0 %v195, 126
        %v217 = vpop.permute.xlu0 %216
        %218 = vrot.lane.b32.xlu0 %v196, 126
        %v219 = vpop.permute.xlu0 %218
        %vm220 = vcmask 1031168
        %v221 = vsel %vm220, %v213, %v215
        %v222 = vsel %vm220, %v215, %v217
        %v223 = vsel %vm220, %v217, %v219
        %227 = vrot.lane.b32.xlu0 %v183, 110
        %v228 = vpop.permute.xlu0 %227
        %229 = vrot.lane.b32.xlu0 %v184, 110
        %v230 = vpop.permute.xlu0 %229
        %231 = vrot.lane.b32.xlu0 %v195, 110
        %v232 = vpop.permute.xlu0 %231
        %233 = vrot.lane.b32.xlu0 %v196, 110
        %v234 = vpop.permute.xlu0 %233
        %vm235 = vcmask 900096
        %v236 = vsel %vm235, %v228, %v230
        %v237 = vsel %vm235, %v230, %v232
        %v238 = vsel %vm235, %v232, %v234
        %242 = vrot.lane.b32.xlu0 %v183, 109
        %v243 = vpop.permute.xlu0 %242
        %244 = vrot.lane.b32.xlu0 %v184, 109
        %v245 = vpop.permute.xlu0 %244
        %246 = vrot.lane.b32.xlu0 %v195, 109
        %v247 = vpop.permute.xlu0 %246
        %248 = vrot.lane.b32.xlu0 %v196, 109
        %v249 = vpop.permute.xlu0 %248
        %vm250 = vcmask 891904
        %v251 = vsel %vm250, %v243, %v245
        %v252 = vsel %vm250, %v245, %v247
        %v253 = vsel %vm250, %v247, %v249
        %257 = vrot.lane.b32.xlu0 %v183, 108
        %v258 = vpop.permute.xlu0 %257
        %259 = vrot.lane.b32.xlu0 %v184, 108
        %v260 = vpop.permute.xlu0 %259
        %261 = vrot.lane.b32.xlu0 %v195, 108
        %v262 = vpop.permute.xlu0 %261
        %263 = vrot.lane.b32.xlu0 %v196, 108
        %v264 = vpop.permute.xlu0 %263
        %vm265 = vcmask 883712
        %v266 = vsel %vm265, %v258, %v260
        %v267 = vsel %vm265, %v260, %v262
        %v268 = vsel %vm265, %v262, %v264
        %272 = vrot.lane.b32.xlu0 %v183, 92
        %v273 = vpop.permute.xlu0 %272
        %274 = vrot.lane.b32.xlu0 %v184, 92
        %v275 = vpop.permute.xlu0 %274
        %276 = vrot.lane.b32.xlu0 %v195, 92
        %v277 = vpop.permute.xlu0 %276
        %278 = vrot.lane.b32.xlu0 %v196, 92
        %v279 = vpop.permute.xlu0 %278
        %vm280 = vcmask 752640
        %v281 = vsel %vm280, %v273, %v275
        %v282 = vsel %vm280, %v275, %v277
        %v283 = vsel %vm280, %v277, %v279
        %287 = vrot.lane.b32.xlu0 %v183, 91
        %v288 = vpop.permute.xlu0 %287
        %289 = vrot.lane.b32.xlu0 %v184, 91
        %v290 = vpop.permute.xlu0 %289
        %291 = vrot.lane.b32.xlu0 %v195, 91
        %v292 = vpop.permute.xlu0 %291
        %293 = vrot.lane.b32.xlu0 %v196, 91
        %v294 = vpop.permute.xlu0 %293
        %vm295 = vcmask 744448
        %v296 = vsel %vm295, %v288, %v290
        %v297 = vsel %vm295, %v290, %v292
        %v298 = vsel %vm295, %v292, %v294
        %302 = vrot.lane.b32.xlu0 %v183, 90
        %v303 = vpop.permute.xlu0 %302
        %304 = vrot.lane.b32.xlu0 %v184, 90
        %v305 = vpop.permute.xlu0 %304
        %306 = vrot.lane.b32.xlu0 %v195, 90
        %v307 = vpop.permute.xlu0 %306
        %308 = vrot.lane.b32.xlu0 %v196, 90
        %v309 = vpop.permute.xlu0 %308
        %vm310 = vcmask 736256
        %v311 = vsel %vm310, %v303, %v305
        %v312 = vsel %vm310, %v305, %v307
        %v313 = vsel %vm310, %v307, %v309
        %v317 = vld [vmem:[%s0] sm:$0xff]
        %v318 = vld [vmem:[%s0 + $0x8] sm:$0xff]
        %v319 = vld [vmem:[%s2] sm:$0xff]
        %v320 = vld [vmem:[%s2 + $0x8] sm:$0xff]
        %322 = vset.pattern.permute.xlu0 0
        %323 = vperm.xlu0 %322, %v319
        %v324 = vpop.permute.xlu0 %323
        %327 = vset.pattern.permute.xlu0 0
        %328 = vperm.xlu0 %327, %v320
        %v329 = vpop.permute.xlu0 %328
        %v333 = vunpack.c.l.b16 %v317
        %v334 = vunpack.c.h.b16 %v317
        %v335 = vunpack.c.l.b16 %v318
        %v336 = vunpack.c.h.b16 %v318
        %v337 = vpack.c.b16 %v335, %v333
        %v338 = vpack.c.b16 %v336, %v334
        %vm340 = vcmask 130048
        %v342 = vsel %vm340, %v338, 0
        %344 = vmatpush.bf16.msra.mxu0 %v296
        %345 = vmatpush.bf16.msra.mxu0 %v281
        %346 = vmatpush.bf16.msra.mxu0 %v266
        %347 = vmatpush.bf16.msra.mxu0 %v251
        %348 = vmatpush.bf16.msra.mxu0 %v236
        %349 = vmatpush.bf16.msra.mxu0 %v221
        %350 = vmatpush.bf16.msra.mxu0 %v206
        %351 = vmatpush.bf16.msra.mxu0 %v183
        %352 = vmatmul.bf16.gmra.mxu0 %v337
        %v353 = vpop.f32.mrf.mxu0
        %v354 = vadd.f32 %v324, %v353
        %v355 = vpop.f32.mrf.mxu0
        %v356 = vadd.f32 %v329, %v355
        %357 = vdwg.mxu0
        %358 = vmatpush.bf16.msra.mxu0 0
        %359 = vmatpush.bf16.msra.mxu0 0
        %360 = vmatpush.bf16.msra.mxu0 0
        %361 = vmatpush.bf16.msra.mxu0 0
        %362 = vmatpush.bf16.msra.mxu0 0
        %363 = vmatpush.bf16.msra.mxu0 0
        %364 = vmatpush.bf16.msra.mxu0 0
        %365 = vmatpush.bf16.msra.mxu0 %v311
        %366 = vmatmul.bf16.gmra.mxu0 %v342
        %v367 = vpop.f32.mrf.mxu0
        %v368 = vadd.f32 %v354, %v367
        %v369 = vpop.f32.mrf.mxu0
        %v370 = vadd.f32 %v356, %v369
        %371 = vdwg.mxu0
        %372 = vmatpush.bf16.msra.mxu0 %v297
        %373 = vmatpush.bf16.msra.mxu0 %v282
        %374 = vmatpush.bf16.msra.mxu0 %v267
        %375 = vmatpush.bf16.msra.mxu0 %v252
        %376 = vmatpush.bf16.msra.mxu0 %v237
        %377 = vmatpush.bf16.msra.mxu0 %v222
        %378 = vmatpush.bf16.msra.mxu0 %v207
        %379 = vmatpush.bf16.msra.mxu0 %v184
        %380 = vmatmul.bf16.gmra.mxu0 %v337
        %v381 = vpop.f32.mrf.mxu0
        %v382 = vadd.f32 %v324, %v381
        %v383 = vpop.f32.mrf.mxu0
        %v384 = vadd.f32 %v329, %v383
        %385 = vdwg.mxu0
        %386 = vmatpush.bf16.msra.mxu0 0
        %387 = vmatpush.bf16.msra.mxu0 0
        %388 = vmatpush.bf16.msra.mxu0 0
        %389 = vmatpush.bf16.msra.mxu0 0
        %390 = vmatpush.bf16.msra.mxu0 0
        %391 = vmatpush.bf16.msra.mxu0 0
        %392 = vmatpush.bf16.msra.mxu0 0
        %393 = vmatpush.bf16.msra.mxu0 %v312
        %394 = vmatmul.bf16.gmra.mxu0 %v342
        %v395 = vpop.f32.mrf.mxu0
        %v396 = vadd.f32 %v382, %v395
        %v397 = vpop.f32.mrf.mxu0
        %v398 = vadd.f32 %v384, %v397
        %399 = vdwg.mxu0
        %400 = vmatpush.bf16.msra.mxu0 %v298
        %401 = vmatpush.bf16.msra.mxu0 %v283
        %402 = vmatpush.bf16.msra.mxu0 %v268
        %403 = vmatpush.bf16.msra.mxu0 %v253
        %404 = vmatpush.bf16.msra.mxu0 %v238
        %405 = vmatpush.bf16.msra.mxu0 %v223
        %406 = vmatpush.bf16.msra.mxu0 %v208
        %407 = vmatpush.bf16.msra.mxu0 %v185
        %408 = vmatmul.bf16.gmra.mxu0 %v337
        %v409 = vpop.f32.mrf.mxu0
        %v410 = vadd.f32 %v324, %v409
        %v411 = vpop.f32.mrf.mxu0
        %v412 = vadd.f32 %v329, %v411
        %413 = vdwg.mxu0
        %414 = vmatpush.bf16.msra.mxu0 0
        %415 = vmatpush.bf16.msra.mxu0 0
        %416 = vmatpush.bf16.msra.mxu0 0
        %417 = vmatpush.bf16.msra.mxu0 0
        %418 = vmatpush.bf16.msra.mxu0 0
        %419 = vmatpush.bf16.msra.mxu0 0
        %420 = vmatpush.bf16.msra.mxu0 0
        %421 = vmatpush.bf16.msra.mxu0 %v313
        %422 = vmatmul.bf16.gmra.mxu0 %v342
        %v423 = vpop.f32.mrf.mxu0
        %v424 = vadd.f32 %v410, %v423
        %v425 = vpop.f32.mrf.mxu0
        %v426 = vadd.f32 %v412, %v425
        %427 = vdwg.mxu0
        %vm428 = vcmp.ge.f32.partialorder %v368, 0.0
        %vm429 = vcmp.ge.f32.partialorder %v396, 0.0
        %vm430 = vcmp.ge.f32.partialorder %v424, 0.0
        %vm431 = vcmp.ge.f32.partialorder %v370, 0.0
        %vm432 = vcmp.ge.f32.partialorder %v398, 0.0
        %vm433 = vcmp.ge.f32.partialorder %v426, 0.0
        %v434 = vmul.f32 %v368, 0.2
        %v435 = vmul.f32 %v396, 0.2
        %v436 = vmul.f32 %v424, 0.2
        %v437 = vmul.f32 %v370, 0.2
        %v438 = vmul.f32 %v398, 0.2
        %v439 = vmul.f32 %v426, 0.2
        %v440 = vsel %vm428, %v368, %v434
        %v441 = vsel %vm429, %v396, %v435
        %v442 = vsel %vm430, %v424, %v436
        %v443 = vsel %vm431, %v370, %v437
        %v444 = vsel %vm432, %v398, %v438
        %v445 = vsel %vm433, %v426, %v439
        %v446 = vpack.c.bf16 %v441, %v440
        %v447 = vpack.c.bf16 %v442, %v442
        %v448 = vpack.c.bf16 %v444, %v443
        %v449 = vpack.c.bf16 %v445, %v445
        %450 = vst [vmem:[%s159] sm:$0xff] %v446
        %451 = vst [vmem:[%s159 + $0x8] sm:$0xf] %v447
        %452 = vst [vmem:[%s159 + $0xc] sm:$0xff] %v448
        %453 = vst [vmem:[%s159 + $0x14] sm:$0xf] %v449
        %s454 = sand.u32 %s90, 1
        %s455 = sand.u32 %s90, 1
        %s456 = smul.addr %s455, 24
        %s457 = scalar_lea.vmem [#allocation2], %s456
        // Predicated region
        $region33: #{generator_forward.10} parent=31 // pred_check
          %p458 = pneg %p100
        $region34: #{generator_forward.10} parent=31 // pred_check_branch
          %460 = sbr.rel (%p458) target = $region36
        $region35: #{generator_forward.10} parent=31 // pred_region
          %s461 = smul.u32 3, %s14
          %s462 = smul.addr %s461, 4
          %s463 = scalar_lea.vmem %s3, %s462
          // Predicated region
          $region37: #{generator_forward.10} parent=35 // pred_check
            _
          $region38: #{generator_forward.10} parent=35 // pred_check_branch
            %465 = sbr.rel (0) target = $region40
          $region39: #{generator_forward.10} parent=35 // pred_region
            // Predicated region
            $region41: #{generator_forward.10} parent=39 // pred_check
              _
            $region42: #{generator_forward.10} parent=39 // pred_check_branch
              %467 = sbr.rel (0) target = $region44
            $region43: #{generator_forward.10} parent=39 // pred_region
              %s468 = scalar_lea.vmem %s457, 8 [#allocation2]
              %s469 = scalar_lea.vmem %s463, 8
              loop: start=0, step=1, limit=1
              $region45: #{generator_forward.10} parent=43 // loop_pre_header
                _
              $region46: #{generator_forward.10} parent=43 // loop_header
                %s471 = sphi 0, %s475
                %p472 = scmp.ge.s32.totalorder %s471, 1
                %s476 = sphi %s457, %s457
                %s477 = sphi %s463, %s463
              $region47: #{generator_forward.10} parent=43 // loop_header_branch
                %474 = sbr.rel (%p472) target = $region51
              $region48: #{generator_forward.10} parent=43 // loop_body
                %v478 = vld [vmem:[%s476] sm:$0xff]
                %479 = vst [vmem:[%s477] sm:$0xff] %v478
                %v480 = vld [vmem:[%s476 + $0xc] sm:$0xff]
                %481 = vst [vmem:[%s477 + $0x18] sm:$0xff] %v480
              $region49: #{generator_forward.10} parent=43 // loop_footer
                %s475 = sadd.s32 1, %s471
              $region50: #{generator_forward.10} parent=43 // loop_footer_branch
                %470 = sbr.rel target = $region46
              $region51: #{generator_forward.10} parent=43 // loop_exit
                _
              %s483 = ssub.s32 16, 1
              loop: start=0, step=1, limit=1
              $region52: #{generator_forward.10} parent=43 // loop_pre_header
                _
              $region53: #{generator_forward.10} parent=43 // loop_header
                %s485 = sphi 0, %s489
                %p486 = scmp.ge.s32.totalorder %s485, 1
                %s490 = sphi %s468, %s468
                %s491 = sphi %s469, %s469
              $region54: #{generator_forward.10} parent=43 // loop_header_branch
                %488 = sbr.rel (%p486) target = $region58
              $region55: #{generator_forward.10} parent=43 // loop_body
                %v492 = vld [vmem:[%s490] sm:%s483]
                %493 = vst [vmem:[%s491] sm:%s483] %v492
                %v494 = vld [vmem:[%s490 + $0xc] sm:%s483]
                %495 = vst [vmem:[%s491 + $0x18] sm:%s483] %v494
              $region56: #{generator_forward.10} parent=43 // loop_footer
                %s489 = sadd.s32 1, %s485
              $region57: #{generator_forward.10} parent=43 // loop_footer_branch
                %484 = sbr.rel target = $region53
              $region58: #{generator_forward.10} parent=43 // loop_exit
                _
            $region44: #{generator_forward.10} parent=39 // pred_fallthru
              _
          $region40: #{generator_forward.10} parent=35 // pred_fallthru
            _
          %496 = vnop
        $region36: #{generator_forward.10} parent=31 // pred_fallthru
          _
      $region32: #{generator_forward.10} parent=5 // pred_fallthru
        _
      %p497 = scmp.le.s32.totalorder 2, %s9
      // Predicated region
      $region59: #{generator_forward.10} parent=5 // pred_check
        %p498 = pneg %p497
      $region60: #{generator_forward.10} parent=5 // pred_check_branch
        %500 = sbr.rel (%p498) target = $region62
      $region61: #{generator_forward.10} parent=5 // pred_region
        %s501 = ssub.s32 %s9, 2
        // Predicated region
        $region63: #{generator_forward.10} parent=61 // pred_check
          %p502 = pneg %p106
        $region64: #{generator_forward.10} parent=61 // pred_check_branch
          %504 = sbr.rel (%p502) target = $region66
        $region65: #{generator_forward.10} parent=61 // pred_region
          %s505 = sand.u32 %s91, 1
          %s506 = sand.u32 %s91, 1
          %s507 = smul.addr %s506, 24
          %s508 = scalar_lea.vmem [#allocation2], %s507
        $region66: #{generator_forward.10} parent=61 // pred_fallthru
          _
      $region62: #{generator_forward.10} parent=5 // pred_fallthru
        _
    $region6: #{generator_forward.10} parent=1 // loop_footer
      %s13 = sadd.s32 1, %s9
    $region7: #{generator_forward.10} parent=1 // loop_footer_branch
      %8 = sbr.rel target = $region3
    $region8: #{generator_forward.10} parent=1 // loop_exit
      _

// kernel: generator_forward.11
$region0: #{generator_forward.11}
  #allocation0 [shape = 'u32[]', space=smem, size = 0x4, offset = 0x4, fixed_abs, tag = 'smem constant byte address 0x4 - core index']
  #allocation1 [shape = 'u32[72,128]{1,0:T(1,128)}', space=vmem, size = 0x9000, scoped, tag = 'internal scratch']
  %s0 = inlined_call_operand.vmem [shape: bf16[16,144], index: 0, kind: input, shape index: {}]
  %s1 = inlined_call_operand.vmem [shape: bf16[2,16,150], index: 1, kind: input, shape index: {}]
  %s2 = inlined_call_operand.vmem [shape: f32[16,1], index: 2, kind: input, shape index: {}]
  %s3 = inlined_call_operand.vmem [shape: bf16[16,256], index: 3, kind: output, shape index: {}]
  %s4 = sld [smem:[#allocation0]]
  $region82: #{generator_forward.11} parent=0
    _
  %s6 = ssub.s32 1, %s4
  %s7 = scalar_select 0, %s6, %s4
  $region1: #{generator_forward.11} parent=0
    #allocation2 [shape = 'u8[8192]{0}', space=vmem, size = 0x2000, scoped, tag = 'output window, operand 0']
    loop: start=0, step=1, limit=4
    $region2: #{generator_forward.11} parent=1 // loop_pre_header
      _
    $region3: #{generator_forward.11} parent=1 // loop_header
      %s9 = sphi 0, %s13
      %p10 = scmp.ge.s32.totalorder %s9, 4
      %s17 = sphi 0, %s17
      %s19 = sphi 0, %s17
      %s20 = sphi 0, %s19
      %s34 = sphi 0, %s20
      %s40 = sphi 0, %s42
      %s43 = sphi 0, %s40
      %s44 = sphi 0, %s43
      %s60 = sphi 0, %s44
      %s64 = sphi 0, %s64
      %s66 = sphi 0, %s64
      %s67 = sphi 0, %s66
      %s81 = sphi 0, %s67
      %s87 = sphi 0, %s89
      %s90 = sphi 0, %s87
      %s91 = sphi 0, %s90
      %s107 = sphi 0, %s91
    $region4: #{generator_forward.11} parent=1 // loop_header_branch
      %12 = sbr.rel (%p10) target = $region8
    $region5: #{generator_forward.11} parent=1 // loop_body
      %s14 = ssub.s32 %s9, 1
      %s15 = ssub.s32 %s9, 2
      %s16 = sadd.s32 %s9, 1
      %s18 = sadd.s32 %s17, 1
      %p21 = scmp.eq.s32.totalorder %s9, 1
      %p22 = scmp.ne.s32.totalorder %s17, %s19
      %p23 = scmp.eq.s32.totalorder %s9, 0
      %p24 = por %p22, %p23
      %p25 = scmp.ne.s32.totalorder %s17, %s19
      %p26 = scmp.eq.s32.totalorder %s14, 1
      %p27 = por %p25, %p26
      %p28 = scmp.ne.s32.totalorder %s19, %s20
      %p29 = scmp.eq.s32.totalorder %s14, 0
      %p30 = por %p28, %p29
      %p31 = scmp.ne.s32.totalorder %s19, %s20
      %p32 = scmp.eq.s32.totalorder %s15, 1
      %p33 = por %p31, %p32
      %p35 = scmp.ne.s32.totalorder %s20, %s34
      %p36 = scmp.eq.s32.totalorder %s15, 0
      %p37 = por %p35, %p36
      %s38 = ssub.s32 %s9, %s16
      %p39 = scmp.eq.s32.totalorder %s38, 0
      %s41 = sadd.s32 %s40, 1
      %s42 = scalar_select %p39, %s40, %s41
      %p45 = pneg %p39
      %p46 = scmp.eq.s32.totalorder %s9, 1
      %p47 = por %p45, %p46
      %p48 = scmp.ne.s32.totalorder %s40, %s43
      %p49 = scmp.eq.s32.totalorder %s9, 0
      %p50 = por %p48, %p49
      %p51 = scmp.ne.s32.totalorder %s40, %s43
      %p52 = scmp.eq.s32.totalorder %s14, 1
      %p53 = por %p51, %p52
      %p54 = scmp.ne.s32.totalorder %s43, %s44
      %p55 = scmp.eq.s32.totalorder %s14, 0
      %p56 = por %p54, %p55
      %p57 = scmp.ne.s32.totalorder %s43, %s44
      %p58 = scmp.eq.s32.totalorder %s15, 1
      %p59 = por %p57, %p58
      %p61 = scmp.ne.s32.totalorder %s44, %s60
      %p62 = scmp.eq.s32.totalorder %s15, 0
      %p63 = por %p61, %p62
      %s65 = sadd.s32 %s64, 1
      %p68 = scmp.eq.s32.totalorder %s9, 1
      %p69 = scmp.ne.s32.totalorder %s64, %s66
      %p70 = scmp.eq.s32.totalorder %s9, 0
      %p71 = por %p69, %p70
      %p72 = scmp.ne.s32.totalorder %s64, %s66
      %p73 = scmp.eq.s32.totalorder %s14, 1
      %p74 = por %p72, %p73
      %p75 = scmp.ne.s32.totalorder %s66, %s67
      %p76 = scmp.eq.s32.totalorder %s14, 0
      %p77 = por %p75, %p76
      %p78 = scmp.ne.s32.totalorder %s66, %s67
      %p79 = scmp.eq.s32.totalorder %s15, 1
      %p80 = por %p78, %p79
      %p82 = scmp.ne.s32.totalorder %s67, %s81
      %p83 = scmp.eq.s32.totalorder %s15, 0
      %p84 = por %p82, %p83
      %s85 = ssub.s32 %s9, %s16
      %p86 = scmp.eq.s32.totalorder %s85, 0
      %s88 = sadd.s32 %s87, 1
      %s89 = scalar_select %p86, %s87, %s88
      %p92 = pneg %p86
      %p93 = scmp.eq.s32.totalorder %s9, 1
      %p94 = por %p92, %p93
      %p95 = scmp.ne.s32.totalorder %s87, %s90
      %p96 = scmp.eq.s32.totalorder %s9, 0
      %p97 = por %p95, %p96
      %p98 = scmp.ne.s32.totalorder %s87, %s90
      %p99 = scmp.eq.s32.totalorder %s14, 1
      %p100 = por %p98, %p99
      %p101 = scmp.ne.s32.totalorder %s90, %s91
      %p102 = scmp.eq.s32.totalorder %s14, 0
      %p103 = por %p101, %p102
      %p104 = scmp.ne.s32.totalorder %s90, %s91
      %p105 = scmp.eq.s32.totalorder %s15, 1
      %p106 = por %p104, %p105
      %p108 = scmp.ne.s32.totalorder %s91, %s107
      %p109 = scmp.eq.s32.totalorder %s15, 0
      %p110 = por %p108, %p109
      %p111 = scmp.le.s32.totalorder 1, %s9
      %p112 = scmp.lt.s32.totalorder %s9, 3
      %p113 = pnand %p111, %p112
      %p114 = pneg %p113
      // Predicated region
      $region9: #{generator_forward.11} parent=5 // pred_check
        _
      $region10: #{generator_forward.11} parent=5 // pred_check_branch
        %116 = sbr.rel (%p113) target = $region12
      $region11: #{generator_forward.11} parent=5 // pred_region
        %s117 = ssub.s32 %s9, 1
        // Predicated region
        $region13: #{generator_forward.11} parent=11 // pred_check
          %p118 = pneg %p30
        $region14: #{generator_forward.11} parent=11 // pred_check_branch
          %120 = sbr.rel (%p118) target = $region16
        $region15: #{generator_forward.11} parent=11 // pred_region
          _
        $region16: #{generator_forward.11} parent=11 // pred_fallthru
          _
        // Predicated region
        $region17: #{generator_forward.11} parent=11 // pred_check
          %p121 = pneg %p77
        $region18: #{generator_forward.11} parent=11 // pred_check_branch
          %123 = sbr.rel (%p121) target = $region20
        $region19: #{generator_forward.11} parent=11 // pred_region
          _
        $region20: #{generator_forward.11} parent=11 // pred_fallthru
          _
      $region12: #{generator_forward.11} parent=5 // pred_fallthru
        _
      %p124 = scmp.lt.s32.totalorder %s9, 2
      // Predicated region
      $region21: #{generator_forward.11} parent=5 // pred_check
        %p125 = pneg %p124
      $region22: #{generator_forward.11} parent=5 // pred_check_branch
        %127 = sbr.rel (%p125) target = $region24
      $region23: #{generator_forward.11} parent=5 // pred_region
        // Predicated region
        $region25: #{generator_forward.11} parent=23 // pred_check
          %p128 = pneg %p50
        $region26: #{generator_forward.11} parent=23 // pred_check_branch
          %130 = sbr.rel (%p128) target = $region28
        $region27: #{generator_forward.11} parent=23 // pred_region
          %p131 = scmp.lt.s32.totalorder %s9, 1
          %s132 = scalar_select %p131, %s9, 1
          %s133 = smul.addr %s132, 4
          %s134 = smul.addr %s133, 4
          %s135 = scalar_lea.vmem %s1, %s134
        $region28: #{generator_forward.11} parent=23 // pred_fallthru
          _
      $region24: #{generator_forward.11} parent=5 // pred_fallthru
        _
      %p136 = scmp.le.s32.totalorder 1, %s9
      %p137 = scmp.lt.s32.totalorder %s9, 3
      %p138 = pnand %p136, %p137
      %p139 = pneg %p138
      // Predicated region
      $region29: #{generator_forward.11} parent=5 // pred_check
        _
      $region30: #{generator_forward.11} parent=5 // pred_check_branch
        %141 = sbr.rel (%p138) target = $region32
      $region31: #{generator_forward.11} parent=5 // pred_region
        %s142 = ssub.s32 %s9, 1
        %p143 = pneg %p30
        %p144 = pneg %p27
        %p145 = scmp.lt.s32.totalorder %s14, 1
        %s146 = scalar_select %p145, %s14, 1
        %s147 = smul.addr %s146, 4
        %s148 = smul.addr %s147, 4
        %s149 = scalar_lea.vmem %s1, %s148
        %p150 = pneg %p56
        %p151 = pneg %p53
        %p152 = pneg %p77
        %p153 = pneg %p74
        %p154 = pneg %p103
        %p155 = pneg %p100
        %s156 = sand.u32 %s90, 1
        %s157 = sand.u32 %s90, 1
        %s158 = smul.addr %s157, 8
        %s159 = scalar_lea.vmem [#allocation2], %s158
        %p160 = scmp.lt.s32.totalorder %s14, 1
        %s161 = scalar_select %p160, %s14, 1
        %s162 = smul.addr %s161, 4
        %s163 = smul.addr %s162, 4
        %s164 = scalar_lea.vmem %s1, %s163
        %v166 = vld [vmem:[%s164] sm:$0xf]
        %v167 = vld [vmem:[%s164 + $0x8] sm:$0xf]
        %v168 = vld [vmem:[%s164] sm:$0xff]
        %v169 = vld [vmem:[%s164 + $0x8] sm:$0xff]
        %v172 = vunpack.c.l.b16 %v166
        %v173 = vunpack.c.l.b16 %v167
        %v174 = vpack.c.b16 %v173, %v172
        %v178 = vunpack.c.l.b16 %v168
        %v179 = vunpack.c.h.b16 %v168
        %v180 = vunpack.c.l.b16 %v169
        %v181 = vunpack.c.h.b16 %v169
        %v182 = vpack.c.b16 %v180, %v178
        %v183 = vpack.c.b16 %v181, %v179
        %184 = vrot.lane.b32.xlu0 %v182, 127
        %v185 = vpop.permute.xlu0 %184
        %186 = vrot.lane.b32.xlu0 %v183, 127
        %v187 = vpop.permute.xlu0 %186
        %vm188 = vcmask 1039360
        %v189 = vsel %vm188, %v185, %v187
        %191 = vrot.lane.b32.xlu0 %v182, 126
        %v192 = vpop.permute.xlu0 %191
        %193 = vrot.lane.b32.xlu0 %v183, 126
        %v194 = vpop.permute.xlu0 %193
        %vm195 = vcmask 1031168
        %v196 = vsel %vm195, %v192, %v194
        %198 = vrot.lane.b32.xlu0 %v182, 118
        %v199 = vpop.permute.xlu0 %198
        %200 = vrot.lane.b32.xlu0 %v183, 118
        %v201 = vpop.permute.xlu0 %200
        %vm202 = vcmask 965632
        %v203 = vsel %vm202, %v199, %v201
        %205 = vrot.lane.b32.xlu0 %v182, 117
        %v206 = vpop.permute.xlu0 %205
        %207 = vrot.lane.b32.xlu0 %v183, 117
        %v208 = vpop.permute.xlu0 %207
        %vm209 = vcmask 957440
        %v210 = vsel %vm209, %v206, %v208
        %212 = vrot.lane.b32.xlu0 %v182, 116
        %v213 = vpop.permute.xlu0 %212
        %214 = vrot.lane.b32.xlu0 %v183, 116
        %v215 = vpop.permute.xlu0 %214
        %vm216 = vcmask 949248
        %v217 = vsel %vm216, %v213, %v215
        %219 = vrot.lane.b32.xlu0 %v182, 108
        %v220 = vpop.permute.xlu0 %219
        %221 = vrot.lane.b32.xlu0 %v183, 108
        %v222 = vpop.permute.xlu0 %221
        %vm223 = vcmask 883712
        %v224 = vsel %vm223, %v220, %v222
        %226 = vrot.lane.b32.xlu0 %v182, 107
        %v227 = vpop.permute.xlu0 %226
        %228 = vrot.lane.b32.xlu0 %v183, 107
        %v229 = vpop.permute.xlu0 %228
        %vm230 = vcmask 875520
        %v231 = vsel %vm230, %v227, %v229
        %233 = vrot.lane.b32.xlu0 %v182, 106
        %v234 = vpop.permute.xlu0 %233
        %235 = vrot.lane.b32.xlu0 %v183, 106
        %v236 = vpop.permute.xlu0 %235
        %vm237 = vcmask 867328
        %v238 = vsel %vm237, %v234, %v236
        %v240 = vld [vmem:[%s0] sm:$0xff]
        %v241 = vld [vmem:[%s0 + $0x8] sm:$0xff]
        %v242 = vld [vmem:[%s2] sm:$0xff]
        %v243 = vld [vmem:[%s2 + $0x8] sm:$0xff]
        %245 = vset.pattern.permute.xlu0 0
        %246 = vperm.xlu0 %245, %v242
        %v247 = vpop.permute.xlu0 %246
        %250 = vset.pattern.permute.xlu0 0
        %251 = vperm.xlu0 %250, %v243
        %v252 = vpop.permute.xlu0 %251
        %v256 = vunpack.c.l.b16 %v240
        %v257 = vunpack.c.h.b16 %v240
        %v258 = vunpack.c.l.b16 %v241
        %v259 = vunpack.c.h.b16 %v241
        %v260 = vpack.c.b16 %v258, %v256
        %v261 = vpack.c.b16 %v259, %v257
        %vm263 = vcmask 130048
        %v265 = vsel %vm263, %v261, 0
        %267 = vmatpush.bf16.msra.mxu0 %v231
        %268 = vmatpush.bf16.msra.mxu0 %v224
        %269 = vmatpush.bf16.msra.mxu0 %v217
        %270 = vmatpush.bf16.msra.mxu0 %v210
        %271 = vmatpush.bf16.msra.mxu0 %v203
        %272 = vmatpush.bf16.msra.mxu0 %v196
        %273 = vmatpush.bf16.msra.mxu0 %v189
        %274 = vmatpush.bf16.msra.mxu0 %v174
        %275 = vmatmul.bf16.gmra.mxu0 %v260
        %v276 = vpop.f32.mrf.mxu0
        %v277 = vadd.f32 %v247, %v276
        %v278 = vpop.f32.mrf.mxu0
        %v279 = vadd.f32 %v252, %v278
        %280 = vdwg.mxu0
        %281 = vmatpush.bf16.msra.mxu0 0
        %282 = vmatpush.bf16.msra.mxu0 0
        %283 = vmatpush.bf16.msra.mxu0 0
        %284 = vmatpush.bf16.msra.mxu0 0
        %285 = vmatpush.bf16.msra.mxu0 0
        %286 = vmatpush.bf16.msra.mxu0 0
        %287 = vmatpush.bf16.msra.mxu0 0
        %288 = vmatpush.bf16.msra.mxu0 %v238
        %289 = vmatmul.bf16.gmra.mxu0 %v265
        %v290 = vpop.f32.mrf.mxu0
        %v291 = vadd.f32 %v277, %v290
        %v292 = vpop.f32.mrf.mxu0
        %v293 = vadd.f32 %v279, %v292
        %294 = vdwg.mxu0
        %vm295 = vcmp.ge.f32.partialorder %v291, 0.0
        %vm296 = vcmp.ge.f32.partialorder %v293, 0.0
        %v297 = vmul.f32 %v291, 0.2
        %v298 = vmul.f32 %v293, 0.2
        %v299 = vsel %vm295, %v291, %v297
        %v300 = vsel %vm296, %v293, %v298
        %v301 = vpack.c.bf16 %v299, %v299
        %v302 = vpack.c.bf16 %v300, %v300
        %303 = vst [vmem:[%s159] sm:$0xf] %v301
        %304 = vst [vmem:[%s159 + $0x4] sm:$0xf] %v302
        %s305 = sand.u32 %s90, 1
        %s306 = sand.u32 %s90, 1
        %s307 = smul.addr %s306, 8
        %s308 = scalar_lea.vmem [#allocation2], %s307
        // Predicated region
        $region33: #{generator_forward.11} parent=31 // pred_check
          %p309 = pneg %p100
        $region34: #{generator_forward.11} parent=31 // pred_check_branch
          %311 = sbr.rel (%p309) target = $region36
        $region35: #{generator_forward.11} parent=31 // pred_region
          %s312 = smul.addr %s14, 4
          %s313 = scalar_lea.vmem %s3, %s312
          // Predicated region
          $region37: #{generator_forward.11} parent=35 // pred_check
            _
          $region38: #{generator_forward.11} parent=35 // pred_check_branch
            %315 = sbr.rel (0) target = $region40
          $region39: #{generator_forward.11} parent=35 // pred_region
            // Predicated region
            $region41: #{generator_forward.11} parent=39 // pred_check
              _
            $region42: #{generator_forward.11} parent=39 // pred_check_branch
              %317 = sbr.rel target = $region44
            $region43: #{generator_forward.11} parent=39 // pred_region
              // Predicated region
              $region56: #{generator_forward.11} parent=43 // pred_check
                _
              $region57: #{generator_forward.11} parent=43 // pred_check_branch
                %335 = sbr.rel (0) target = $region59
              $region58: #{generator_forward.11} parent=43 // pred_region
                loop: start=0, step=1, limit=1
                $region60: #{generator_forward.11} parent=58 // loop_pre_header
                  _
                $region61: #{generator_forward.11} parent=58 // loop_header
                  %s337 = sphi 0, %s341
                  %p338 = scmp.ge.s32.totalorder %s337, 1
                  %s342 = sphi %s308, %s308
                  %s343 = sphi %s313, %s313
                $region62: #{generator_forward.11} parent=58 // loop_header_branch
                  %340 = sbr.rel (%p338) target = $region66
                $region63: #{generator_forward.11} parent=58 // loop_body
                  _
                $region64: #{generator_forward.11} parent=58 // loop_footer
                  %s341 = sadd.s32 1, %s337
                $region65: #{generator_forward.11} parent=58 // loop_footer_branch
                  %336 = sbr.rel target = $region61
                $region66: #{generator_forward.11} parent=58 // loop_exit
                  _
                %s345 = ssub.s32 16, 1
                loop: start=0, step=1, limit=1
                $region67: #{generator_forward.11} parent=58 // loop_pre_header
                  _
                $region68: #{generator_forward.11} parent=58 // loop_header
                  %s347 = sphi 0, %s351
                  %p348 = scmp.ge.s32.totalorder %s347, 1
                  %s352 = sphi %s308, %s308
                  %s353 = sphi %s313, %s313
                $region69: #{generator_forward.11} parent=58 // loop_header_branch
                  %350 = sbr.rel (%p348) target = $region73
                $region70: #{generator_forward.11} parent=58 // loop_body
                  %v354 = vld [vmem:[%s352] sm:%s345]
                  %355 = vst [vmem:[%s353] sm:%s345] %v354
                  %v356 = vld [vmem:[%s352 + $0x4] sm:%s345]
                  %357 = vst [vmem:[%s353 + $0x8] sm:%s345] %v356
                $region71: #{generator_forward.11} parent=58 // loop_footer
                  %s351 = sadd.s32 1, %s347
                $region72: #{generator_forward.11} parent=58 // loop_footer_branch
                  %346 = sbr.rel target = $region68
                $region73: #{generator_forward.11} parent=58 // loop_exit
                  _
              $region59: #{generator_forward.11} parent=43 // pred_fallthru
                _
            $region44: #{generator_forward.11} parent=39 // pred_fallthru
              _
            // Predicated region
            $region45: #{generator_forward.11} parent=39 // pred_check
              _
            $region46: #{generator_forward.11} parent=39 // pred_check_branch
              %319 = sbr.rel (0) target = $region48
            $region47: #{generator_forward.11} parent=39 // pred_region
              %s321 = ssub.s32 16, 1
              loop: start=0, step=1, limit=1
              $region49: #{generator_forward.11} parent=47 // loop_pre_header
                _
              $region50: #{generator_forward.11} parent=47 // loop_header
                %s323 = sphi 0, %s327
                %p324 = scmp.ge.s32.totalorder %s323, 1
                %s328 = sphi %s308, %s308
                %s329 = sphi %s313, %s313
              $region51: #{generator_forward.11} parent=47 // loop_header_branch
                %326 = sbr.rel (%p324) target = $region55
              $region52: #{generator_forward.11} parent=47 // loop_body
                %v330 = vld [vmem:[%s328] sm:%s321]
                %331 = vst [vmem:[%s329] sm:%s321] %v330
                %v332 = vld [vmem:[%s328 + $0x4] sm:%s321]
                %333 = vst [vmem:[%s329 + $0x8] sm:%s321] %v332
              $region53: #{generator_forward.11} parent=47 // loop_footer
                %s327 = sadd.s32 1, %s323
              $region54: #{generator_forward.11} parent=47 // loop_footer_branch
                %322 = sbr.rel target = $region50
              $region55: #{generator_forward.11} parent=47 // loop_exit
                _
            $region48: #{generator_forward.11} parent=39 // pred_fallthru
              _
          $region40: #{generator_forward.11} parent=35 // pred_fallthru
            _
          %358 = vnop
        $region36: #{generator_forward.11} parent=31 // pred_fallthru
          _
      $region32: #{generator_forward.11} parent=5 // pred_fallthru
        _
      %p359 = scmp.le.s32.totalorder 2, %s9
      // Predicated region
      $region74: #{generator_forward.11} parent=5 // pred_check
        %p360 = pneg %p359
      $region75: #{generator_forward.11} parent=5 // pred_check_branch
        %362 = sbr.rel (%p360) target = $region77
      $region76: #{generator_forward.11} parent=5 // pred_region
        %s363 = ssub.s32 %s9, 2
        // Predicated region
        $region78: #{generator_forward.11} parent=76 // pred_check
          %p364 = pneg %p106
        $region79: #{generator_forward.11} parent=76 // pred_check_branch
          %366 = sbr.rel (%p364) target = $region81
        $region80: #{generator_forward.11} parent=76 // pred_region
          %s367 = sand.u32 %s91, 1
          %s368 = sand.u32 %s91, 1
          %s369 = smul.addr %s368, 8
          %s370 = scalar_lea.vmem [#allocation2], %s369
        $region81: #{generator_forward.11} parent=76 // pred_fallthru
          _
      $region77: #{generator_forward.11} parent=5 // pred_fallthru
        _
    $region6: #{generator_forward.11} parent=1 // loop_footer
      %s13 = sadd.s32 1, %s9
    $region7: #{generator_forward.11} parent=1 // loop_footer_branch
      %8 = sbr.rel target = $region3
    $region8: #{generator_forward.11} parent=1 // loop_exit
      _

// kernel: generator_forward.12
$region0: #{generator_forward.12}
  #allocation0 [shape = 'u32[]', space=smem, size = 0x4, offset = 0x4, fixed_abs, tag = 'smem constant byte address 0x4 - core index']
  #allocation1 [shape = 'u32[72,128]{1,0:T(1,128)}', space=vmem, size = 0x9000, scoped, tag = 'internal scratch']
  %s0 = inlined_call_operand.vmem [shape: bf16[32,144], index: 0, kind: input, shape index: {}]
  %s1 = inlined_call_operand.vmem [shape: bf16[1,16,142], index: 1, kind: input, shape index: {}]
  %s2 = inlined_call_operand.vmem [shape: f32[32,1], index: 2, kind: input, shape index: {}]
  %s3 = inlined_call_operand.vmem [shape: bf16[32,128], index: 3, kind: output, shape index: {}]
  %s4 = sld [smem:[#allocation0]]
  $region22: #{generator_forward.12} parent=0
    _
  %s6 = ssub.s32 1, %s4
  %s7 = scalar_select 0, %s6, %s4
  // Predicated region
  $region2: #{generator_forward.12} parent=0 // pred_check
    _
  $region3: #{generator_forward.12} parent=0 // pred_check_branch
    %9 = sbr.rel (0) target = $region5
  $region4: #{generator_forward.12} parent=0 // pred_region
    _
  $region5: #{generator_forward.12} parent=0 // pred_fallthru
    _
  // Predicated region
  $region6: #{generator_forward.12} parent=0 // pred_check
    _
  $region7: #{generator_forward.12} parent=0 // pred_check_branch
    %11 = sbr.rel (0) target = $region9
  $region8: #{generator_forward.12} parent=0 // pred_region
    _
  $region9: #{generator_forward.12} parent=0 // pred_fallthru
    _
  // Predicated region
  $region10: #{generator_forward.12} parent=0 // pred_check
    _
  $region11: #{generator_forward.12} parent=0 // pred_check_branch
    %13 = sbr.rel (0) target = $region13
  $region12: #{generator_forward.12} parent=0 // pred_region
    _
  $region13: #{generator_forward.12} parent=0 // pred_fallthru
    _
  %v15 = vld [vmem:[%s1] sm:$0xf]
  %v16 = vld [vmem:[%s1 + $0x8] sm:$0xf]
  %v17 = vld [vmem:[%s1] sm:$0xff]
  %v18 = vld [vmem:[%s1 + $0x8] sm:$0xff]
  %v21 = vunpack.c.l.b16 %v15
  %v22 = vunpack.c.l.b16 %v16
  %v23 = vpack.c.b16 %v22, %v21
  %v27 = vunpack.c.l.b16 %v17
  %v28 = vunpack.c.h.b16 %v17
  %v29 = vunpack.c.l.b16 %v18
  %v30 = vunpack.c.h.b16 %v18
  %v31 = vpack.c.b16 %v29, %v27
  %v32 = vpack.c.b16 %v30, %v28
  %33 = vrot.lane.b32.xlu0 %v31, 127
  %v34 = vpop.permute.xlu0 %33
  %35 = vrot.lane.b32.xlu0 %v32, 127
  %v36 = vpop.permute.xlu0 %35
  %vm37 = vcmask 1039360
  %v38 = vsel %vm37, %v34, %v36
  %40 = vrot.lane.b32.xlu0 %v31, 126
  %v41 = vpop.permute.xlu0 %40
  %42 = vrot.lane.b32.xlu0 %v32, 126
  %v43 = vpop.permute.xlu0 %42
  %vm44 = vcmask 1031168
  %v45 = vsel %vm44, %v41, %v43
  %47 = vrot.lane.b32.xlu0 %v31, 122
  %v48 = vpop.permute.xlu0 %47
  %49 = vrot.lane.b32.xlu0 %v32, 122
  %v50 = vpop.permute.xlu0 %49
  %vm51 = vcmask 998400
  %v52 = vsel %vm51, %v48, %v50
  %54 = vrot.lane.b32.xlu0 %v31, 121
  %v55 = vpop.permute.xlu0 %54
  %56 = vrot.lane.b32.xlu0 %v32, 121
  %v57 = vpop.permute.xlu0 %56
  %vm58 = vcmask 990208
  %v59 = vsel %vm58, %v55, %v57
  %61 = vrot.lane.b32.xlu0 %v31, 120
  %v62 = vpop.permute.xlu0 %61
  %63 = vrot.lane.b32.xlu0 %v32, 120
  %v64 = vpop.permute.xlu0 %63
  %vm65 = vcmask 982016
  %v66 = vsel %vm65, %v62, %v64
  %68 = vrot.lane.b32.xlu0 %v31, 116
  %v69 = vpop.permute.xlu0 %68
  %70 = vrot.lane.b32.xlu0 %v32, 116
  %v71 = vpop.permute.xlu0 %70
  %vm72 = vcmask 949248
  %v73 = vsel %vm72, %v69, %v71
  %75 = vrot.lane.b32.xlu0 %v31, 115
  %v76 = vpop.permute.xlu0 %75
  %77 = vrot.lane.b32.xlu0 %v32, 115
  %v78 = vpop.permute.xlu0 %77
  %vm79 = vcmask 941056
  %v80 = vsel %vm79, %v76, %v78
  %82 = vrot.lane.b32.xlu0 %v31, 114
  %v83 = vpop.permute.xlu0 %82
  %84 = vrot.lane.b32.xlu0 %v32, 114
  %v85 = vpop.permute.xlu0 %84
  %vm86 = vcmask 932864
  %v87 = vsel %vm86, %v83, %v85
  %v89 = vld [vmem:[%s0] sm:$0xff]
  %v90 = vld [vmem:[%s0 + $0x8] sm:$0xff]
  %v91 = vld [vmem:[%s0 + $0x10] sm:$0xff]
  %v92 = vld [vmem:[%s0 + $0x18] sm:$0xff]
  %v93 = vld [vmem:[%s2] sm:$0xff]
  %v94 = vld [vmem:[%s2 + $0x8] sm:$0xff]
  %v95 = vld [vmem:[%s2 + $0x10] sm:$0xff]
  %v96 = vld [vmem:[%s2 + $0x18] sm:$0xff]
  %98 = vset.pattern.permute.xlu0 0
  %99 = vperm.xlu0 %98, %v93
  %v100 = vpop.permute.xlu0 %99
  %103 = vset.pattern.permute.xlu0 0
  %104 = vperm.xlu0 %103, %v94
  %v105 = vpop.permute.xlu0 %104
  %108 = vset.pattern.permute.xlu0 0
  %109 = vperm.xlu0 %108, %v95
  %v110 = vpop.permute.xlu0 %109
  %113 = vset.pattern.permute.xlu0 0
  %114 = vperm.xlu0 %113, %v96
  %v115 = vpop.permute.xlu0 %114
  %v121 = vunpack.c.l.b16 %v89
  %v122 = vunpack.c.h.b16 %v89
  %v123 = vunpack.c.l.b16 %v90
  %v124 = vunpack.c.h.b16 %v90
  %v125 = vunpack.c.l.b16 %v91
  %v126 = vunpack.c.h.b16 %v91
  %v127 = vunpack.c.l.b16 %v92
  %v128 = vunpack.c.h.b16 %v92
  %v129 = vpack.c.b16 %v123, %v121
  %v130 = vpack.c.b16 %v124, %v122
  %v131 = vpack.c.b16 %v127, %v125
  %v132 = vpack.c.b16 %v128, %v126
  %vm135 = vcmask 130048
  %v137 = vsel %vm135, %v130, 0
  %v140 = vsel %vm135, %v132, 0
  %142 = vmatpush.bf16.msra.mxu0 %v80
  %143 = vmatpush.bf16.msra.mxu0 %v73
  %144 = vmatpush.bf16.msra.mxu0 %v66
  %145 = vmatpush.bf16.msra.mxu0 %v59
  %146 = vmatpush.bf16.msra.mxu0 %v52
  %147 = vmatpush.bf16.msra.mxu0 %v45
  %148 = vmatpush.bf16.msra.mxu0 %v38
  %149 = vmatpush.bf16.msra.mxu0 %v23
  %150 = vmatmul.bf16.gmra.mxu0 %v129
  %v151 = vpop.f32.mrf.mxu0
  %v152 = vadd.f32 %v100, %v151
  %v153 = vpop.f32.mrf.mxu0
  %v154 = vadd.f32 %v105, %v153
  %155 = vmatmul.bf16.gmra.mxu0 %v131
  %v156 = vpop.f32.mrf.mxu0
  %v157 = vadd.f32 %v110, %v156
  %v158 = vpop.f32.mrf.mxu0
  %v159 = vadd.f32 %v115, %v158
  %160 = vdwg.mxu0
  %161 = vmatpush.bf16.msra.mxu0 0
  %162 = vmatpush.bf16.msra.mxu0 0
  %163 = vmatpush.bf16.msra.mxu0 0
  %164 = vmatpush.bf16.msra.mxu0 0
  %165 = vmatpush.bf16.msra.mxu0 0
  %166 = vmatpush.bf16.msra.mxu0 0
  %167 = vmatpush.bf16.msra.mxu0 0
  %168 = vmatpush.bf16.msra.mxu0 %v87
  %169 = vmatmul.bf16.gmra.mxu0 %v137
  %v170 = vpop.f32.mrf.mxu0
  %v171 = vadd.f32 %v152, %v170
  %v172 = vpop.f32.mrf.mxu0
  %v173 = vadd.f32 %v154, %v172
  %174 = vmatmul.bf16.gmra.mxu0 %v140
  %v175 = vpop.f32.mrf.mxu0
  %v176 = vadd.f32 %v157, %v175
  %v177 = vpop.f32.mrf.mxu0
  %v178 = vadd.f32 %v159, %v177
  %179 = vdwg.mxu0
  %vm180 = vcmp.ge.f32.partialorder %v171, 0.0
  %vm181 = vcmp.ge.f32.partialorder %v173, 0.0
  %vm182 = vcmp.ge.f32.partialorder %v176, 0.0
  %vm183 = vcmp.ge.f32.partialorder %v178, 0.0
  %v184 = vmul.f32 %v171, 0.2
  %v185 = vmul.f32 %v173, 0.2
  %v186 = vmul.f32 %v176, 0.2
  %v187 = vmul.f32 %v178, 0.2
  %v188 = vsel %vm180, %v171, %v184
  %v189 = vsel %vm181, %v173, %v185
  %v190 = vsel %vm182, %v176, %v186
  %v191 = vsel %vm183, %v178, %v187
  %v192 = vpack.c.bf16 %v188, %v188
  %v193 = vpack.c.bf16 %v189, %v189
  %v194 = vpack.c.bf16 %v190, %v190
  %v195 = vpack.c.bf16 %v191, %v191
  %196 = vst [vmem:[%s3] sm:$0xf] %v192
  %197 = vst [vmem:[%s3 + $0x4] sm:$0xf] %v193
  %198 = vst [vmem:[%s3 + $0x8] sm:$0xf] %v194
  %199 = vst [vmem:[%s3 + $0xc] sm:$0xf] %v195
  // Predicated region
  $region14: #{generator_forward.12} parent=0 // pred_check
    _
  $region15: #{generator_forward.12} parent=0 // pred_check_branch
    %201 = sbr.rel (0) target = $region17
  $region16: #{generator_forward.12} parent=0 // pred_region
    _
  $region17: #{generator_forward.12} parent=0 // pred_fallthru
    _
  // Predicated region
  $region18: #{generator_forward.12} parent=0 // pred_check
    _
  $region19: #{generator_forward.12} parent=0 // pred_check_branch
    %203 = sbr.rel (0) target = $region21
  $region20: #{generator_forward.12} parent=0 // pred_region
    _
  $region21: #{generator_forward.12} parent=0 // pred_fallthru
    _

// kernel: generator_forward.13
$region0: #{generator_forward.13}
  #allocation0 [shape = 'u32[]', space=smem, size = 0x4, offset = 0x4, fixed_abs, tag = 'smem constant byte address 0x4 - core index']
  #allocation1 [shape = 'u32[72,128]{1,0:T(1,128)}', space=vmem, size = 0x9000, scoped, tag = 'internal scratch']
  %s0 = inlined_call_operand.vmem [shape: bf16[2,128], index: 0, kind: input, shape index: {}]
  %s1 = inlined_call_operand.vmem [shape: bf16[128,256], index: 1, kind: input, shape index: {}]
  %s2 = inlined_call_operand.vmem [shape: f32[1,256], index: 2, kind: input, shape index: {}]
  %s3 = inlined_call_operand.vmem [shape: f32[2,256], index: 3, kind: output, shape index: {}]
  %s4 = sld [smem:[#allocation0]]
  $region86: #{generator_forward.13} parent=0
    _
  %s6 = ssub.s32 1, %s4
  %s7 = scalar_select 0, %s6, %s4
  $region1: #{generator_forward.13} parent=0
    #allocation2 [shape = 'u8[65536]{0}', space=vmem, size = 0x10000, scoped, tag = 'input window, operand 1']
    loop: start=0, step=1, limit=4
    $region2: #{generator_forward.13} parent=1 // loop_pre_header
      _
    $region3: #{generator_forward.13} parent=1 // loop_header
      %s9 = sphi 0, %s13
      %p10 = scmp.ge.s32.totalorder %s9, 4
      %s16 = sphi 0, %s28
      %s17 = sphi 0, %s24
      %s18 = sphi 0, %s16
      %s19 = sphi 0, %s17
      %s20 = sphi 0, %s18
      %s21 = sphi 0, %s19
      %s31 = sphi 0, %s33
      %s34 = sphi 0, %s31
      %s35 = sphi 0, %s34
      %s51 = sphi 0, %s35
      %s57 = sphi 0, %s59
      %s60 = sphi 0, %s57
      %s61 = sphi 0, %s60
      %s77 = sphi 0, %s61
      %s83 = sphi 0, %s85
      %s86 = sphi 0, %s83
      %s87 = sphi 0, %s86
      %s103 = sphi 0, %s87
      %s111 = sphi 0, %s113
      %s114 = sphi 0, %s111
      %s115 = sphi 0, %s114
      %s131 = sphi 0, %s115
    $region4: #{generator_forward.13} parent=1 // loop_header_branch
      %12 = sbr.rel (%p10) target = $region8
    $region5: #{generator_forward.13} parent=1 // loop_body
      %s14 = ssub.s32 %s9, 1
      %s15 = ssub.s32 %s9, 2
      %s22 = sadd.s32 1, %s17
      %p23 = scmp.ge.s32.totalorder %s22, 2
      %s24 = scalar_select %p23, 0, %s22
      %s25 = sadd.s32 1, %s16
      %s26 = scalar_select %p23, %s25, %s16
      %p27 = scmp.ge.s32.totalorder %s26, 1
      %s28 = scalar_select %p27, 0, %s26
      %s29 = ssub.s32 %s16, %s28
      %p30 = scmp.eq.s32.totalorder %s29, 0
      %s32 = sadd.s32 %s31, 1
      %s33 = scalar_select %p30, %s31, %s32
      %p36 = pneg %p30
      %p37 = scmp.eq.s32.totalorder %s9, 1
      %p38 = por %p36, %p37
      %p39 = scmp.ne.s32.totalorder %s31, %s34
      %p40 = scmp.eq.s32.totalorder %s9, 0
      %p41 = por %p39, %p40
      %p42 = scmp.ne.s32.totalorder %s31, %s34
      %p43 = scmp.eq.s32.totalorder %s14, 1
      %p44 = por %p42, %p43
      %p45 = scmp.ne.s32.totalorder %s34, %s35
      %p46 = scmp.eq.s32.totalorder %s14, 0
      %p47 = por %p45, %p46
      %p48 = scmp.ne.s32.totalorder %s34, %s35
      %p49 = scmp.eq.s32.totalorder %s15, 1
      %p50 = por %p48, %p49
      %p52 = scmp.ne.s32.totalorder %s35, %s51
      %p53 = scmp.eq.s32.totalorder %s15, 0
      %p54 = por %p52, %p53
      %s55 = ssub.s32 %s17, %s24
      %p56 = scmp.eq.s32.totalorder %s55, 0
      %s58 = sadd.s32 %s57, 1
      %s59 = scalar_select %p56, %s57, %s58
      %p62 = pneg %p56
      %p63 = scmp.eq.s32.totalorder %s9, 1
      %p64 = por %p62, %p63
      %p65 = scmp.ne.s32.totalorder %s57, %s60
      %p66 = scmp.eq.s32.totalorder %s9, 0
      %p67 = por %p65, %p66
      %p68 = scmp.ne.s32.totalorder %s57, %s60
      %p69 = scmp.eq.s32.totalorder %s14, 1
      %p70 = por %p68, %p69
      %p71 = scmp.ne.s32.totalorder %s60, %s61
      %p72 = scmp.eq.s32.totalorder %s14, 0
      %p73 = por %p71, %p72
      %p74 = scmp.ne.s32.totalorder %s60, %s61
      %p75 = scmp.eq.s32.totalorder %s15, 1
      %p76 = por %p74, %p75
      %p78 = scmp.ne.s32.totalorder %s61, %s77
      %p79 = scmp.eq.s32.totalorder %s15, 0
      %p80 = por %p78, %p79
      %s81 = ssub.s32 %s17, %s24
      %p82 = scmp.eq.s32.totalorder %s81, 0
      %s84 = sadd.s32 %s83, 1
      %s85 = scalar_select %p82, %s83, %s84
      %p88 = pneg %p82
      %p89 = scmp.eq.s32.totalorder %s9, 1
      %p90 = por %p88, %p89
      %p91 = scmp.ne.s32.totalorder %s83, %s86
      %p92 = scmp.eq.s32.totalorder %s9, 0
      %p93 = por %p91, %p92
      %p94 = scmp.ne.s32.totalorder %s83, %s86
      %p95 = scmp.eq.s32.totalorder %s14, 1
      %p96 = por %p94, %p95
      %p97 = scmp.ne.s32.totalorder %s86, %s87
      %p98 = scmp.eq.s32.totalorder %s14, 0
      %p99 = por %p97, %p98
      %p100 = scmp.ne.s32.totalorder %s86, %s87
      %p101 = scmp.eq.s32.totalorder %s15, 1
      %p102 = por %p100, %p101
      %p104 = scmp.ne.s32.totalorder %s87, %s103
      %p105 = scmp.eq.s32.totalorder %s15, 0
      %p106 = por %p104, %p105
      %s107 = ssub.s32 %s16, %s28
      %s108 = ssub.s32 %s17, %s24
      %s109 = sor.u32 %s107, %s108
      %p110 = scmp.eq.s32.totalorder %s109, 0
      %s112 = sadd.s32 %s111, 1
      %s113 = scalar_select %p110, %s111, %s112
      %p116 = pneg %p110
      %p117 = scmp.eq.s32.totalorder %s9, 1
      %p118 = por %p116, %p117
      %p119 = scmp.ne.s32.totalorder %s111, %s114
      %p120 = scmp.eq.s32.totalorder %s9, 0
      %p121 = por %p119, %p120
      %p122 = scmp.ne.s32.totalorder %s111, %s114
      %p123 = scmp.eq.s32.totalorder %s14, 1
      %p124 = por %p122, %p123
      %p125 = scmp.ne.s32.totalorder %s114, %s115
      %p126 = scmp.eq.s32.totalorder %s14, 0
      %p127 = por %p125, %p126
      %p128 = scmp.ne.s32.totalorder %s114, %s115
      %p129 = scmp.eq.s32.totalorder %s15, 1
      %p130 = por %p128, %p129
      %p132 = scmp.ne.s32.totalorder %s115, %s131
      %p133 = scmp.eq.s32.totalorder %s15, 0
      %p134 = por %p132, %p133
      %p135 = scmp.le.s32.totalorder 1, %s9
      %p136 = scmp.lt.s32.totalorder %s9, 3
      %p137 = pnand %p135, %p136
      %p138 = pneg %p137
      // Predicated region
      $region9: #{generator_forward.13} parent=5 // pred_check
        _
      $region10: #{generator_forward.13} parent=5 // pred_check_branch
        %140 = sbr.rel (%p137) target = $region12
      $region11: #{generator_forward.13} parent=5 // pred_region
        %s141 = ssub.s32 %s9, 1
        // Predicated region
        $region13: #{generator_forward.13} parent=11 // pred_check
          %p142 = pneg %p47
        $region14: #{generator_forward.13} parent=11 // pred_check_branch
          %144 = sbr.rel (%p142) target = $region16
        $region15: #{generator_forward.13} parent=11 // pred_region
          %p145 = scmp.lt.s32.totalorder %s18, 0
          %s146 = scalar_select %p145, %s18, 0
          %s147 = scalar_lea.vmem %s0, %s146
        $region16: #{generator_forward.13} parent=11 // pred_fallthru
          _
      $region12: #{generator_forward.13} parent=5 // pred_fallthru
        _
      %p148 = scmp.lt.s32.totalorder %s9, 2
      // Predicated region
      $region17: #{generator_forward.13} parent=5 // pred_check
        %p149 = pneg %p148
      $region18: #{generator_forward.13} parent=5 // pred_check_branch
        %151 = sbr.rel (%p149) target = $region20
      $region19: #{generator_forward.13} parent=5 // pred_region
        // Predicated region
        $region21: #{generator_forward.13} parent=19 // pred_check
          %p152 = pneg %p67
        $region22: #{generator_forward.13} parent=19 // pred_check_branch
          %154 = sbr.rel (%p152) target = $region24
        $region23: #{generator_forward.13} parent=19 // pred_region
          %s155 = sand.u32 %s57, 1
          %s156 = sand.u32 %s57, 1
          %s157 = smul.addr %s156, 64
          %s158 = scalar_lea.vmem [#allocation2], %s157
          %s159 = smul.addr %s17, 4
          %s160 = scalar_lea.vmem %s1, %s159
          // Predicated region
          $region25: #{generator_forward.13} parent=23 // pred_check
            _
          $region26: #{generator_forward.13} parent=23 // pred_check_branch
            %162 = sbr.rel (0) target = $region28
          $region27: #{generator_forward.13} parent=23 // pred_region
            // Predicated region
            $region29: #{generator_forward.13} parent=27 // pred_check
              _
            $region30: #{generator_forward.13} parent=27 // pred_check_branch
              %164 = sbr.rel target = $region32
            $region31: #{generator_forward.13} parent=27 // pred_region
              // Predicated region
              $region44: #{generator_forward.13} parent=31 // pred_check
                _
              $region45: #{generator_forward.13} parent=31 // pred_check_branch
                %210 = sbr.rel (0) target = $region47
              $region46: #{generator_forward.13} parent=31 // pred_region
                loop: start=0, step=1, limit=1
                $region48: #{generator_forward.13} parent=46 // loop_pre_header
                  _
                $region49: #{generator_forward.13} parent=46 // loop_header
                  %s212 = sphi 0, %s216
                  %p213 = scmp.ge.s32.totalorder %s212, 1
                  %s217 = sphi %s160, %s160
                  %s218 = sphi %s158, %s158
                $region50: #{generator_forward.13} parent=46 // loop_header_branch
                  %215 = sbr.rel (%p213) target = $region54
                $region51: #{generator_forward.13} parent=46 // loop_body
                  _
                $region52: #{generator_forward.13} parent=46 // loop_footer
                  %s216 = sadd.s32 1, %s212
                $region53: #{generator_forward.13} parent=46 // loop_footer_branch
                  %211 = sbr.rel target = $region49
                $region54: #{generator_forward.13} parent=46 // loop_exit
                  _
                %s220 = ssub.s32 16, 1
                loop: start=0, step=1, limit=1
                $region55: #{generator_forward.13} parent=46 // loop_pre_header
                  _
                $region56: #{generator_forward.13} parent=46 // loop_header
                  %s222 = sphi 0, %s226
                  %p223 = scmp.ge.s32.totalorder %s222, 1
                  %s227 = sphi %s160, %s160
                  %s228 = sphi %s158, %s158
                $region57: #{generator_forward.13} parent=46 // loop_header_branch
                  %225 = sbr.rel (%p223) target = $region61
                $region58: #{generator_forward.13} parent=46 // loop_body
                  %v229 = vld [vmem:[%s227] sm:%s220]
                  %230 = vst [vmem:[%s228] sm:%s220] %v229
                  %v231 = vld [vmem:[%s227 + $0x8] sm:%s220]
                  %232 = vst [vmem:[%s228 + $0x4] sm:%s220] %v231
                  %v233 = vld [vmem:[%s227 + $0x10] sm:%s220]
                  %234 = vst [vmem:[%s228 + $0x8] sm:%s220] %v233
                  %v235 = vld [vmem:[%s227 + $0x18] sm:%s220]
                  %236 = vst [vmem:[%s228 + $0xc] sm:%s220] %v235
                  %v237 = vld [vmem:[%s227 + $0x20] sm:%s220]
                  %238 = vst [vmem:[%s228 + $0x10] sm:%s220] %v237
                  %v239 = vld [vmem:[%s227 + $0x28] sm:%s220]
                  %240 = vst [vmem:[%s228 + $0x14] sm:%s220] %v239
                  %v241 = vld [vmem:[%s227 + $0x30] sm:%s220]
                  %242 = vst [vmem:[%s228 + $0x18] sm:%s220] %v241
                  %v243 = vld [vmem:[%s227 + $0x38] sm:%s220]
                  %244 = vst [vmem:[%s228 + $0x1c] sm:%s220] %v243
                  %v245 = vld [vmem:[%s227 + $0x40] sm:%s220]
                  %246 = vst [vmem:[%s228 + $0x20] sm:%s220] %v245
                  %v247 = vld [vmem:[%s227 + $0x48] sm:%s220]
                  %248 = vst [vmem:[%s228 + $0x24] sm:%s220] %v247
                  %v249 = vld [vmem:[%s227 + $0x50] sm:%s220]
                  %250 = vst [vmem:[%s228 + $0x28] sm:%s220] %v249
                  %v251 = vld [vmem:[%s227 + $0x58] sm:%s220]
                  %252 = vst [vmem:[%s228 + $0x2c] sm:%s220] %v251
                  %v253 = vld [vmem:[%s227 + $0x60] sm:%s220]
                  %254 = vst [vmem:[%s228 + $0x30] sm:%s220] %v253
                  %v255 = vld [vmem:[%s227 + $0x68] sm:%s220]
                  %256 = vst [vmem:[%s228 + $0x34] sm:%s220] %v255
                  %v257 = vld [vmem:[%s227 + $0x70] sm:%s220]
                  %258 = vst [vmem:[%s228 + $0x38] sm:%s220] %v257
                  %v259 = vld [vmem:[%s227 + $0x78] sm:%s220]
                  %260 = vst [vmem:[%s228 + $0x3c] sm:%s220] %v259
                $region59: #{generator_forward.13} parent=46 // loop_footer
                  %s226 = sadd.s32 1, %s222
                $region60: #{generator_forward.13} parent=46 // loop_footer_branch
                  %221 = sbr.rel target = $region56
                $region61: #{generator_forward.13} parent=46 // loop_exit
                  _
              $region47: #{generator_forward.13} parent=31 // pred_fallthru
                _
            $region32: #{generator_forward.13} parent=27 // pred_fallthru
              _
            // Predicated region
            $region33: #{generator_forward.13} parent=27 // pred_check
              _
            $region34: #{generator_forward.13} parent=27 // pred_check_branch
              %166 = sbr.rel (0) target = $region36
            $region35: #{generator_forward.13} parent=27 // pred_region
              %s168 = ssub.s32 16, 1
              loop: start=0, step=1, limit=1
              $region37: #{generator_forward.13} parent=35 // loop_pre_header
                _
              $region38: #{generator_forward.13} parent=35 // loop_header
                %s170 = sphi 0, %s174
                %p171 = scmp.ge.s32.totalorder %s170, 1
                %s175 = sphi %s160, %s160
                %s176 = sphi %s158, %s158
              $region39: #{generator_forward.13} parent=35 // loop_header_branch
                %173 = sbr.rel (%p171) target = $region43
              $region40: #{generator_forward.13} parent=35 // loop_body
                %v177 = vld [vmem:[%s175] sm:%s168]
                %178 = vst [vmem:[%s176] sm:%s168] %v177
                %v179 = vld [vmem:[%s175 + $0x8] sm:%s168]
                %180 = vst [vmem:[%s176 + $0x4] sm:%s168] %v179
                %v181 = vld [vmem:[%s175 + $0x10] sm:%s168]
                %182 = vst [vmem:[%s176 + $0x8] sm:%s168] %v181
                %v183 = vld [vmem:[%s175 + $0x18] sm:%s168]
                %184 = vst [vmem:[%s176 + $0xc] sm:%s168] %v183
                %v185 = vld [vmem:[%s175 + $0x20] sm:%s168]
                %186 = vst [vmem:[%s176 + $0x10] sm:%s168] %v185
                %v187 = vld [vmem:[%s175 + $0x28] sm:%s168]
                %188 = vst [vmem:[%s176 + $0x14] sm:%s168] %v187
                %v189 = vld [vmem:[%s175 + $0x30] sm:%s168]
                %190 = vst [vmem:[%s176 + $0x18] sm:%s168] %v189
                %v191 = vld [vmem:[%s175 + $0x38] sm:%s168]
                %192 = vst [vmem:[%s176 + $0x1c] sm:%s168] %v191
                %v193 = vld [vmem:[%s175 + $0x40] sm:%s168]
                %194 = vst [vmem:[%s176 + $0x20] sm:%s168] %v193
                %v195 = vld [vmem:[%s175 + $0x48] sm:%s168]
                %196 = vst [vmem:[%s176 + $0x24] sm:%s168] %v195
                %v197 = vld [vmem:[%s175 + $0x50] sm:%s168]
                %198 = vst [vmem:[%s176 + $0x28] sm:%s168] %v197
                %v199 = vld [vmem:[%s175 + $0x58] sm:%s168]
                %200 = vst [vmem:[%s176 + $0x2c] sm:%s168] %v199
                %v201 = vld [vmem:[%s175 + $0x60] sm:%s168]
                %202 = vst [vmem:[%s176 + $0x30] sm:%s168] %v201
                %v203 = vld [vmem:[%s175 + $0x68] sm:%s168]
                %204 = vst [vmem:[%s176 + $0x34] sm:%s168] %v203
                %v205 = vld [vmem:[%s175 + $0x70] sm:%s168]
                %206 = vst [vmem:[%s176 + $0x38] sm:%s168] %v205
                %v207 = vld [vmem:[%s175 + $0x78] sm:%s168]
                %208 = vst [vmem:[%s176 + $0x3c] sm:%s168] %v207
              $region41: #{generator_forward.13} parent=35 // loop_footer
                %s174 = sadd.s32 1, %s170
              $region42: #{generator_forward.13} parent=35 // loop_footer_branch
                %169 = sbr.rel target = $region38
              $region43: #{generator_forward.13} parent=35 // loop_exit
                _
            $region36: #{generator_forward.13} parent=27 // pred_fallthru
              _
          $region28: #{generator_forward.13} parent=23 // pred_fallthru
            _
          %261 = vnop
        $region24: #{generator_forward.13} parent=19 // pred_fallthru
          _
        // Predicated region
        $region62: #{generator_forward.13} parent=19 // pred_check
          %p262 = pneg %p93
        $region63: #{generator_forward.13} parent=19 // pred_check_branch
          %264 = sbr.rel (%p262) target = $region65
        $region64: #{generator_forward.13} parent=19 // pred_region
          %p265 = scmp.lt.s32.totalorder %s17, 1
          %s266 = scalar_select %p265, %s17, 1
          %s267 = scalar_lea.vmem %s2, %s266
        $region65: #{generator_forward.13} parent=19 // pred_fallthru
          _
      $region20: #{generator_forward.13} parent=5 // pred_fallthru
        _
      %p268 = scmp.le.s32.totalorder 1, %s9
      %p269 = scmp.lt.s32.totalorder %s9, 3
      %p270 = pnand %p268, %p269
      %p271 = pneg %p270
      // Predicated region
      $region66: #{generator_forward.13} parent=5 // pred_check
        _
      $region67: #{generator_forward.13} parent=5 // pred_check_branch
        %273 = sbr.rel (%p270) target = $region69
      $region68: #{generator_forward.13} parent=5 // pred_region
        %s274 = ssub.s32 %s9, 1
        %s275 = sand.u32 %s60, 1
        %s276 = sand.u32 %s60, 1
        %s277 = smul.addr %s276, 64
        %s278 = scalar_lea.vmem [#allocation2], %s277
        // Predicated region
        $region70: #{generator_forward.13} parent=68 // pred_check
          %p279 = pneg %p73
        $region71: #{generator_forward.13} parent=68 // pred_check_branch
          %281 = sbr.rel (%p279) target = $region73
        $region72: #{generator_forward.13} parent=68 // pred_region
          _
        $region73: #{generator_forward.13} parent=68 // pred_fallthru
          _
        %p282 = scmp.lt.s32.totalorder %s18, 0
        %s283 = scalar_select %p282, %s18, 0
        %s284 = scalar_lea.vmem %s0, %s283
        %p285 = pneg %p47
        %p286 = pneg %p44
        %s287 = sand.u32 %s60, 1
        %s288 = sand.u32 %s60, 1
        %s289 = smul.addr %s288, 64
        %s290 = scalar_lea.vmem [#allocation2], %s289
        %p291 = pneg %p73
        %p292 = pneg %p70
        %p293 = scmp.lt.s32.totalorder %s19, 1
        %s294 = scalar_select %p293, %s19, 1
        %s295 = scalar_lea.vmem %s2, %s294
        %p296 = pneg %p99
        %p297 = pneg %p96
        %p298 = pneg %p127
        %p299 = pneg %p124
        %p300 = scmp.lt.s32.totalorder %s18, 0
        %s301 = scalar_select %p300, %s18, 0
        %p302 = scmp.lt.s32.totalorder %s19, 1
        %s303 = scalar_select %p302, %s19, 1
        %s304 = smul.addr %s301, 2
        %s305 = sadd.s32 %s303, %s304
        %s306 = smul.addr %s305, 2
        %s307 = scalar_lea.vmem %s3, %s306
        %p308 = scmp.lt.s32.totalorder %s18, 0
        %s309 = scalar_select %p308, %s18, 0
        %s310 = scalar_lea.vmem %s0, %s309
        %p311 = scmp.lt.s32.totalorder %s19, 1
        %s312 = scalar_select %p311, %s19, 1
        %s313 = scalar_lea.vmem %s2, %s312
        %p314 = scmp.lt.s32.totalorder %s18, 0
        %s315 = scalar_select %p314, %s18, 0
        %p316 = scmp.lt.s32.totalorder %s19, 1
        %s317 = scalar_select %p316, %s19, 1
        %s318 = smul.addr %s315, 2
        %s319 = sadd.s32 %s317, %s318
        %s320 = smul.addr %s319, 2
        %s321 = scalar_lea.vmem %s3, %s320
        %v322 = vld [vmem:[%s310] sm:$0x1]
        %v323 = vld [vmem:[%s278] sm:$0xf]
        %v324 = vld [vmem:[%s278 + $0x4] sm:$0xf]
        %v325 = vld [vmem:[%s278 + $0x8] sm:$0xf]
        %v326 = vld [vmem:[%s278 + $0xc] sm:$0xf]
        %v327 = vld [vmem:[%s278 + $0x10] sm:$0xf]
        %v328 = vld [vmem:[%s278 + $0x14] sm:$0xf]
        %v329 = vld [vmem:[%s278 + $0x18] sm:$0xf]
        %v330 = vld [vmem:[%s278 + $0x1c] sm:$0xf]
        %v331 = vld [vmem:[%s278 + $0x20] sm:$0xf]
        %v332 = vld [vmem:[%s278 + $0x24] sm:$0xf]
        %v333 = vld [vmem:[%s278 + $0x28] sm:$0xf]
        %v334 = vld [vmem:[%s278 + $0x2c] sm:$0xf]
        %v335 = vld [vmem:[%s278 + $0x30] sm:$0xf]
        %v336 = vld [vmem:[%s278 + $0x34] sm:$0xf]
        %v337 = vld [vmem:[%s278 + $0x38] sm:$0xf]
        %v338 = vld [vmem:[%s278 + $0x3c] sm:$0xf]
        %v339 = vld [vmem:[%s313] sm:$0x1]
        %v341 = vperm.slane %v339, 0
        %v359 = vunpack.c.l.b16 %v323
        %v360 = vunpack.c.l.b16 %v324
        %v361 = vunpack.c.l.b16 %v325
        %v362 = vunpack.c.l.b16 %v326
        %v363 = vunpack.c.l.b16 %v327
        %v364 = vunpack.c.l.b16 %v328
        %v365 = vunpack.c.l.b16 %v329
        %v366 = vunpack.c.l.b16 %v330
        %v367 = vunpack.c.l.b16 %v331
        %v368 = vunpack.c.l.b16 %v332
        %v369 = vunpack.c.l.b16 %v333
        %v370 = vunpack.c.l.b16 %v334
        %v371 = vunpack.c.l.b16 %v335
        %v372 = vunpack.c.l.b16 %v336
        %v373 = vunpack.c.l.b16 %v337
        %v374 = vunpack.c.l.b16 %v338
        %v375 = vpack.c.b16 %v360, %v359
        %v376 = vpack.c.b16 %v362, %v361
        %v377 = vpack.c.b16 %v364, %v363
        %v378 = vpack.c.b16 %v366, %v365
        %v379 = vpack.c.b16 %v368, %v367
        %v380 = vpack.c.b16 %v370, %v369
        %v381 = vpack.c.b16 %v372, %v371
        %v382 = vpack.c.b16 %v374, %v373
        %391 = vmatpush.bf16.msra.mxu0 %v382
        %392 = vmatpush.bf16.msra.mxu0 %v381
        %393 = vmatpush.bf16.msra.mxu0 %v380
        %394 = vmatpush.bf16.msra.mxu0 %v379
        %395 = vmatpush.bf16.msra.mxu0 %v378
        %396 = vmatpush.bf16.msra.mxu0 %v377
        %397 = vmatpush.bf16.msra.mxu0 %v376
        %398 = vmatpush.bf16.msra.mxu0 %v375
        %399 = vmatmul.bf16.gmra.mxu0 %v322
        %v400 = vpop.f32.mrf.mxu0
        %v401 = vadd.f32 %v341, %v400
        %v402 = vpop.f32.mrf.mxu0
        %403 = vdwg.mxu0
        %vm404 = vcmp.ge.f32.partialorder %v401, 0.0
        %v405 = vmul.f32 %v401, 0.2
        %v406 = vsel %vm404, %v401, %v405
        %407 = vst [vmem:[%s321] sm:$0x3] %v406
        %p408 = scmp.lt.s32.totalorder %s18, 0
        %s409 = scalar_select %p408, %s18, 0
        %p410 = scmp.lt.s32.totalorder %s19, 1
        %s411 = scalar_select %p410, %s19, 1
        %s412 = smul.addr %s409, 2
        %s413 = sadd.s32 %s411, %s412
        %s414 = smul.addr %s413, 2
        %s415 = scalar_lea.vmem %s3, %s414
        // Predicated region
        $region74: #{generator_forward.13} parent=68 // pred_check
          %p416 = pneg %p124
        $region75: #{generator_forward.13} parent=68 // pred_check_branch
          %418 = sbr.rel (%p416) target = $region77
        $region76: #{generator_forward.13} parent=68 // pred_region
          _
        $region77: #{generator_forward.13} parent=68 // pred_fallthru
          _
      $region69: #{generator_forward.13} parent=5 // pred_fallthru
        _
      %p419 = scmp.le.s32.totalorder 2, %s9
      // Predicated region
      $region78: #{generator_forward.13} parent=5 // pred_check
        %p420 = pneg %p419
      $region79: #{generator_forward.13} parent=5 // pred_check_branch
        %422 = sbr.rel (%p420) target = $region81
      $region80: #{generator_forward.13} parent=5 // pred_region
        %s423 = ssub.s32 %s9, 2
        // Predicated region
        $region82: #{generator_forward.13} parent=80 // pred_check
          %p424 = pneg %p130
        $region83: #{generator_forward.13} parent=80 // pred_check_branch
          %426 = sbr.rel (%p424) target = $region85
        $region84: #{generator_forward.13} parent=80 // pred_region
          %p427 = scmp.lt.s32.totalorder %s20, 0
          %s428 = scalar_select %p427, %s20, 0
          %p429 = scmp.lt.s32.totalorder %s21, 1
          %s430 = scalar_select %p429, %s21, 1
          %s431 = smul.addr %s428, 2
          %s432 = sadd.s32 %s430, %s431
          %s433 = smul.addr %s432, 2
          %s434 = scalar_lea.vmem %s3, %s433
        $region85: #{generator_forward.13} parent=80 // pred_fallthru
          _
      $region81: #{generator_forward.13} parent=5 // pred_fallthru
        _
    $region6: #{generator_forward.13} parent=1 // loop_footer
      %s13 = sadd.s32 1, %s9
    $region7: #{generator_forward.13} parent=1 // loop_footer_branch
      %8 = sbr.rel target = $region3
    $region8: #{generator_forward.13} parent=1 // loop_exit
      _

// kernel: generator_forward.14
$region0: #{generator_forward.14}
  #allocation0 [shape = 'u32[]', space=smem, size = 0x4, offset = 0x4, fixed_abs, tag = 'smem constant byte address 0x4 - core index']
  #allocation1 [shape = 'u32[72,128]{1,0:T(1,128)}', space=vmem, size = 0x9000, scoped, tag = 'internal scratch']
  %s0 = inlined_call_operand.vmem [shape: bf16[2,256], index: 0, kind: input, shape index: {}]
  %s1 = inlined_call_operand.vmem [shape: bf16[256,32], index: 1, kind: input, shape index: {}]
  %s2 = inlined_call_operand.vmem [shape: f32[1,32], index: 2, kind: input, shape index: {}]
  %s3 = inlined_call_operand.vmem [shape: f32[2,32], index: 3, kind: output, shape index: {}]
  %s4 = sld [smem:[#allocation0]]
  $region22: #{generator_forward.14} parent=0
    _
  %s6 = ssub.s32 1, %s4
  %s7 = scalar_select 0, %s6, %s4
  // Predicated region
  $region2: #{generator_forward.14} parent=0 // pred_check
    _
  $region3: #{generator_forward.14} parent=0 // pred_check_branch
    %9 = sbr.rel (0) target = $region5
  $region4: #{generator_forward.14} parent=0 // pred_region
    _
  $region5: #{generator_forward.14} parent=0 // pred_fallthru
    _
  // Predicated region
  $region6: #{generator_forward.14} parent=0 // pred_check
    _
  $region7: #{generator_forward.14} parent=0 // pred_check_branch
    %11 = sbr.rel (0) target = $region9
  $region8: #{generator_forward.14} parent=0 // pred_region
    _
  $region9: #{generator_forward.14} parent=0 // pred_fallthru
    _
  // Predicated region
  $region10: #{generator_forward.14} parent=0 // pred_check
    _
  $region11: #{generator_forward.14} parent=0 // pred_check_branch
    %13 = sbr.rel (0) target = $region13
  $region12: #{generator_forward.14} parent=0 // pred_region
    _
  $region13: #{generator_forward.14} parent=0 // pred_fallthru
    _
  %v14 = vld [vmem:[%s0] sm:$0x3]
  %v15 = vld [vmem:[%s1] sm:$0xf]
  %v16 = vld [vmem:[%s1 + $0x4] sm:$0xf]
  %v17 = vld [vmem:[%s1 + $0x8] sm:$0xf]
  %v18 = vld [vmem:[%s1 + $0xc] sm:$0xf]
  %v19 = vld [vmem:[%s1 + $0x10] sm:$0xf]
  %v20 = vld [vmem:[%s1 + $0x14] sm:$0xf]
  %v21 = vld [vmem:[%s1 + $0x18] sm:$0xf]
  %v22 = vld [vmem:[%s1 + $0x1c] sm:$0xf]
  %v23 = vld [vmem:[%s1 + $0x20] sm:$0xf]
  %v24 = vld [vmem:[%s1 + $0x24] sm:$0xf]
  %v25 = vld [vmem:[%s1 + $0x28] sm:$0xf]
  %v26 = vld [vmem:[%s1 + $0x2c] sm:$0xf]
  %v27 = vld [vmem:[%s1 + $0x30] sm:$0xf]
  %v28 = vld [vmem:[%s1 + $0x34] sm:$0xf]
  %v29 = vld [vmem:[%s1 + $0x38] sm:$0xf]
  %v30 = vld [vmem:[%s1 + $0x3c] sm:$0xf]
  %v31 = vld [vmem:[%s1 + $0x40] sm:$0xf]
  %v32 = vld [vmem:[%s1 + $0x44] sm:$0xf]
  %v33 = vld [vmem:[%s1 + $0x48] sm:$0xf]
  %v34 = vld [vmem:[%s1 + $0x4c] sm:$0xf]
  %v35 = vld [vmem:[%s1 + $0x50] sm:$0xf]
  %v36 = vld [vmem:[%s1 + $0x54] sm:$0xf]
  %v37 = vld [vmem:[%s1 + $0x58] sm:$0xf]
  %v38 = vld [vmem:[%s1 + $0x5c] sm:$0xf]
  %v39 = vld [vmem:[%s1 + $0x60] sm:$0xf]
  %v40 = vld [vmem:[%s1 + $0x64] sm:$0xf]
  %v41 = vld [vmem:[%s1 + $0x68] sm:$0xf]
  %v42 = vld [vmem:[%s1 + $0x6c] sm:$0xf]
  %v43 = vld [vmem:[%s1 + $0x70] sm:$0xf]
  %v44 = vld [vmem:[%s1 + $0x74] sm:$0xf]
  %v45 = vld [vmem:[%s1 + $0x78] sm:$0xf]
  %v46 = vld [vmem:[%s1 + $0x7c] sm:$0xf]
  %v47 = vld [vmem:[%s2] sm:$0x1]
  %v49 = vperm.slane %v47, 0
  %52 = vst [vmem:[#allocation1] ss:$9 sm:$0xff] %v14
  %v53 = vld [vmem:[#allocation1] sm:$0xff]
  %v54 = vld [vmem:[#allocation1 + $0x9] sm:$0xff]
  %v89 = vunpack.c.l.b16 %v15
  %v90 = vunpack.c.l.b16 %v16
  %v91 = vunpack.c.l.b16 %v17
  %v92 = vunpack.c.l.b16 %v18
  %v93 = vunpack.c.l.b16 %v19
  %v94 = vunpack.c.l.b16 %v20
  %v95 = vunpack.c.l.b16 %v21
  %v96 = vunpack.c.l.b16 %v22
  %v97 = vunpack.c.l.b16 %v23
  %v98 = vunpack.c.l.b16 %v24
  %v99 = vunpack.c.l.b16 %v25
  %v100 = vunpack.c.l.b16 %v26
  %v101 = vunpack.c.l.b16 %v27
  %v102 = vunpack.c.l.b16 %v28
  %v103 = vunpack.c.l.b16 %v29
  %v104 = vunpack.c.l.b16 %v30
  %v105 = vunpack.c.l.b16 %v31
  %v106 = vunpack.c.l.b16 %v32
  %v107 = vunpack.c.l.b16 %v33
  %v108 = vunpack.c.l.b16 %v34
  %v109 = vunpack.c.l.b16 %v35
  %v110 = vunpack.c.l.b16 %v36
  %v111 = vunpack.c.l.b16 %v37
  %v112 = vunpack.c.l.b16 %v38
  %v113 = vunpack.c.l.b16 %v39
  %v114 = vunpack.c.l.b16 %v40
  %v115 = vunpack.c.l.b16 %v41
  %v116 = vunpack.c.l.b16 %v42
  %v117 = vunpack.c.l.b16 %v43
  %v118 = vunpack.c.l.b16 %v44
  %v119 = vunpack.c.l.b16 %v45
  %v120 = vunpack.c.l.b16 %v46
  %v121 = vpack.c.b16 %v90, %v89
  %v122 = vpack.c.b16 %v92, %v91
  %v123 = vpack.c.b16 %v94, %v93
  %v124 = vpack.c.b16 %v96, %v95
  %v125 = vpack.c.b16 %v98, %v97
  %v126 = vpack.c.b16 %v100, %v99
  %v127 = vpack.c.b16 %v102, %v101
  %v128 = vpack.c.b16 %v104, %v103
  %v129 = vpack.c.b16 %v106, %v105
  %v130 = vpack.c.b16 %v108, %v107
  %v131 = vpack.c.b16 %v110, %v109
  %v132 = vpack.c.b16 %v112, %v111
  %v133 = vpack.c.b16 %v114, %v113
  %v134 = vpack.c.b16 %v116, %v115
  %v135 = vpack.c.b16 %v118, %v117
  %v136 = vpack.c.b16 %v120, %v119
  %153 = vmatpush.bf16.msra.mxu0 %v128
  %154 = vmatpush.bf16.msra.mxu0 %v127
  %155 = vmatpush.bf16.msra.mxu0 %v126
  %156 = vmatpush.bf16.msra.mxu0 %v125
  %157 = vmatpush.bf16.msra.mxu0 %v124
  %158 = vmatpush.bf16.msra.mxu0 %v123
  %159 = vmatpush.bf16.msra.mxu0 %v122
  %160 = vmatpush.bf16.msra.mxu0 %v121
  %161 = vmatmul.bf16.gmra.mxu0 %v53
  %v162 = vpop.f32.mrf.mxu0
  %v163 = vadd.f32 %v49, %v162
  %v164 = vpop.f32.mrf.mxu0
  %165 = vdwg.mxu0
  %166 = vmatpush.bf16.msra.mxu0 %v136
  %167 = vmatpush.bf16.msra.mxu0 %v135
  %168 = vmatpush.bf16.msra.mxu0 %v134
  %169 = vmatpush.bf16.msra.mxu0 %v133
  %170 = vmatpush.bf16.msra.mxu0 %v132
  %171 = vmatpush.bf16.msra.mxu0 %v131
  %172 = vmatpush.bf16.msra.mxu0 %v130
  %173 = vmatpush.bf16.msra.mxu0 %v129
  %174 = vmatmul.bf16.gmra.mxu0 %v54
  %v175 = vpop.f32.mrf.mxu0
  %v176 = vadd.f32 %v163, %v175
  %v177 = vpop.f32.mrf.mxu0
  %178 = vdwg.mxu0
  %vm179 = vcmask 254976
  %180 = vst.msk [vmem:[%s3] sm:$0x3] %vm179, %v176
  // Predicated region
  $region14: #{generator_forward.14} parent=0 // pred_check
    _
  $region15: #{generator_forward.14} parent=0 // pred_check_branch
    %182 = sbr.rel (0) target = $region17
  $region16: #{generator_forward.14} parent=0 // pred_region
    _
  $region17: #{generator_forward.14} parent=0 // pred_fallthru
    _
  // Predicated region
  $region18: #{generator_forward.14} parent=0 // pred_check
    _
  $region19: #{generator_forward.14} parent=0 // pred_check_branch
    %184 = sbr.rel (0) target = $region21
  $region20: #{generator_forward.14} parent=0 // pred_region
    _
  $region21: #{generator_forward.14} parent=0 // pred_fallthru
    _

// kernel: generator_forward.16
$region0: #{generator_forward.16}
  #allocation0 [shape = 'u32[]', space=smem, size = 0x4, offset = 0x4, fixed_abs, tag = 'smem constant byte address 0x4 - core index']
  #allocation1 [shape = 'u32[72,128]{1,0:T(1,128)}', space=vmem, size = 0x9000, scoped, tag = 'internal scratch']
  %s0 = inlined_call_operand.vmem [shape: bf16[2,256], index: 0, kind: input, shape index: {}]
  %s1 = inlined_call_operand.vmem [shape: bf16[256,128], index: 1, kind: input, shape index: {}]
  %s2 = inlined_call_operand.vmem [shape: f32[1,128], index: 2, kind: input, shape index: {}]
  %s3 = inlined_call_operand.vmem [shape: f32[2,128], index: 3, kind: output, shape index: {}]
  %s4 = sld [smem:[#allocation0]]
  $region22: #{generator_forward.16} parent=0
    _
  %s6 = ssub.s32 1, %s4
  %s7 = scalar_select 0, %s6, %s4
  // Predicated region
  $region2: #{generator_forward.16} parent=0 // pred_check
    _
  $region3: #{generator_forward.16} parent=0 // pred_check_branch
    %9 = sbr.rel (0) target = $region5
  $region4: #{generator_forward.16} parent=0 // pred_region
    _
  $region5: #{generator_forward.16} parent=0 // pred_fallthru
    _
  // Predicated region
  $region6: #{generator_forward.16} parent=0 // pred_check
    _
  $region7: #{generator_forward.16} parent=0 // pred_check_branch
    %11 = sbr.rel (0) target = $region9
  $region8: #{generator_forward.16} parent=0 // pred_region
    _
  $region9: #{generator_forward.16} parent=0 // pred_fallthru
    _
  // Predicated region
  $region10: #{generator_forward.16} parent=0 // pred_check
    _
  $region11: #{generator_forward.16} parent=0 // pred_check_branch
    %13 = sbr.rel (0) target = $region13
  $region12: #{generator_forward.16} parent=0 // pred_region
    _
  $region13: #{generator_forward.16} parent=0 // pred_fallthru
    _
  %v14 = vld [vmem:[%s0] sm:$0x3]
  %v15 = vld [vmem:[%s1] sm:$0xf]
  %v16 = vld [vmem:[%s1 + $0x4] sm:$0xf]
  %v17 = vld [vmem:[%s1 + $0x8] sm:$0xf]
  %v18 = vld [vmem:[%s1 + $0xc] sm:$0xf]
  %v19 = vld [vmem:[%s1 + $0x10] sm:$0xf]
  %v20 = vld [vmem:[%s1 + $0x14] sm:$0xf]
  %v21 = vld [vmem:[%s1 + $0x18] sm:$0xf]
  %v22 = vld [vmem:[%s1 + $0x1c] sm:$0xf]
  %v23 = vld [vmem:[%s1 + $0x20] sm:$0xf]
  %v24 = vld [vmem:[%s1 + $0x24] sm:$0xf]
  %v25 = vld [vmem:[%s1 + $0x28] sm:$0xf]
  %v26 = vld [vmem:[%s1 + $0x2c] sm:$0xf]
  %v27 = vld [vmem:[%s1 + $0x30] sm:$0xf]
  %v28 = vld [vmem:[%s1 + $0x34] sm:$0xf]
  %v29 = vld [vmem:[%s1 + $0x38] sm:$0xf]
  %v30 = vld [vmem:[%s1 + $0x3c] sm:$0xf]
  %v31 = vld [vmem:[%s1 + $0x40] sm:$0xf]
  %v32 = vld [vmem:[%s1 + $0x44] sm:$0xf]
  %v33 = vld [vmem:[%s1 + $0x48] sm:$0xf]
  %v34 = vld [vmem:[%s1 + $0x4c] sm:$0xf]
  %v35 = vld [vmem:[%s1 + $0x50] sm:$0xf]
  %v36 = vld [vmem:[%s1 + $0x54] sm:$0xf]
  %v37 = vld [vmem:[%s1 + $0x58] sm:$0xf]
  %v38 = vld [vmem:[%s1 + $0x5c] sm:$0xf]
  %v39 = vld [vmem:[%s1 + $0x60] sm:$0xf]
  %v40 = vld [vmem:[%s1 + $0x64] sm:$0xf]
  %v41 = vld [vmem:[%s1 + $0x68] sm:$0xf]
  %v42 = vld [vmem:[%s1 + $0x6c] sm:$0xf]
  %v43 = vld [vmem:[%s1 + $0x70] sm:$0xf]
  %v44 = vld [vmem:[%s1 + $0x74] sm:$0xf]
  %v45 = vld [vmem:[%s1 + $0x78] sm:$0xf]
  %v46 = vld [vmem:[%s1 + $0x7c] sm:$0xf]
  %v47 = vld [vmem:[%s2] sm:$0x1]
  %v49 = vperm.slane %v47, 0
  %52 = vst [vmem:[#allocation1] ss:$9 sm:$0xff] %v14
  %v53 = vld [vmem:[#allocation1] sm:$0xff]
  %v54 = vld [vmem:[#allocation1 + $0x9] sm:$0xff]
  %v89 = vunpack.c.l.b16 %v15
  %v90 = vunpack.c.l.b16 %v16
  %v91 = vunpack.c.l.b16 %v17
  %v92 = vunpack.c.l.b16 %v18
  %v93 = vunpack.c.l.b16 %v19
  %v94 = vunpack.c.l.b16 %v20
  %v95 = vunpack.c.l.b16 %v21
  %v96 = vunpack.c.l.b16 %v22
  %v97 = vunpack.c.l.b16 %v23
  %v98 = vunpack.c.l.b16 %v24
  %v99 = vunpack.c.l.b16 %v25
  %v100 = vunpack.c.l.b16 %v26
  %v101 = vunpack.c.l.b16 %v27
  %v102 = vunpack.c.l.b16 %v28
  %v103 = vunpack.c.l.b16 %v29
  %v104 = vunpack.c.l.b16 %v30
  %v105 = vunpack.c.l.b16 %v31
  %v106 = vunpack.c.l.b16 %v32
  %v107 = vunpack.c.l.b16 %v33
  %v108 = vunpack.c.l.b16 %v34
  %v109 = vunpack.c.l.b16 %v35
  %v110 = vunpack.c.l.b16 %v36
  %v111 = vunpack.c.l.b16 %v37
  %v112 = vunpack.c.l.b16 %v38
  %v113 = vunpack.c.l.b16 %v39
  %v114 = vunpack.c.l.b16 %v40
  %v115 = vunpack.c.l.b16 %v41
  %v116 = vunpack.c.l.b16 %v42
  %v117 = vunpack.c.l.b16 %v43
  %v118 = vunpack.c.l.b16 %v44
  %v119 = vunpack.c.l.b16 %v45
  %v120 = vunpack.c.l.b16 %v46
  %v121 = vpack.c.b16 %v90, %v89
  %v122 = vpack.c.b16 %v92, %v91
  %v123 = vpack.c.b16 %v94, %v93
  %v124 = vpack.c.b16 %v96, %v95
  %v125 = vpack.c.b16 %v98, %v97
  %v126 = vpack.c.b16 %v100, %v99
  %v127 = vpack.c.b16 %v102, %v101
  %v128 = vpack.c.b16 %v104, %v103
  %v129 = vpack.c.b16 %v106, %v105
  %v130 = vpack.c.b16 %v108, %v107
  %v131 = vpack.c.b16 %v110, %v109
  %v132 = vpack.c.b16 %v112, %v111
  %v133 = vpack.c.b16 %v114, %v113
  %v134 = vpack.c.b16 %v116, %v115
  %v135 = vpack.c.b16 %v118, %v117
  %v136 = vpack.c.b16 %v120, %v119
  %153 = vmatpush.bf16.msra.mxu0 %v128
  %154 = vmatpush.bf16.msra.mxu0 %v127
  %155 = vmatpush.bf16.msra.mxu0 %v126
  %156 = vmatpush.bf16.msra.mxu0 %v125
  %157 = vmatpush.bf16.msra.mxu0 %v124
  %158 = vmatpush.bf16.msra.mxu0 %v123
  %159 = vmatpush.bf16.msra.mxu0 %v122
  %160 = vmatpush.bf16.msra.mxu0 %v121
  %161 = vmatmul.bf16.gmra.mxu0 %v53
  %v162 = vpop.f32.mrf.mxu0
  %v163 = vadd.f32 %v49, %v162
  %v164 = vpop.f32.mrf.mxu0
  %165 = vdwg.mxu0
  %166 = vmatpush.bf16.msra.mxu0 %v136
  %167 = vmatpush.bf16.msra.mxu0 %v135
  %168 = vmatpush.bf16.msra.mxu0 %v134
  %169 = vmatpush.bf16.msra.mxu0 %v133
  %170 = vmatpush.bf16.msra.mxu0 %v132
  %171 = vmatpush.bf16.msra.mxu0 %v131
  %172 = vmatpush.bf16.msra.mxu0 %v130
  %173 = vmatpush.bf16.msra.mxu0 %v129
  %174 = vmatmul.bf16.gmra.mxu0 %v54
  %v175 = vpop.f32.mrf.mxu0
  %v176 = vadd.f32 %v163, %v175
  %v177 = vpop.f32.mrf.mxu0
  %178 = vdwg.mxu0
  %179 = vst [vmem:[%s3] sm:$0x3] %v176
  // Predicated region
  $region14: #{generator_forward.16} parent=0 // pred_check
    _
  $region15: #{generator_forward.16} parent=0 // pred_check_branch
    %181 = sbr.rel (0) target = $region17
  $region16: #{generator_forward.16} parent=0 // pred_region
    _
  $region17: #{generator_forward.16} parent=0 // pred_fallthru
    _
  // Predicated region
  $region18: #{generator_forward.16} parent=0 // pred_check
    _
  $region19: #{generator_forward.16} parent=0 // pred_check_branch
    %183 = sbr.rel (0) target = $region21
  $region20: #{generator_forward.16} parent=0 // pred_region
    _
  $region21: #{generator_forward.16} parent=0 // pred_fallthru
    _

// kernel: generator_forward.15
$region0: #{generator_forward.15}
  #allocation0 [shape = 'u32[]', space=smem, size = 0x4, offset = 0x4, fixed_abs, tag = 'smem constant byte address 0x4 - core index']
  #allocation1 [shape = 'u32[72,128]{1,0:T(1,128)}', space=vmem, size = 0x9000, scoped, tag = 'internal scratch']
  %s0 = inlined_call_operand.vmem [shape: bf16[2,32], index: 0, kind: input, shape index: {}]
  %s1 = inlined_call_operand.vmem [shape: bf16[32,256], index: 1, kind: input, shape index: {}]
  %s2 = inlined_call_operand.vmem [shape: f32[1,256], index: 2, kind: input, shape index: {}]
  %s3 = inlined_call_operand.vmem [shape: f32[2,256], index: 3, kind: output, shape index: {}]
  %s4 = sld [smem:[#allocation0]]
  $region86: #{generator_forward.15} parent=0
    _
  %s6 = ssub.s32 1, %s4
  %s7 = scalar_select 0, %s6, %s4
  $region1: #{generator_forward.15} parent=0
    #allocation2 [shape = 'u8[16384]{0}', space=vmem, size = 0x4000, scoped, tag = 'input window, operand 1']
    loop: start=0, step=1, limit=4
    $region2: #{generator_forward.15} parent=1 // loop_pre_header
      _
    $region3: #{generator_forward.15} parent=1 // loop_header
      %s9 = sphi 0, %s13
      %p10 = scmp.ge.s32.totalorder %s9, 4
      %s16 = sphi 0, %s28
      %s17 = sphi 0, %s24
      %s18 = sphi 0, %s16
      %s19 = sphi 0, %s17
      %s20 = sphi 0, %s18
      %s21 = sphi 0, %s19
      %s31 = sphi 0, %s33
      %s34 = sphi 0, %s31
      %s35 = sphi 0, %s34
      %s51 = sphi 0, %s35
      %s57 = sphi 0, %s59
      %s60 = sphi 0, %s57
      %s61 = sphi 0, %s60
      %s77 = sphi 0, %s61
      %s83 = sphi 0, %s85
      %s86 = sphi 0, %s83
      %s87 = sphi 0, %s86
      %s103 = sphi 0, %s87
      %s111 = sphi 0, %s113
      %s114 = sphi 0, %s111
      %s115 = sphi 0, %s114
      %s131 = sphi 0, %s115
    $region4: #{generator_forward.15} parent=1 // loop_header_branch
      %12 = sbr.rel (%p10) target = $region8
    $region5: #{generator_forward.15} parent=1 // loop_body
      %s14 = ssub.s32 %s9, 1
      %s15 = ssub.s32 %s9, 2
      %s22 = sadd.s32 1, %s17
      %p23 = scmp.ge.s32.totalorder %s22, 2
      %s24 = scalar_select %p23, 0, %s22
      %s25 = sadd.s32 1, %s16
      %s26 = scalar_select %p23, %s25, %s16
      %p27 = scmp.ge.s32.totalorder %s26, 1
      %s28 = scalar_select %p27, 0, %s26
      %s29 = ssub.s32 %s16, %s28
      %p30 = scmp.eq.s32.totalorder %s29, 0
      %s32 = sadd.s32 %s31, 1
      %s33 = scalar_select %p30, %s31, %s32
      %p36 = pneg %p30
      %p37 = scmp.eq.s32.totalorder %s9, 1
      %p38 = por %p36, %p37
      %p39 = scmp.ne.s32.totalorder %s31, %s34
      %p40 = scmp.eq.s32.totalorder %s9, 0
      %p41 = por %p39, %p40
      %p42 = scmp.ne.s32.totalorder %s31, %s34
      %p43 = scmp.eq.s32.totalorder %s14, 1
      %p44 = por %p42, %p43
      %p45 = scmp.ne.s32.totalorder %s34, %s35
      %p46 = scmp.eq.s32.totalorder %s14, 0
      %p47 = por %p45, %p46
      %p48 = scmp.ne.s32.totalorder %s34, %s35
      %p49 = scmp.eq.s32.totalorder %s15, 1
      %p50 = por %p48, %p49
      %p52 = scmp.ne.s32.totalorder %s35, %s51
      %p53 = scmp.eq.s32.totalorder %s15, 0
      %p54 = por %p52, %p53
      %s55 = ssub.s32 %s17, %s24
      %p56 = scmp.eq.s32.totalorder %s55, 0
      %s58 = sadd.s32 %s57, 1
      %s59 = scalar_select %p56, %s57, %s58
      %p62 = pneg %p56
      %p63 = scmp.eq.s32.totalorder %s9, 1
      %p64 = por %p62, %p63
      %p65 = scmp.ne.s32.totalorder %s57, %s60
      %p66 = scmp.eq.s32.totalorder %s9, 0
      %p67 = por %p65, %p66
      %p68 = scmp.ne.s32.totalorder %s57, %s60
      %p69 = scmp.eq.s32.totalorder %s14, 1
      %p70 = por %p68, %p69
      %p71 = scmp.ne.s32.totalorder %s60, %s61
      %p72 = scmp.eq.s32.totalorder %s14, 0
      %p73 = por %p71, %p72
      %p74 = scmp.ne.s32.totalorder %s60, %s61
      %p75 = scmp.eq.s32.totalorder %s15, 1
      %p76 = por %p74, %p75
      %p78 = scmp.ne.s32.totalorder %s61, %s77
      %p79 = scmp.eq.s32.totalorder %s15, 0
      %p80 = por %p78, %p79
      %s81 = ssub.s32 %s17, %s24
      %p82 = scmp.eq.s32.totalorder %s81, 0
      %s84 = sadd.s32 %s83, 1
      %s85 = scalar_select %p82, %s83, %s84
      %p88 = pneg %p82
      %p89 = scmp.eq.s32.totalorder %s9, 1
      %p90 = por %p88, %p89
      %p91 = scmp.ne.s32.totalorder %s83, %s86
      %p92 = scmp.eq.s32.totalorder %s9, 0
      %p93 = por %p91, %p92
      %p94 = scmp.ne.s32.totalorder %s83, %s86
      %p95 = scmp.eq.s32.totalorder %s14, 1
      %p96 = por %p94, %p95
      %p97 = scmp.ne.s32.totalorder %s86, %s87
      %p98 = scmp.eq.s32.totalorder %s14, 0
      %p99 = por %p97, %p98
      %p100 = scmp.ne.s32.totalorder %s86, %s87
      %p101 = scmp.eq.s32.totalorder %s15, 1
      %p102 = por %p100, %p101
      %p104 = scmp.ne.s32.totalorder %s87, %s103
      %p105 = scmp.eq.s32.totalorder %s15, 0
      %p106 = por %p104, %p105
      %s107 = ssub.s32 %s16, %s28
      %s108 = ssub.s32 %s17, %s24
      %s109 = sor.u32 %s107, %s108
      %p110 = scmp.eq.s32.totalorder %s109, 0
      %s112 = sadd.s32 %s111, 1
      %s113 = scalar_select %p110, %s111, %s112
      %p116 = pneg %p110
      %p117 = scmp.eq.s32.totalorder %s9, 1
      %p118 = por %p116, %p117
      %p119 = scmp.ne.s32.totalorder %s111, %s114
      %p120 = scmp.eq.s32.totalorder %s9, 0
      %p121 = por %p119, %p120
      %p122 = scmp.ne.s32.totalorder %s111, %s114
      %p123 = scmp.eq.s32.totalorder %s14, 1
      %p124 = por %p122, %p123
      %p125 = scmp.ne.s32.totalorder %s114, %s115
      %p126 = scmp.eq.s32.totalorder %s14, 0
      %p127 = por %p125, %p126
      %p128 = scmp.ne.s32.totalorder %s114, %s115
      %p129 = scmp.eq.s32.totalorder %s15, 1
      %p130 = por %p128, %p129
      %p132 = scmp.ne.s32.totalorder %s115, %s131
      %p133 = scmp.eq.s32.totalorder %s15, 0
      %p134 = por %p132, %p133
      %p135 = scmp.le.s32.totalorder 1, %s9
      %p136 = scmp.lt.s32.totalorder %s9, 3
      %p137 = pnand %p135, %p136
      %p138 = pneg %p137
      // Predicated region
      $region9: #{generator_forward.15} parent=5 // pred_check
        _
      $region10: #{generator_forward.15} parent=5 // pred_check_branch
        %140 = sbr.rel (%p137) target = $region12
      $region11: #{generator_forward.15} parent=5 // pred_region
        %s141 = ssub.s32 %s9, 1
        // Predicated region
        $region13: #{generator_forward.15} parent=11 // pred_check
          %p142 = pneg %p47
        $region14: #{generator_forward.15} parent=11 // pred_check_branch
          %144 = sbr.rel (%p142) target = $region16
        $region15: #{generator_forward.15} parent=11 // pred_region
          %p145 = scmp.lt.s32.totalorder %s18, 0
          %s146 = scalar_select %p145, %s18, 0
          %s147 = scalar_lea.vmem %s0, %s146
        $region16: #{generator_forward.15} parent=11 // pred_fallthru
          _
      $region12: #{generator_forward.15} parent=5 // pred_fallthru
        _
      %p148 = scmp.lt.s32.totalorder %s9, 2
      // Predicated region
      $region17: #{generator_forward.15} parent=5 // pred_check
        %p149 = pneg %p148
      $region18: #{generator_forward.15} parent=5 // pred_check_branch
        %151 = sbr.rel (%p149) target = $region20
      $region19: #{generator_forward.15} parent=5 // pred_region
        // Predicated region
        $region21: #{generator_forward.15} parent=19 // pred_check
          %p152 = pneg %p67
        $region22: #{generator_forward.15} parent=19 // pred_check_branch
          %154 = sbr.rel (%p152) target = $region24
        $region23: #{generator_forward.15} parent=19 // pred_region
          %s155 = sand.u32 %s57, 1
          %s156 = sand.u32 %s57, 1
          %s157 = smul.addr %s156, 16
          %s158 = scalar_lea.vmem [#allocation2], %s157
          %s159 = smul.addr %s17, 4
          %s160 = scalar_lea.vmem %s1, %s159
          // Predicated region
          $region25: #{generator_forward.15} parent=23 // pred_check
            _
          $region26: #{generator_forward.15} parent=23 // pred_check_branch
            %162 = sbr.rel (0) target = $region28
          $region27: #{generator_forward.15} parent=23 // pred_region
            // Predicated region
            $region29: #{generator_forward.15} parent=27 // pred_check
              _
            $region30: #{generator_forward.15} parent=27 // pred_check_branch
              %164 = sbr.rel target = $region32
            $region31: #{generator_forward.15} parent=27 // pred_region
              // Predicated region
              $region44: #{generator_forward.15} parent=31 // pred_check
                _
              $region45: #{generator_forward.15} parent=31 // pred_check_branch
                %186 = sbr.rel (0) target = $region47
              $region46: #{generator_forward.15} parent=31 // pred_region
                loop: start=0, step=1, limit=1
                $region48: #{generator_forward.15} parent=46 // loop_pre_header
                  _
                $region49: #{generator_forward.15} parent=46 // loop_header
                  %s188 = sphi 0, %s192
                  %p189 = scmp.ge.s32.totalorder %s188, 1
                  %s193 = sphi %s160, %s160
                  %s194 = sphi %s158, %s158
                $region50: #{generator_forward.15} parent=46 // loop_header_branch
                  %191 = sbr.rel (%p189) target = $region54
                $region51: #{generator_forward.15} parent=46 // loop_body
                  _
                $region52: #{generator_forward.15} parent=46 // loop_footer
                  %s192 = sadd.s32 1, %s188
                $region53: #{generator_forward.15} parent=46 // loop_footer_branch
                  %187 = sbr.rel target = $region49
                $region54: #{generator_forward.15} parent=46 // loop_exit
                  _
                %s196 = ssub.s32 16, 1
                loop: start=0, step=1, limit=1
                $region55: #{generator_forward.15} parent=46 // loop_pre_header
                  _
                $region56: #{generator_forward.15} parent=46 // loop_header
                  %s198 = sphi 0, %s202
                  %p199 = scmp.ge.s32.totalorder %s198, 1
                  %s203 = sphi %s160, %s160
                  %s204 = sphi %s158, %s158
                $region57: #{generator_forward.15} parent=46 // loop_header_branch
                  %201 = sbr.rel (%p199) target = $region61
                $region58: #{generator_forward.15} parent=46 // loop_body
                  %v205 = vld [vmem:[%s203] sm:%s196]
                  %206 = vst [vmem:[%s204] sm:%s196] %v205
                  %v207 = vld [vmem:[%s203 + $0x8] sm:%s196]
                  %208 = vst [vmem:[%s204 + $0x4] sm:%s196] %v207
                  %v209 = vld [vmem:[%s203 + $0x10] sm:%s196]
                  %210 = vst [vmem:[%s204 + $0x8] sm:%s196] %v209
                  %v211 = vld [vmem:[%s203 + $0x18] sm:%s196]
                  %212 = vst [vmem:[%s204 + $0xc] sm:%s196] %v211
                $region59: #{generator_forward.15} parent=46 // loop_footer
                  %s202 = sadd.s32 1, %s198
                $region60: #{generator_forward.15} parent=46 // loop_footer_branch
                  %197 = sbr.rel target = $region56
                $region61: #{generator_forward.15} parent=46 // loop_exit
                  _
              $region47: #{generator_forward.15} parent=31 // pred_fallthru
                _
            $region32: #{generator_forward.15} parent=27 // pred_fallthru
              _
            // Predicated region
            $region33: #{generator_forward.15} parent=27 // pred_check
              _
            $region34: #{generator_forward.15} parent=27 // pred_check_branch
              %166 = sbr.rel (0) target = $region36
            $region35: #{generator_forward.15} parent=27 // pred_region
              %s168 = ssub.s32 16, 1
              loop: start=0, step=1, limit=1
              $region37: #{generator_forward.15} parent=35 // loop_pre_header
                _
              $region38: #{generator_forward.15} parent=35 // loop_header
                %s170 = sphi 0, %s174
                %p171 = scmp.ge.s32.totalorder %s170, 1
                %s175 = sphi %s160, %s160
                %s176 = sphi %s158, %s158
              $region39: #{generator_forward.15} parent=35 // loop_header_branch
                %173 = sbr.rel (%p171) target = $region43
              $region40: #{generator_forward.15} parent=35 // loop_body
                %v177 = vld [vmem:[%s175] sm:%s168]
                %178 = vst [vmem:[%s176] sm:%s168] %v177
                %v179 = vld [vmem:[%s175 + $0x8] sm:%s168]
                %180 = vst [vmem:[%s176 + $0x4] sm:%s168] %v179
                %v181 = vld [vmem:[%s175 + $0x10] sm:%s168]
                %182 = vst [vmem:[%s176 + $0x8] sm:%s168] %v181
                %v183 = vld [vmem:[%s175 + $0x18] sm:%s168]
                %184 = vst [vmem:[%s176 + $0xc] sm:%s168] %v183
              $region41: #{generator_forward.15} parent=35 // loop_footer
                %s174 = sadd.s32 1, %s170
              $region42: #{generator_forward.15} parent=35 // loop_footer_branch
                %169 = sbr.rel target = $region38
              $region43: #{generator_forward.15} parent=35 // loop_exit
                _
            $region36: #{generator_forward.15} parent=27 // pred_fallthru
              _
          $region28: #{generator_forward.15} parent=23 // pred_fallthru
            _
          %213 = vnop
        $region24: #{generator_forward.15} parent=19 // pred_fallthru
          _
        // Predicated region
        $region62: #{generator_forward.15} parent=19 // pred_check
          %p214 = pneg %p93
        $region63: #{generator_forward.15} parent=19 // pred_check_branch
          %216 = sbr.rel (%p214) target = $region65
        $region64: #{generator_forward.15} parent=19 // pred_region
          %p217 = scmp.lt.s32.totalorder %s17, 1
          %s218 = scalar_select %p217, %s17, 1
          %s219 = scalar_lea.vmem %s2, %s218
        $region65: #{generator_forward.15} parent=19 // pred_fallthru
          _
      $region20: #{generator_forward.15} parent=5 // pred_fallthru
        _
      %p220 = scmp.le.s32.totalorder 1, %s9
      %p221 = scmp.lt.s32.totalorder %s9, 3
      %p222 = pnand %p220, %p221
      %p223 = pneg %p222
      // Predicated region
      $region66: #{generator_forward.15} parent=5 // pred_check
        _
      $region67: #{generator_forward.15} parent=5 // pred_check_branch
        %225 = sbr.rel (%p222) target = $region69
      $region68: #{generator_forward.15} parent=5 // pred_region
        %s226 = ssub.s32 %s9, 1
        %s227 = sand.u32 %s60, 1
        %s228 = sand.u32 %s60, 1
        %s229 = smul.addr %s228, 16
        %s230 = scalar_lea.vmem [#allocation2], %s229
        // Predicated region
        $region70: #{generator_forward.15} parent=68 // pred_check
          %p231 = pneg %p73
        $region71: #{generator_forward.15} parent=68 // pred_check_branch
          %233 = sbr.rel (%p231) target = $region73
        $region72: #{generator_forward.15} parent=68 // pred_region
          _
        $region73: #{generator_forward.15} parent=68 // pred_fallthru
          _
        %p234 = scmp.lt.s32.totalorder %s18, 0
        %s235 = scalar_select %p234, %s18, 0
        %s236 = scalar_lea.vmem %s0, %s235
        %p237 = pneg %p47
        %p238 = pneg %p44
        %s239 = sand.u32 %s60, 1
        %s240 = sand.u32 %s60, 1
        %s241 = smul.addr %s240, 16
        %s242 = scalar_lea.vmem [#allocation2], %s241
        %p243 = pneg %p73
        %p244 = pneg %p70
        %p245 = scmp.lt.s32.totalorder %s19, 1
        %s246 = scalar_select %p245, %s19, 1
        %s247 = scalar_lea.vmem %s2, %s246
        %p248 = pneg %p99
        %p249 = pneg %p96
        %p250 = pneg %p127
        %p251 = pneg %p124
        %p252 = scmp.lt.s32.totalorder %s18, 0
        %s253 = scalar_select %p252, %s18, 0
        %p254 = scmp.lt.s32.totalorder %s19, 1
        %s255 = scalar_select %p254, %s19, 1
        %s256 = smul.addr %s253, 2
        %s257 = sadd.s32 %s255, %s256
        %s258 = smul.addr %s257, 2
        %s259 = scalar_lea.vmem %s3, %s258
        %p260 = scmp.lt.s32.totalorder %s18, 0
        %s261 = scalar_select %p260, %s18, 0
        %s262 = scalar_lea.vmem %s0, %s261
        %p263 = scmp.lt.s32.totalorder %s19, 1
        %s264 = scalar_select %p263, %s19, 1
        %s265 = scalar_lea.vmem %s2, %s264
        %p266 = scmp.lt.s32.totalorder %s18, 0
        %s267 = scalar_select %p266, %s18, 0
        %p268 = scmp.lt.s32.totalorder %s19, 1
        %s269 = scalar_select %p268, %s19, 1
        %s270 = smul.addr %s267, 2
        %s271 = sadd.s32 %s269, %s270
        %s272 = smul.addr %s271, 2
        %s273 = scalar_lea.vmem %s3, %s272
        %v275 = vld [vmem:[%s262] sm:$0x1]
        %v276 = vld [vmem:[%s230] sm:$0xf]
        %v277 = vld [vmem:[%s230 + $0x4] sm:$0xf]
        %v278 = vld [vmem:[%s230 + $0x8] sm:$0xf]
        %v279 = vld [vmem:[%s230 + $0xc] sm:$0xf]
        %v280 = vld [vmem:[%s265] sm:$0x1]
        %v282 = vperm.slane %v280, 0
        %v288 = vunpack.c.l.b16 %v276
        %v289 = vunpack.c.l.b16 %v277
        %v290 = vunpack.c.l.b16 %v278
        %v291 = vunpack.c.l.b16 %v279
        %v292 = vpack.c.b16 %v289, %v288
        %v293 = vpack.c.b16 %v291, %v290
        %vm296 = vcmask 261120
        %v298 = vsel %vm296, %v275, 0
        %300 = vmatpush.bf16.msra.mxu0 0
        %301 = vmatpush.bf16.msra.mxu0 0
        %302 = vmatpush.bf16.msra.mxu0 0
        %303 = vmatpush.bf16.msra.mxu0 0
        %304 = vmatpush.bf16.msra.mxu0 0
        %305 = vmatpush.bf16.msra.mxu0 0
        %306 = vmatpush.bf16.msra.mxu0 %v293
        %307 = vmatpush.bf16.msra.mxu0 %v292
        %308 = vmatmul.bf16.gmra.mxu0 %v298
        %v309 = vpop.f32.mrf.mxu0
        %v310 = vadd.f32 %v282, %v309
        %v311 = vpop.f32.mrf.mxu0
        %312 = vdwg.mxu0
        %vm313 = vcmp.ge.f32.partialorder %v310, 0.0
        %v314 = vmul.f32 %v310, 0.2
        %v315 = vsel %vm313, %v310, %v314
        %316 = vst [vmem:[%s273] sm:$0x3] %v315
        %p317 = scmp.lt.s32.totalorder %s18, 0
        %s318 = scalar_select %p317, %s18, 0
        %p319 = scmp.lt.s32.totalorder %s19, 1
        %s320 = scalar_select %p319, %s19, 1
        %s321 = smul.addr %s318, 2
        %s322 = sadd.s32 %s320, %s321
        %s323 = smul.addr %s322, 2
        %s324 = scalar_lea.vmem %s3, %s323
        // Predicated region
        $region74: #{generator_forward.15} parent=68 // pred_check
          %p325 = pneg %p124
        $region75: #{generator_forward.15} parent=68 // pred_check_branch
          %327 = sbr.rel (%p325) target = $region77
        $region76: #{generator_forward.15} parent=68 // pred_region
          _
        $region77: #{generator_forward.15} parent=68 // pred_fallthru
          _
      $region69: #{generator_forward.15} parent=5 // pred_fallthru
        _
      %p328 = scmp.le.s32.totalorder 2, %s9
      // Predicated region
      $region78: #{generator_forward.15} parent=5 // pred_check
        %p329 = pneg %p328
      $region79: #{generator_forward.15} parent=5 // pred_check_branch
        %331 = sbr.rel (%p329) target = $region81
      $region80: #{generator_forward.15} parent=5 // pred_region
        %s332 = ssub.s32 %s9, 2
        // Predicated region
        $region82: #{generator_forward.15} parent=80 // pred_check
          %p333 = pneg %p130
        $region83: #{generator_forward.15} parent=80 // pred_check_branch
          %335 = sbr.rel (%p333) target = $region85
        $region84: #{generator_forward.15} parent=80 // pred_region
          %p336 = scmp.lt.s32.totalorder %s20, 0
          %s337 = scalar_select %p336, %s20, 0
          %p338 = scmp.lt.s32.totalorder %s21, 1
          %s339 = scalar_select %p338, %s21, 1
          %s340 = smul.addr %s337, 2
          %s341 = sadd.s32 %s339, %s340
          %s342 = smul.addr %s341, 2
          %s343 = scalar_lea.vmem %s3, %s342
        $region85: #{generator_forward.15} parent=80 // pred_fallthru
          _
      $region81: #{generator_forward.15} parent=5 // pred_fallthru
        _
    $region6: #{generator_forward.15} parent=1 // loop_footer
      %s13 = sadd.s32 1, %s9
    $region7: #{generator_forward.15} parent=1 // loop_footer_branch
      %8 = sbr.rel target = $region3
    $region8: #{generator_forward.15} parent=1 // loop_exit
      _

// kernel: generator_forward.17
$region0: #{generator_forward.17}
  #allocation0 [shape = 'u32[]', space=smem, size = 0x4, offset = 0x4, fixed_abs, tag = 'smem constant byte address 0x4 - core index']
  #allocation1 [shape = 'u32[72,128]{1,0:T(1,128)}', space=vmem, size = 0x9000, scoped, tag = 'internal scratch']
  %s0 = inlined_call_operand.vmem [shape: bf16[16,288], index: 0, kind: input, shape index: {}]
  %s1 = inlined_call_operand.vmem [shape: bf16[1,32,138], index: 1, kind: input, shape index: {}]
  %s2 = inlined_call_operand.vmem [shape: f32[16,1], index: 2, kind: input, shape index: {}]
  %s3 = inlined_call_operand.vmem [shape: bf16[16,128], index: 3, kind: output, shape index: {}]
  %s4 = sld [smem:[#allocation0]]
  $region22: #{generator_forward.17} parent=0
    _
  %s6 = ssub.s32 1, %s4
  %s7 = scalar_select 0, %s6, %s4
  // Predicated region
  $region2: #{generator_forward.17} parent=0 // pred_check
    _
  $region3: #{generator_forward.17} parent=0 // pred_check_branch
    %9 = sbr.rel (0) target = $region5
  $region4: #{generator_forward.17} parent=0 // pred_region
    _
  $region5: #{generator_forward.17} parent=0 // pred_fallthru
    _
  // Predicated region
  $region6: #{generator_forward.17} parent=0 // pred_check
    _
  $region7: #{generator_forward.17} parent=0 // pred_check_branch
    %11 = sbr.rel (0) target = $region9
  $region8: #{generator_forward.17} parent=0 // pred_region
    _
  $region9: #{generator_forward.17} parent=0 // pred_fallthru
    _
  // Predicated region
  $region10: #{generator_forward.17} parent=0 // pred_check
    _
  $region11: #{generator_forward.17} parent=0 // pred_check_branch
    %13 = sbr.rel (0) target = $region13
  $region12: #{generator_forward.17} parent=0 // pred_region
    _
  $region13: #{generator_forward.17} parent=0 // pred_fallthru
    _
  %v15 = vld [vmem:[%s1] sm:$0xf]
  %v16 = vld [vmem:[%s1 + $0x8] sm:$0xf]
  %v17 = vld [vmem:[%s1 + $0x10] sm:$0xf]
  %v18 = vld [vmem:[%s1 + $0x18] sm:$0xf]
  %v19 = vld [vmem:[%s1] sm:$0xff]
  %v20 = vld [vmem:[%s1 + $0x8] sm:$0xff]
  %v21 = vld [vmem:[%s1 + $0x10] sm:$0xff]
  %v22 = vld [vmem:[%s1 + $0x18] sm:$0xff]
  %v27 = vunpack.c.l.b16 %v15
  %v28 = vunpack.c.l.b16 %v16
  %v29 = vunpack.c.l.b16 %v17
  %v30 = vunpack.c.l.b16 %v18
  %v31 = vpack.c.b16 %v28, %v27
  %v32 = vpack.c.b16 %v30, %v29
  %v39 = vunpack.c.l.b16 %v19
  %v40 = vunpack.c.h.b16 %v19
  %v41 = vunpack.c.l.b16 %v20
  %v42 = vunpack.c.h.b16 %v20
  %v43 = vunpack.c.l.b16 %v21
  %v44 = vunpack.c.h.b16 %v21
  %v45 = vunpack.c.l.b16 %v22
  %v46 = vunpack.c.h.b16 %v22
  %v47 = vpack.c.b16 %v41, %v39
  %v48 = vpack.c.b16 %v42, %v40
  %v49 = vpack.c.b16 %v45, %v43
  %v50 = vpack.c.b16 %v46, %v44
  %51 = vrot.lane.b32.xlu0 %v47, 127
  %v52 = vpop.permute.xlu0 %51
  %53 = vrot.lane.b32.xlu0 %v48, 127
  %v54 = vpop.permute.xlu0 %53
  %55 = vrot.lane.b32.xlu0 %v49, 127
  %v56 = vpop.permute.xlu0 %55
  %57 = vrot.lane.b32.xlu0 %v50, 127
  %v58 = vpop.permute.xlu0 %57
  %vm59 = vcmask 1039360
  %v60 = vsel %vm59, %v52, %v54
  %v61 = vsel %vm59, %v56, %v58
  %64 = vrot.lane.b32.xlu0 %v47, 126
  %v65 = vpop.permute.xlu0 %64
  %66 = vrot.lane.b32.xlu0 %v48, 126
  %v67 = vpop.permute.xlu0 %66
  %68 = vrot.lane.b32.xlu0 %v49, 126
  %v69 = vpop.permute.xlu0 %68
  %70 = vrot.lane.b32.xlu0 %v50, 126
  %v71 = vpop.permute.xlu0 %70
  %vm72 = vcmask 1031168
  %v73 = vsel %vm72, %v65, %v67
  %v74 = vsel %vm72, %v69, %v71
  %77 = vrot.lane.b32.xlu0 %v47, 124
  %v78 = vpop.permute.xlu0 %77
  %79 = vrot.lane.b32.xlu0 %v48, 124
  %v80 = vpop.permute.xlu0 %79
  %81 = vrot.lane.b32.xlu0 %v49, 124
  %v82 = vpop.permute.xlu0 %81
  %83 = vrot.lane.b32.xlu0 %v50, 124
  %v84 = vpop.permute.xlu0 %83
  %vm85 = vcmask 1014784
  %v86 = vsel %vm85, %v78, %v80
  %v87 = vsel %vm85, %v82, %v84
  %90 = vrot.lane.b32.xlu0 %v47, 123
  %v91 = vpop.permute.xlu0 %90
  %92 = vrot.lane.b32.xlu0 %v48, 123
  %v93 = vpop.permute.xlu0 %92
  %94 = vrot.lane.b32.xlu0 %v49, 123
  %v95 = vpop.permute.xlu0 %94
  %96 = vrot.lane.b32.xlu0 %v50, 123
  %v97 = vpop.permute.xlu0 %96
  %vm98 = vcmask 1006592
  %v99 = vsel %vm98, %v91, %v93
  %v100 = vsel %vm98, %v95, %v97
  %103 = vrot.lane.b32.xlu0 %v47, 122
  %v104 = vpop.permute.xlu0 %103
  %105 = vrot.lane.b32.xlu0 %v48, 122
  %v106 = vpop.permute.xlu0 %105
  %107 = vrot.lane.b32.xlu0 %v49, 122
  %v108 = vpop.permute.xlu0 %107
  %109 = vrot.lane.b32.xlu0 %v50, 122
  %v110 = vpop.permute.xlu0 %109
  %vm111 = vcmask 998400
  %v112 = vsel %vm111, %v104, %v106
  %v113 = vsel %vm111, %v108, %v110
  %116 = vrot.lane.b32.xlu0 %v47, 120
  %v117 = vpop.permute.xlu0 %116
  %118 = vrot.lane.b32.xlu0 %v48, 120
  %v119 = vpop.permute.xlu0 %118
  %120 = vrot.lane.b32.xlu0 %v49, 120
  %v121 = vpop.permute.xlu0 %120
  %122 = vrot.lane.b32.xlu0 %v50, 120
  %v123 = vpop.permute.xlu0 %122
  %vm124 = vcmask 982016
  %v125 = vsel %vm124, %v117, %v119
  %v126 = vsel %vm124, %v121, %v123
  %129 = vrot.lane.b32.xlu0 %v47, 119
  %v130 = vpop.permute.xlu0 %129
  %131 = vrot.lane.b32.xlu0 %v48, 119
  %v132 = vpop.permute.xlu0 %131
  %133 = vrot.lane.b32.xlu0 %v49, 119
  %v134 = vpop.permute.xlu0 %133
  %135 = vrot.lane.b32.xlu0 %v50, 119
  %v136 = vpop.permute.xlu0 %135
  %vm137 = vcmask 973824
  %v138 = vsel %vm137, %v130, %v132
  %v139 = vsel %vm137, %v134, %v136
  %142 = vrot.lane.b32.xlu0 %v47, 118
  %v143 = vpop.permute.xlu0 %142
  %144 = vrot.lane.b32.xlu0 %v48, 118
  %v145 = vpop.permute.xlu0 %144
  %146 = vrot.lane.b32.xlu0 %v49, 118
  %v147 = vpop.permute.xlu0 %146
  %148 = vrot.lane.b32.xlu0 %v50, 118
  %v149 = vpop.permute.xlu0 %148
  %vm150 = vcmask 965632
  %v151 = vsel %vm150, %v143, %v145
  %v152 = vsel %vm150, %v147, %v149
  %v155 = vld [vmem:[%s0] sm:$0xff]
  %v156 = vld [vmem:[%s0 + $0x8] sm:$0xf]
  %v157 = vld [vmem:[%s0 + $0xc] sm:$0xff]
  %v158 = vld [vmem:[%s0 + $0x14] sm:$0xf]
  %v159 = vld [vmem:[%s2] sm:$0xff]
  %v160 = vld [vmem:[%s2 + $0x8] sm:$0xff]
  %162 = vset.pattern.permute.xlu0 0
  %163 = vperm.xlu0 %162, %v159
  %v164 = vpop.permute.xlu0 %163
  %167 = vset.pattern.permute.xlu0 0
  %168 = vperm.xlu0 %167, %v160
  %v169 = vpop.permute.xlu0 %168
  %v175 = vunpack.c.l.b16 %v155
  %v176 = vunpack.c.h.b16 %v155
  %v177 = vunpack.c.l.b16 %v156
  %v178 = vunpack.c.l.b16 %v157
  %v179 = vunpack.c.h.b16 %v157
  %v180 = vunpack.c.l.b16 %v158
  %v181 = vpack.c.b16 %v178, %v175
  %v182 = vpack.c.b16 %v179, %v176
  %v183 = vpack.c.b16 %v180, %v177
  %vm186 = vcmask 261120
  %v188 = vsel %vm186, %v183, 0
  %190 = vmatpush.bf16.msra.mxu0 %v87
  %191 = vmatpush.bf16.msra.mxu0 %v86
  %192 = vmatpush.bf16.msra.mxu0 %v74
  %193 = vmatpush.bf16.msra.mxu0 %v73
  %194 = vmatpush.bf16.msra.mxu0 %v61
  %195 = vmatpush.bf16.msra.mxu0 %v60
  %196 = vmatpush.bf16.msra.mxu0 %v32
  %197 = vmatpush.bf16.msra.mxu0 %v31
  %198 = vmatmul.bf16.gmra.mxu0 %v181
  %v199 = vpop.f32.mrf.mxu0
  %v200 = vadd.f32 %v164, %v199
  %v201 = vpop.f32.mrf.mxu0
  %v202 = vadd.f32 %v169, %v201
  %203 = vdwg.mxu0
  %204 = vmatpush.bf16.msra.mxu0 %v139
  %205 = vmatpush.bf16.msra.mxu0 %v138
  %206 = vmatpush.bf16.msra.mxu0 %v126
  %207 = vmatpush.bf16.msra.mxu0 %v125
  %208 = vmatpush.bf16.msra.mxu0 %v113
  %209 = vmatpush.bf16.msra.mxu0 %v112
  %210 = vmatpush.bf16.msra.mxu0 %v100
  %211 = vmatpush.bf16.msra.mxu0 %v99
  %212 = vmatmul.bf16.gmra.mxu0 %v182
  %v213 = vpop.f32.mrf.mxu0
  %v214 = vadd.f32 %v200, %v213
  %v215 = vpop.f32.mrf.mxu0
  %v216 = vadd.f32 %v202, %v215
  %217 = vdwg.mxu0
  %218 = vmatpush.bf16.msra.mxu0 0
  %219 = vmatpush.bf16.msra.mxu0 0
  %220 = vmatpush.bf16.msra.mxu0 0
  %221 = vmatpush.bf16.msra.mxu0 0
  %222 = vmatpush.bf16.msra.mxu0 0
  %223 = vmatpush.bf16.msra.mxu0 0
  %224 = vmatpush.bf16.msra.mxu0 %v152
  %225 = vmatpush.bf16.msra.mxu0 %v151
  %226 = vmatmul.bf16.gmra.mxu0 %v188
  %v227 = vpop.f32.mrf.mxu0
  %v228 = vadd.f32 %v214, %v227
  %v229 = vpop.f32.mrf.mxu0
  %v230 = vadd.f32 %v216, %v229
  %231 = vdwg.mxu0
  %vm232 = vcmp.ge.f32.partialorder %v228, 0.0
  %vm233 = vcmp.ge.f32.partialorder %v230, 0.0
  %v234 = vmul.f32 %v228, 0.2
  %v235 = vmul.f32 %v230, 0.2
  %v236 = vsel %vm232, %v228, %v234
  %v237 = vsel %vm233, %v230, %v235
  %v238 = vpack.c.bf16 %v236, %v236
  %v239 = vpack.c.bf16 %v237, %v237
  %240 = vst [vmem:[%s3] sm:$0xf] %v238
  %241 = vst [vmem:[%s3 + $0x4] sm:$0xf] %v239
  // Predicated region
  $region14: #{generator_forward.17} parent=0 // pred_check
    _
  $region15: #{generator_forward.17} parent=0 // pred_check_branch
    %243 = sbr.rel (0) target = $region17
  $region16: #{generator_forward.17} parent=0 // pred_region
    _
  $region17: #{generator_forward.17} parent=0 // pred_fallthru
    _
  // Predicated region
  $region18: #{generator_forward.17} parent=0 // pred_check
    _
  $region19: #{generator_forward.17} parent=0 // pred_check_branch
    %245 = sbr.rel (0) target = $region21
  $region20: #{generator_forward.17} parent=0 // pred_region
    _
  $region21: #{generator_forward.17} parent=0 // pred_fallthru
    _

// kernel: generator_forward.18
$region0: #{generator_forward.18}
  #allocation0 [shape = 'u32[]', space=smem, size = 0x4, offset = 0x4, fixed_abs, tag = 'smem constant byte address 0x4 - core index']
  #allocation1 [shape = 'u32[72,128]{1,0:T(1,128)}', space=vmem, size = 0x9000, scoped, tag = 'internal scratch']
  %s0 = inlined_call_operand.vmem [shape: bf16[16,144], index: 0, kind: input, shape index: {}]
  %s1 = inlined_call_operand.vmem [shape: bf16[1,16,142], index: 1, kind: input, shape index: {}]
  %s2 = inlined_call_operand.vmem [shape: f32[16,1], index: 2, kind: input, shape index: {}]
  %s3 = inlined_call_operand.vmem [shape: bf16[16,128], index: 3, kind: output, shape index: {}]
  %s4 = sld [smem:[#allocation0]]
  $region22: #{generator_forward.18} parent=0
    _
  %s6 = ssub.s32 1, %s4
  %s7 = scalar_select 0, %s6, %s4
  // Predicated region
  $region2: #{generator_forward.18} parent=0 // pred_check
    _
  $region3: #{generator_forward.18} parent=0 // pred_check_branch
    %9 = sbr.rel (0) target = $region5
  $region4: #{generator_forward.18} parent=0 // pred_region
    _
  $region5: #{generator_forward.18} parent=0 // pred_fallthru
    _
  // Predicated region
  $region6: #{generator_forward.18} parent=0 // pred_check
    _
  $region7: #{generator_forward.18} parent=0 // pred_check_branch
    %11 = sbr.rel (0) target = $region9
  $region8: #{generator_forward.18} parent=0 // pred_region
    _
  $region9: #{generator_forward.18} parent=0 // pred_fallthru
    _
  // Predicated region
  $region10: #{generator_forward.18} parent=0 // pred_check
    _
  $region11: #{generator_forward.18} parent=0 // pred_check_branch
    %13 = sbr.rel (0) target = $region13
  $region12: #{generator_forward.18} parent=0 // pred_region
    _
  $region13: #{generator_forward.18} parent=0 // pred_fallthru
    _
  %v15 = vld [vmem:[%s1] sm:$0xf]
  %v16 = vld [vmem:[%s1 + $0x8] sm:$0xf]
  %v17 = vld [vmem:[%s1] sm:$0xff]
  %v18 = vld [vmem:[%s1 + $0x8] sm:$0xff]
  %v21 = vunpack.c.l.b16 %v15
  %v22 = vunpack.c.l.b16 %v16
  %v23 = vpack.c.b16 %v22, %v21
  %v27 = vunpack.c.l.b16 %v17
  %v28 = vunpack.c.h.b16 %v17
  %v29 = vunpack.c.l.b16 %v18
  %v30 = vunpack.c.h.b16 %v18
  %v31 = vpack.c.b16 %v29, %v27
  %v32 = vpack.c.b16 %v30, %v28
  %33 = vrot.lane.b32.xlu0 %v31, 127
  %v34 = vpop.permute.xlu0 %33
  %35 = vrot.lane.b32.xlu0 %v32, 127
  %v36 = vpop.permute.xlu0 %35
  %vm37 = vcmask 1039360
  %v38 = vsel %vm37, %v34, %v36
  %40 = vrot.lane.b32.xlu0 %v31, 126
  %v41 = vpop.permute.xlu0 %40
  %42 = vrot.lane.b32.xlu0 %v32, 126
  %v43 = vpop.permute.xlu0 %42
  %vm44 = vcmask 1031168
  %v45 = vsel %vm44, %v41, %v43
  %47 = vrot.lane.b32.xlu0 %v31, 122
  %v48 = vpop.permute.xlu0 %47
  %49 = vrot.lane.b32.xlu0 %v32, 122
  %v50 = vpop.permute.xlu0 %49
  %vm51 = vcmask 998400
  %v52 = vsel %vm51, %v48, %v50
  %54 = vrot.lane.b32.xlu0 %v31, 121
  %v55 = vpop.permute.xlu0 %54
  %56 = vrot.lane.b32.xlu0 %v32, 121
  %v57 = vpop.permute.xlu0 %56
  %vm58 = vcmask 990208
  %v59 = vsel %vm58, %v55, %v57
  %61 = vrot.lane.b32.xlu0 %v31, 120
  %v62 = vpop.permute.xlu0 %61
  %63 = vrot.lane.b32.xlu0 %v32, 120
  %v64 = vpop.permute.xlu0 %63
  %vm65 = vcmask 982016
  %v66 = vsel %vm65, %v62, %v64
  %68 = vrot.lane.b32.xlu0 %v31, 116
  %v69 = vpop.permute.xlu0 %68
  %70 = vrot.lane.b32.xlu0 %v32, 116
  %v71 = vpop.permute.xlu0 %70
  %vm72 = vcmask 949248
  %v73 = vsel %vm72, %v69, %v71
  %75 = vrot.lane.b32.xlu0 %v31, 115
  %v76 = vpop.permute.xlu0 %75
  %77 = vrot.lane.b32.xlu0 %v32, 115
  %v78 = vpop.permute.xlu0 %77
  %vm79 = vcmask 941056
  %v80 = vsel %vm79, %v76, %v78
  %82 = vrot.lane.b32.xlu0 %v31, 114
  %v83 = vpop.permute.xlu0 %82
  %84 = vrot.lane.b32.xlu0 %v32, 114
  %v85 = vpop.permute.xlu0 %84
  %vm86 = vcmask 932864
  %v87 = vsel %vm86, %v83, %v85
  %v89 = vld [vmem:[%s0] sm:$0xff]
  %v90 = vld [vmem:[%s0 + $0x8] sm:$0xff]
  %v91 = vld [vmem:[%s2] sm:$0xff]
  %v92 = vld [vmem:[%s2 + $0x8] sm:$0xff]
  %94 = vset.pattern.permute.xlu0 0
  %95 = vperm.xlu0 %94, %v91
  %v96 = vpop.permute.xlu0 %95
  %99 = vset.pattern.permute.xlu0 0
  %100 = vperm.xlu0 %99, %v92
  %v101 = vpop.permute.xlu0 %100
  %v105 = vunpack.c.l.b16 %v89
  %v106 = vunpack.c.h.b16 %v89
  %v107 = vunpack.c.l.b16 %v90
  %v108 = vunpack.c.h.b16 %v90
  %v109 = vpack.c.b16 %v107, %v105
  %v110 = vpack.c.b16 %v108, %v106
  %vm112 = vcmask 130048
  %v114 = vsel %vm112, %v110, 0
  %116 = vmatpush.bf16.msra.mxu0 %v80
  %117 = vmatpush.bf16.msra.mxu0 %v73
  %118 = vmatpush.bf16.msra.mxu0 %v66
  %119 = vmatpush.bf16.msra.mxu0 %v59
  %120 = vmatpush.bf16.msra.mxu0 %v52
  %121 = vmatpush.bf16.msra.mxu0 %v45
  %122 = vmatpush.bf16.msra.mxu0 %v38
  %123 = vmatpush.bf16.msra.mxu0 %v23
  %124 = vmatmul.bf16.gmra.mxu0 %v109
  %v125 = vpop.f32.mrf.mxu0
  %v126 = vadd.f32 %v96, %v125
  %v127 = vpop.f32.mrf.mxu0
  %v128 = vadd.f32 %v101, %v127
  %129 = vdwg.mxu0
  %130 = vmatpush.bf16.msra.mxu0 0
  %131 = vmatpush.bf16.msra.mxu0 0
  %132 = vmatpush.bf16.msra.mxu0 0
  %133 = vmatpush.bf16.msra.mxu0 0
  %134 = vmatpush.bf16.msra.mxu0 0
  %135 = vmatpush.bf16.msra.mxu0 0
  %136 = vmatpush.bf16.msra.mxu0 0
  %137 = vmatpush.bf16.msra.mxu0 %v87
  %138 = vmatmul.bf16.gmra.mxu0 %v114
  %v139 = vpop.f32.mrf.mxu0
  %v140 = vadd.f32 %v126, %v139
  %v141 = vpop.f32.mrf.mxu0
  %v142 = vadd.f32 %v128, %v141
  %143 = vdwg.mxu0
  %vm144 = vcmp.ge.f32.partialorder %v140, 0.0
  %vm145 = vcmp.ge.f32.partialorder %v142, 0.0
  %v146 = vmul.f32 %v140, 0.2
  %v147 = vmul.f32 %v142, 0.2
  %v148 = vsel %vm144, %v140, %v146
  %v149 = vsel %vm145, %v142, %v147
  %v150 = vpack.c.bf16 %v148, %v148
  %v151 = vpack.c.bf16 %v149, %v149
  %152 = vst [vmem:[%s3] sm:$0xf] %v150
  %153 = vst [vmem:[%s3 + $0x4] sm:$0xf] %v151
  // Predicated region
  $region14: #{generator_forward.18} parent=0 // pred_check
    _
  $region15: #{generator_forward.18} parent=0 // pred_check_branch
    %155 = sbr.rel (0) target = $region17
  $region16: #{generator_forward.18} parent=0 // pred_region
    _
  $region17: #{generator_forward.18} parent=0 // pred_fallthru
    _
  // Predicated region
  $region18: #{generator_forward.18} parent=0 // pred_check
    _
  $region19: #{generator_forward.18} parent=0 // pred_check_branch
    %157 = sbr.rel (0) target = $region21
  $region20: #{generator_forward.18} parent=0 // pred_region
    _
  $region21: #{generator_forward.18} parent=0 // pred_fallthru
    _

</llo_original>
